<compile_context>
chip_gen: v6e
topology: v6e:2x2x1
jax: 0.10.0
libtpu: 0.0.40
codegen_flags: <defaults>
</compile_context>

<pallas_src>
import functools

import jax
import jax.numpy as jnp
import numpy as np
from jax.experimental import pallas as pl
from jax.experimental.pallas import tpu as pltpu


def _round_up(x, m):
    return (x + m - 1) // m * m


# ----------------------------------------------------------------------------
# Fused Pallas kernel: conv+BN+ReLU (layer1) -> conv+BN (layer2) -> +x -> ReLU
# One grid step processes one batch element over the full spatial extent.
# ----------------------------------------------------------------------------
def _fused_resblock_kernel(x_ref, w1_ref, w2_ref, sh_ref, o_ref, out1_ref, *, k):
    """Refs (per grid step):
      x_ref   : (1, H+2p, W+2p, Cp) f32   spatially zero-padded, channel-padded input
      w1_ref  : (k*k, Cp, Cp)       bf16  layer1 taps, BN scale folded in, (ci, co) order
      w2_ref  : (k*k, Cp, Cp)       bf16  layer2 taps, BN scale folded in
      sh_ref  : (2, Cp)             f32   row 0 = shift1, row 1 = shift2 (folded BN bias)
      o_ref   : (1, H, W, Cp)       f32   output
      out1_ref: (H+2p, W+2p, Cp)    f32   VMEM scratch holding zero-padded layer1 output
    """
    _, H, W, Cp = o_ref.shape
    P = H * W
    pad = k // 2

    # ---- layer1: k x k conv (scale-folded weights) + shift + ReLU -----------
    acc1 = jnp.zeros((P, Cp), jnp.float32)
    for kh in range(k):
        for kw in range(k):
            xs = x_ref[0, kh:kh + H, kw:kw + W, :].reshape(P, Cp).astype(jnp.bfloat16)
            acc1 = acc1 + jnp.dot(xs, w1_ref[kh * k + kw],
                                  preferred_element_type=jnp.float32)
    out1 = jnp.maximum(acc1 + sh_ref[0:1, :], 0.0)

    # Keep layer1 output resident in VMEM, zero-padded so layer2's conv padding is exact.
    out1_ref[...] = jnp.zeros_like(out1_ref)
    out1_ref[pad:pad + H, pad:pad + W, :] = out1.reshape(H, W, Cp)

    # ---- layer2: k x k conv + shift + residual + ReLU ------------------------
    acc2 = jnp.zeros((P, Cp), jnp.float32)
    for kh in range(k):
        for kw in range(k):
            ys = out1_ref[kh:kh + H, kw:kw + W, :].reshape(P, Cp).astype(jnp.bfloat16)
            acc2 = acc2 + jnp.dot(ys, w2_ref[kh * k + kw],
                                  preferred_element_type=jnp.float32)
    residual = x_ref[0, pad:pad + H, pad:pad + W, :].reshape(P, Cp)
    out2 = jnp.maximum(acc2 + sh_ref[1:2, :] + residual, 0.0)
    o_ref[0] = out2.reshape(H, W, Cp).astype(o_ref.dtype)


# ----------------------------------------------------------------------------
# conv_dhp pieces: hyper-network weight generation + folded BatchNorm (glue)
# ----------------------------------------------------------------------------
def hyper_weight(layer_params, latent_input_vector, k):
    z_out = layer_params["latent_vector"]              # (Co,)
    w1 = layer_params["hyper_w1"]                      # (m,)
    b1 = layer_params["hyper_b1"]                      # (m,)
    w2 = layer_params["hyper_w2"]                      # (Co, Ci, k*k, m)
    b2 = layer_params["hyper_b2"]                      # (Co, Ci, k*k)
    latent_matrix = z_out[:, None] * latent_input_vector[None, :]        # (Co, Ci)
    hidden = latent_matrix[:, :, None] * w1[None, None, :] + b1          # (Co, Ci, m)
    weight = jnp.einsum("oikm,oim->oik", w2, hidden) + b2                # (Co, Ci, k*k)
    co, ci = latent_matrix.shape
    return weight.reshape(co, ci, k, k)                                  # OIHW


def bn_fold(layer_params, eps=1e-5):
    scale = layer_params["gamma"] / jnp.sqrt(layer_params["running_var"] + eps)
    shift = layer_params["beta"] - layer_params["running_mean"] * scale
    return scale, shift


def init_conv_dhp_params(key, in_ch, out_ch, k, embedding_dim):
    k1, k2, k3 = jax.random.split(key, 3)
    return dict(
        latent_vector=jax.random.normal(k1, (out_ch,), jnp.float32),
        hyper_w1=jax.random.normal(k2, (embedding_dim,), jnp.float32) / embedding_dim,
        hyper_b1=jnp.zeros((embedding_dim,), jnp.float32),
        hyper_w2=jax.random.normal(
            k3, (out_ch, in_ch, k * k, embedding_dim), jnp.float32) / embedding_dim,
        hyper_b2=jnp.zeros((out_ch, in_ch, k * k), jnp.float32),
        gamma=jnp.ones((out_ch,), jnp.float32),
        beta=jnp.zeros((out_ch,), jnp.float32),
        running_mean=jnp.zeros((out_ch,), jnp.float32),
        running_var=jnp.ones((out_ch,), jnp.float32),
    )


# ----------------------------------------------------------------------------
# ResBlock_dhp forward (finetuning=False, downsample=None)
# ----------------------------------------------------------------------------
@functools.partial(jax.jit, static_argnames=("k", "stride"))
def resblock_dhp_forward(x_nchw, latent_input_vector, params, k=3, stride=1):
    assert stride == 1, "downsample / strided branch not implemented"
    n, ci, h, w = x_nchw.shape
    pad = k // 2

    p1, p2 = params["layer1"], params["layer2"]
    w1 = hyper_weight(p1, latent_input_vector, k)       # layer1.calc_weight(z_in)
    w2 = hyper_weight(p2, p1["latent_vector"], k)       # layer2.calc_weight(layer1.latent_vector)
    s1, b1 = bn_fold(p1)
    s2, b2 = bn_fold(p2)
    planes = w1.shape[0]
    assert planes == ci, "residual add requires Cin == planes when downsample is None"

    # Channel padding to a multiple of 128 for lane-dense blocks / MXU-shaped matmuls.
    cp = _round_up(max(ci, planes), 128)

    # Fold BN scale into the conv weights (done once per call; free).
    w1f = w1 * s1[:, None, None, None]
    w2f = w2 * s2[:, None, None, None]

    def to_taps(w_oihw, cin, cout):
        # OIHW -> (k*k, Ci, Co), pad channels with zeros, cast to bf16 for the MXU.
        t = jnp.transpose(w_oihw, (2, 3, 1, 0)).reshape(k * k, cin, cout)
        t = jnp.pad(t, ((0, 0), (0, cp - cin), (0, cp - cout)))
        return t.astype(jnp.bfloat16)

    w1_taps = to_taps(w1f, ci, planes)                   # (k*k, cp, cp)
    w2_taps = to_taps(w2f, planes, planes)               # (k*k, cp, cp)
    shifts = jnp.stack(
        [jnp.pad(b1, (0, cp - planes)), jnp.pad(b2, (0, cp - planes))], axis=0
    ).astype(jnp.float32)                                # (2, cp)

    # NCHW -> NHWC, zero spatial halo of `pad`, zero channel padding up to cp.
    x_nhwc = jnp.transpose(x_nchw, (0, 2, 3, 1)).astype(jnp.float32)
    x_pad = jnp.pad(x_nhwc, ((0, 0), (pad, pad), (pad, pad), (0, cp - ci)))

    kernel = functools.partial(_fused_resblock_kernel, k=k)
    out = pl.pallas_call(
        kernel,
        out_shape=jax.ShapeDtypeStruct((n, h, w, cp), jnp.float32),
        grid=(n,),
        in_specs=[
            pl.BlockSpec((1, h + 2 * pad, w + 2 * pad, cp), lambda i: (i, 0, 0, 0)),
            pl.BlockSpec((k * k, cp, cp), lambda i: (0, 0, 0)),   # resident across grid
            pl.BlockSpec((k * k, cp, cp), lambda i: (0, 0, 0)),   # resident across grid
            pl.BlockSpec((2, cp), lambda i: (0, 0)),
        ],
        out_specs=pl.BlockSpec((1, h, w, cp), lambda i: (i, 0, 0, 0)),
        scratch_shapes=[pltpu.VMEM((h + 2 * pad, w + 2 * pad, cp), jnp.float32)],
        compiler_params=pltpu.CompilerParams(
            dimension_semantics=("parallel",),
            vmem_limit_bytes=64 * 1024 * 1024,
        ),
    )(x_pad, w1_taps, w2_taps, shifts)

    out = out[..., :planes]                              # drop channel padding (exact zeros)
    return jnp.transpose(out, (0, 3, 1, 2))              # NCHW


# ----------------------------------------------------------------------------
# Pure-JAX float32 reference (for a sanity check) and demo
# ----------------------------------------------------------------------------
def _ref_conv_bn(x_nhwc, w_oihw, scale, shift, k):
    out = jax.lax.conv_general_dilated(
        x_nhwc, jnp.transpose(w_oihw, (2, 3, 1, 0)),
        window_strides=(1, 1), padding=[(k // 2, k // 2)] * 2,
        dimension_numbers=("NHWC", "HWIO", "NHWC"))
    return out * scale + shift


def _ref_block(x_nchw, z_in, params, k):
    x = jnp.transpose(x_nchw, (0, 2, 3, 1)).astype(jnp.float32)
    p1, p2 = params["layer1"], params["layer2"]
    w1 = hyper_weight(p1, z_in, k)
    w2 = hyper_weight(p2, p1["latent_vector"], k)
    s1, b1 = bn_fold(p1)
    s2, b2 = bn_fold(p2)
    out = jnp.maximum(_ref_conv_bn(x, w1, s1, b1, k), 0.0)
    out = _ref_conv_bn(out, w2, s2, b2, k) + x
    out = jnp.maximum(out, 0.0)
    return jnp.transpose(out, (0, 3, 1, 2))


if __name__ == "__main__":
    key = jax.random.PRNGKey(0)
    kx, kz, kl1, kl2 = jax.random.split(key, 4)

    N, C, H, W = 2, 4, 16, 16        # batch, in_channels, spatial
    planes, ksz, emb = 4, 3, 8       # planes == in_channels, stride=1 => downsample=None

    x = jax.random.normal(kx, (N, C, H, W), jnp.float32)
    latent_input_vector = jax.random.normal(kz, (C,), jnp.float32)
    params = dict(
        layer1=init_conv_dhp_params(kl1, C, planes, ksz, emb),
        layer2=init_conv_dhp_params(kl2, planes, planes, ksz, emb),
    )

    out = resblock_dhp_forward(x, latent_input_vector, params, k=ksz, stride=1)
    out = jax.block_until_ready(out)

    ref = _ref_block(x, latent_input_vector, params, ksz)
    # bf16 MXU weights vs. f32 reference -> loose-ish tolerance.
    np.testing.assert_allclose(np.asarray(out), np.asarray(ref), rtol=5e-2, atol=5e-2)

    print("KERNEL_OK")
</pallas_src>

<mosaic_0001>
module attributes {stable_mosaic.version = 11 : i64} {
  func.func @_fused_resblock_kernel(%arg0: i32, %arg1: memref<1x18x18x128xf32, #tpu.memory_space<vmem>>, %arg2: memref<9x128x128xbf16, #tpu.memory_space<vmem>>, %arg3: memref<9x128x128xbf16, #tpu.memory_space<vmem>>, %arg4: memref<2x128xf32, #tpu.memory_space<vmem>>, %arg5: memref<1x16x16x128xf32, #tpu.memory_space<vmem>>, %arg6: memref<18x18x128xf32, #tpu.memory_space<vmem>>) attributes {dimension_semantics = [#tpu.dimension_semantics<parallel>], iteration_bounds = array<i64: 2>, scalar_prefetch = 0 : i64, scratch_operands = 1 : i64, tpu.core_type = #tpu.core_type<tc>, window_params = [{transform_indices = @transform_0, window_bounds = array<i64: 1, 18, 18, 128>}, {pipeline_mode = #tpu.pipeline_mode<synchronous>, transform_indices = @transform_1, window_bounds = array<i64: 9, 128, 128>}, {pipeline_mode = #tpu.pipeline_mode<synchronous>, transform_indices = @transform_2, window_bounds = array<i64: 9, 128, 128>}, {pipeline_mode = #tpu.pipeline_mode<synchronous>, transform_indices = @transform_3, window_bounds = array<i64: 2, 128>}, {transform_indices = @transform_4, window_bounds = array<i64: 1, 16, 16, 128>}]} {
    %cst = arith.constant 0.000000e+00 : f32
    %0 = vector.broadcast %cst : f32 to vector<256x128xf32>
    %c0 = arith.constant 0 : index
    %c0_0 = arith.constant 0 : index
    %c0_1 = arith.constant 0 : index
    %c0_2 = arith.constant 0 : index
    %1 = vector.load %arg1[%c0, %c0_0, %c0_1, %c0_2] : memref<1x18x18x128xf32, #tpu.memory_space<vmem>>, vector<1x16x16x128xf32>
    %2 = vector.shape_cast %1 : vector<1x16x16x128xf32> to vector<16x16x128xf32>
    %3 = vector.shape_cast %2 : vector<16x16x128xf32> to vector<256x128xf32>
    %4 = arith.truncf %3 : vector<256x128xf32> to vector<256x128xbf16>
    %c0_3 = arith.constant 0 : index
    %c0_4 = arith.constant 0 : index
    %c0_5 = arith.constant 0 : index
    %5 = vector.load %arg2[%c0_3, %c0_4, %c0_5] : memref<9x128x128xbf16, #tpu.memory_space<vmem>>, vector<1x128x128xbf16>
    %6 = vector.shape_cast %5 : vector<1x128x128xbf16> to vector<128x128xbf16>
    %cst_6 = arith.constant dense<0.000000e+00> : vector<256x128xf32>
    %7 = tpu.matmul %4, %6, %cst_6 {dimension_numbers = #tpu.dot_dimension_numbers<[1], [0], [0], [1], [0, 0, 1, 1], [], []>} : vector<256x128xbf16>, vector<128x128xbf16>, vector<256x128xf32> -> vector<256x128xf32>
    %8 = arith.addf %0, %7 : vector<256x128xf32>
    %c0_7 = arith.constant 0 : index
    %c0_8 = arith.constant 0 : index
    %c1 = arith.constant 1 : index
    %c0_9 = arith.constant 0 : index
    %9 = vector.load %arg1[%c0_7, %c0_8, %c1, %c0_9] : memref<1x18x18x128xf32, #tpu.memory_space<vmem>>, vector<1x16x16x128xf32>
    %10 = vector.shape_cast %9 : vector<1x16x16x128xf32> to vector<16x16x128xf32>
    %11 = vector.shape_cast %10 : vector<16x16x128xf32> to vector<256x128xf32>
    %12 = arith.truncf %11 : vector<256x128xf32> to vector<256x128xbf16>
    %c1_10 = arith.constant 1 : index
    %c0_11 = arith.constant 0 : index
    %c0_12 = arith.constant 0 : index
    %13 = vector.load %arg2[%c1_10, %c0_11, %c0_12] : memref<9x128x128xbf16, #tpu.memory_space<vmem>>, vector<1x128x128xbf16>
    %14 = vector.shape_cast %13 : vector<1x128x128xbf16> to vector<128x128xbf16>
    %cst_13 = arith.constant dense<0.000000e+00> : vector<256x128xf32>
    %15 = tpu.matmul %12, %14, %cst_13 {dimension_numbers = #tpu.dot_dimension_numbers<[1], [0], [0], [1], [0, 0, 1, 1], [], []>} : vector<256x128xbf16>, vector<128x128xbf16>, vector<256x128xf32> -> vector<256x128xf32>
    %16 = arith.addf %8, %15 : vector<256x128xf32>
    %c0_14 = arith.constant 0 : index
    %c0_15 = arith.constant 0 : index
    %c2 = arith.constant 2 : index
    %c0_16 = arith.constant 0 : index
    %17 = vector.load %arg1[%c0_14, %c0_15, %c2, %c0_16] : memref<1x18x18x128xf32, #tpu.memory_space<vmem>>, vector<1x16x16x128xf32>
    %18 = vector.shape_cast %17 : vector<1x16x16x128xf32> to vector<16x16x128xf32>
    %19 = vector.shape_cast %18 : vector<16x16x128xf32> to vector<256x128xf32>
    %20 = arith.truncf %19 : vector<256x128xf32> to vector<256x128xbf16>
    %c2_17 = arith.constant 2 : index
    %c0_18 = arith.constant 0 : index
    %c0_19 = arith.constant 0 : index
    %21 = vector.load %arg2[%c2_17, %c0_18, %c0_19] : memref<9x128x128xbf16, #tpu.memory_space<vmem>>, vector<1x128x128xbf16>
    %22 = vector.shape_cast %21 : vector<1x128x128xbf16> to vector<128x128xbf16>
    %cst_20 = arith.constant dense<0.000000e+00> : vector<256x128xf32>
    %23 = tpu.matmul %20, %22, %cst_20 {dimension_numbers = #tpu.dot_dimension_numbers<[1], [0], [0], [1], [0, 0, 1, 1], [], []>} : vector<256x128xbf16>, vector<128x128xbf16>, vector<256x128xf32> -> vector<256x128xf32>
    %24 = arith.addf %16, %23 : vector<256x128xf32>
    %c0_21 = arith.constant 0 : index
    %c1_22 = arith.constant 1 : index
    %c0_23 = arith.constant 0 : index
    %c0_24 = arith.constant 0 : index
    %25 = vector.load %arg1[%c0_21, %c1_22, %c0_23, %c0_24] : memref<1x18x18x128xf32, #tpu.memory_space<vmem>>, vector<1x16x16x128xf32>
    %26 = vector.shape_cast %25 : vector<1x16x16x128xf32> to vector<16x16x128xf32>
    %27 = vector.shape_cast %26 : vector<16x16x128xf32> to vector<256x128xf32>
    %28 = arith.truncf %27 : vector<256x128xf32> to vector<256x128xbf16>
    %c3 = arith.constant 3 : index
    %c0_25 = arith.constant 0 : index
    %c0_26 = arith.constant 0 : index
    %29 = vector.load %arg2[%c3, %c0_25, %c0_26] : memref<9x128x128xbf16, #tpu.memory_space<vmem>>, vector<1x128x128xbf16>
    %30 = vector.shape_cast %29 : vector<1x128x128xbf16> to vector<128x128xbf16>
    %cst_27 = arith.constant dense<0.000000e+00> : vector<256x128xf32>
    %31 = tpu.matmul %28, %30, %cst_27 {dimension_numbers = #tpu.dot_dimension_numbers<[1], [0], [0], [1], [0, 0, 1, 1], [], []>} : vector<256x128xbf16>, vector<128x128xbf16>, vector<256x128xf32> -> vector<256x128xf32>
    %32 = arith.addf %24, %31 : vector<256x128xf32>
    %c0_28 = arith.constant 0 : index
    %c1_29 = arith.constant 1 : index
    %c1_30 = arith.constant 1 : index
    %c0_31 = arith.constant 0 : index
    %33 = vector.load %arg1[%c0_28, %c1_29, %c1_30, %c0_31] : memref<1x18x18x128xf32, #tpu.memory_space<vmem>>, vector<1x16x16x128xf32>
    %34 = vector.shape_cast %33 : vector<1x16x16x128xf32> to vector<16x16x128xf32>
    %35 = vector.shape_cast %34 : vector<16x16x128xf32> to vector<256x128xf32>
    %36 = arith.truncf %35 : vector<256x128xf32> to vector<256x128xbf16>
    %c4 = arith.constant 4 : index
    %c0_32 = arith.constant 0 : index
    %c0_33 = arith.constant 0 : index
    %37 = vector.load %arg2[%c4, %c0_32, %c0_33] : memref<9x128x128xbf16, #tpu.memory_space<vmem>>, vector<1x128x128xbf16>
    %38 = vector.shape_cast %37 : vector<1x128x128xbf16> to vector<128x128xbf16>
    %cst_34 = arith.constant dense<0.000000e+00> : vector<256x128xf32>
    %39 = tpu.matmul %36, %38, %cst_34 {dimension_numbers = #tpu.dot_dimension_numbers<[1], [0], [0], [1], [0, 0, 1, 1], [], []>} : vector<256x128xbf16>, vector<128x128xbf16>, vector<256x128xf32> -> vector<256x128xf32>
    %40 = arith.addf %32, %39 : vector<256x128xf32>
    %c0_35 = arith.constant 0 : index
    %c1_36 = arith.constant 1 : index
    %c2_37 = arith.constant 2 : index
    %c0_38 = arith.constant 0 : index
    %41 = vector.load %arg1[%c0_35, %c1_36, %c2_37, %c0_38] : memref<1x18x18x128xf32, #tpu.memory_space<vmem>>, vector<1x16x16x128xf32>
    %42 = vector.shape_cast %41 : vector<1x16x16x128xf32> to vector<16x16x128xf32>
    %43 = vector.shape_cast %42 : vector<16x16x128xf32> to vector<256x128xf32>
    %44 = arith.truncf %43 : vector<256x128xf32> to vector<256x128xbf16>
    %c5 = arith.constant 5 : index
    %c0_39 = arith.constant 0 : index
    %c0_40 = arith.constant 0 : index
    %45 = vector.load %arg2[%c5, %c0_39, %c0_40] : memref<9x128x128xbf16, #tpu.memory_space<vmem>>, vector<1x128x128xbf16>
    %46 = vector.shape_cast %45 : vector<1x128x128xbf16> to vector<128x128xbf16>
    %cst_41 = arith.constant dense<0.000000e+00> : vector<256x128xf32>
    %47 = tpu.matmul %44, %46, %cst_41 {dimension_numbers = #tpu.dot_dimension_numbers<[1], [0], [0], [1], [0, 0, 1, 1], [], []>} : vector<256x128xbf16>, vector<128x128xbf16>, vector<256x128xf32> -> vector<256x128xf32>
    %48 = arith.addf %40, %47 : vector<256x128xf32>
    %c0_42 = arith.constant 0 : index
    %c2_43 = arith.constant 2 : index
    %c0_44 = arith.constant 0 : index
    %c0_45 = arith.constant 0 : index
    %49 = vector.load %arg1[%c0_42, %c2_43, %c0_44, %c0_45] : memref<1x18x18x128xf32, #tpu.memory_space<vmem>>, vector<1x16x16x128xf32>
    %50 = vector.shape_cast %49 : vector<1x16x16x128xf32> to vector<16x16x128xf32>
    %51 = vector.shape_cast %50 : vector<16x16x128xf32> to vector<256x128xf32>
    %52 = arith.truncf %51 : vector<256x128xf32> to vector<256x128xbf16>
    %c6 = arith.constant 6 : index
    %c0_46 = arith.constant 0 : index
    %c0_47 = arith.constant 0 : index
    %53 = vector.load %arg2[%c6, %c0_46, %c0_47] : memref<9x128x128xbf16, #tpu.memory_space<vmem>>, vector<1x128x128xbf16>
    %54 = vector.shape_cast %53 : vector<1x128x128xbf16> to vector<128x128xbf16>
    %cst_48 = arith.constant dense<0.000000e+00> : vector<256x128xf32>
    %55 = tpu.matmul %52, %54, %cst_48 {dimension_numbers = #tpu.dot_dimension_numbers<[1], [0], [0], [1], [0, 0, 1, 1], [], []>} : vector<256x128xbf16>, vector<128x128xbf16>, vector<256x128xf32> -> vector<256x128xf32>
    %56 = arith.addf %48, %55 : vector<256x128xf32>
    %c0_49 = arith.constant 0 : index
    %c2_50 = arith.constant 2 : index
    %c1_51 = arith.constant 1 : index
    %c0_52 = arith.constant 0 : index
    %57 = vector.load %arg1[%c0_49, %c2_50, %c1_51, %c0_52] : memref<1x18x18x128xf32, #tpu.memory_space<vmem>>, vector<1x16x16x128xf32>
    %58 = vector.shape_cast %57 : vector<1x16x16x128xf32> to vector<16x16x128xf32>
    %59 = vector.shape_cast %58 : vector<16x16x128xf32> to vector<256x128xf32>
    %60 = arith.truncf %59 : vector<256x128xf32> to vector<256x128xbf16>
    %c7 = arith.constant 7 : index
    %c0_53 = arith.constant 0 : index
    %c0_54 = arith.constant 0 : index
    %61 = vector.load %arg2[%c7, %c0_53, %c0_54] : memref<9x128x128xbf16, #tpu.memory_space<vmem>>, vector<1x128x128xbf16>
    %62 = vector.shape_cast %61 : vector<1x128x128xbf16> to vector<128x128xbf16>
    %cst_55 = arith.constant dense<0.000000e+00> : vector<256x128xf32>
    %63 = tpu.matmul %60, %62, %cst_55 {dimension_numbers = #tpu.dot_dimension_numbers<[1], [0], [0], [1], [0, 0, 1, 1], [], []>} : vector<256x128xbf16>, vector<128x128xbf16>, vector<256x128xf32> -> vector<256x128xf32>
    %64 = arith.addf %56, %63 : vector<256x128xf32>
    %c0_56 = arith.constant 0 : index
    %c2_57 = arith.constant 2 : index
    %c2_58 = arith.constant 2 : index
    %c0_59 = arith.constant 0 : index
    %65 = vector.load %arg1[%c0_56, %c2_57, %c2_58, %c0_59] : memref<1x18x18x128xf32, #tpu.memory_space<vmem>>, vector<1x16x16x128xf32>
    %66 = vector.shape_cast %65 : vector<1x16x16x128xf32> to vector<16x16x128xf32>
    %67 = vector.shape_cast %66 : vector<16x16x128xf32> to vector<256x128xf32>
    %68 = arith.truncf %67 : vector<256x128xf32> to vector<256x128xbf16>
    %c8 = arith.constant 8 : index
    %c0_60 = arith.constant 0 : index
    %c0_61 = arith.constant 0 : index
    %69 = vector.load %arg2[%c8, %c0_60, %c0_61] : memref<9x128x128xbf16, #tpu.memory_space<vmem>>, vector<1x128x128xbf16>
    %70 = vector.shape_cast %69 : vector<1x128x128xbf16> to vector<128x128xbf16>
    %cst_62 = arith.constant dense<0.000000e+00> : vector<256x128xf32>
    %71 = tpu.matmul %68, %70, %cst_62 {dimension_numbers = #tpu.dot_dimension_numbers<[1], [0], [0], [1], [0, 0, 1, 1], [], []>} : vector<256x128xbf16>, vector<128x128xbf16>, vector<256x128xf32> -> vector<256x128xf32>
    %72 = arith.addf %64, %71 : vector<256x128xf32>
    %c0_63 = arith.constant 0 : index
    %c0_64 = arith.constant 0 : index
    %73 = vector.load %arg4[%c0_63, %c0_64] : memref<2x128xf32, #tpu.memory_space<vmem>>, vector<1x128xf32>
    %74 = vector.broadcast %73 : vector<1x128xf32> to vector<256x128xf32>
    %75 = arith.addf %72, %74 : vector<256x128xf32>
    %cst_65 = arith.constant 0.000000e+00 : f32
    %76 = vector.broadcast %cst_65 : f32 to vector<256x128xf32>
    %77 = arith.maximumf %75, %76 : vector<256x128xf32>
    %cst_66 = arith.constant 0.000000e+00 : f32
    %78 = vector.broadcast %cst_66 : f32 to vector<18x18x128xf32>
    %c0_67 = arith.constant 0 : index
    %c0_68 = arith.constant 0 : index
    %c0_69 = arith.constant 0 : index
    %79 = vector.load %arg6[%c0_67, %c0_68, %c0_69] : memref<18x18x128xf32, #tpu.memory_space<vmem>>, vector<18x18x128xf32>
    tpu.vector_store %arg6[%c0_67, %c0_68, %c0_69], %78 {strides = array<i32>} : memref<18x18x128xf32, #tpu.memory_space<vmem>>, vector<18x18x128xf32>,
    %80 = vector.shape_cast %77 : vector<256x128xf32> to vector<16x16x128xf32>
    %c1_70 = arith.constant 1 : index
    %c1_71 = arith.constant 1 : index
    %c0_72 = arith.constant 0 : index
    %81 = vector.load %arg6[%c1_70, %c1_71, %c0_72] : memref<18x18x128xf32, #tpu.memory_space<vmem>>, vector<16x16x128xf32>
    tpu.vector_store %arg6[%c1_70, %c1_71, %c0_72], %80 {strides = array<i32>} : memref<18x18x128xf32, #tpu.memory_space<vmem>>, vector<16x16x128xf32>,
    %cst_73 = arith.constant 0.000000e+00 : f32
    %82 = vector.broadcast %cst_73 : f32 to vector<256x128xf32>
    %c0_74 = arith.constant 0 : index
    %c0_75 = arith.constant 0 : index
    %c0_76 = arith.constant 0 : index
    %83 = vector.load %arg6[%c0_74, %c0_75, %c0_76] : memref<18x18x128xf32, #tpu.memory_space<vmem>>, vector<16x16x128xf32>
    %84 = vector.shape_cast %83 : vector<16x16x128xf32> to vector<256x128xf32>
    %85 = arith.truncf %84 : vector<256x128xf32> to vector<256x128xbf16>
    %c0_77 = arith.constant 0 : index
    %c0_78 = arith.constant 0 : index
    %c0_79 = arith.constant 0 : index
    %86 = vector.load %arg3[%c0_77, %c0_78, %c0_79] : memref<9x128x128xbf16, #tpu.memory_space<vmem>>, vector<1x128x128xbf16>
    %87 = vector.shape_cast %86 : vector<1x128x128xbf16> to vector<128x128xbf16>
    %cst_80 = arith.constant dense<0.000000e+00> : vector<256x128xf32>
    %88 = tpu.matmul %85, %87, %cst_80 {dimension_numbers = #tpu.dot_dimension_numbers<[1], [0], [0], [1], [0, 0, 1, 1], [], []>} : vector<256x128xbf16>, vector<128x128xbf16>, vector<256x128xf32> -> vector<256x128xf32>
    %89 = arith.addf %82, %88 : vector<256x128xf32>
    %c0_81 = arith.constant 0 : index
    %c1_82 = arith.constant 1 : index
    %c0_83 = arith.constant 0 : index
    %90 = vector.load %arg6[%c0_81, %c1_82, %c0_83] : memref<18x18x128xf32, #tpu.memory_space<vmem>>, vector<16x16x128xf32>
    %91 = vector.shape_cast %90 : vector<16x16x128xf32> to vector<256x128xf32>
    %92 = arith.truncf %91 : vector<256x128xf32> to vector<256x128xbf16>
    %c1_84 = arith.constant 1 : index
    %c0_85 = arith.constant 0 : index
    %c0_86 = arith.constant 0 : index
    %93 = vector.load %arg3[%c1_84, %c0_85, %c0_86] : memref<9x128x128xbf16, #tpu.memory_space<vmem>>, vector<1x128x128xbf16>
    %94 = vector.shape_cast %93 : vector<1x128x128xbf16> to vector<128x128xbf16>
    %cst_87 = arith.constant dense<0.000000e+00> : vector<256x128xf32>
    %95 = tpu.matmul %92, %94, %cst_87 {dimension_numbers = #tpu.dot_dimension_numbers<[1], [0], [0], [1], [0, 0, 1, 1], [], []>} : vector<256x128xbf16>, vector<128x128xbf16>, vector<256x128xf32> -> vector<256x128xf32>
    %96 = arith.addf %89, %95 : vector<256x128xf32>
    %c0_88 = arith.constant 0 : index
    %c2_89 = arith.constant 2 : index
    %c0_90 = arith.constant 0 : index
    %97 = vector.load %arg6[%c0_88, %c2_89, %c0_90] : memref<18x18x128xf32, #tpu.memory_space<vmem>>, vector<16x16x128xf32>
    %98 = vector.shape_cast %97 : vector<16x16x128xf32> to vector<256x128xf32>
    %99 = arith.truncf %98 : vector<256x128xf32> to vector<256x128xbf16>
    %c2_91 = arith.constant 2 : index
    %c0_92 = arith.constant 0 : index
    %c0_93 = arith.constant 0 : index
    %100 = vector.load %arg3[%c2_91, %c0_92, %c0_93] : memref<9x128x128xbf16, #tpu.memory_space<vmem>>, vector<1x128x128xbf16>
    %101 = vector.shape_cast %100 : vector<1x128x128xbf16> to vector<128x128xbf16>
    %cst_94 = arith.constant dense<0.000000e+00> : vector<256x128xf32>
    %102 = tpu.matmul %99, %101, %cst_94 {dimension_numbers = #tpu.dot_dimension_numbers<[1], [0], [0], [1], [0, 0, 1, 1], [], []>} : vector<256x128xbf16>, vector<128x128xbf16>, vector<256x128xf32> -> vector<256x128xf32>
    %103 = arith.addf %96, %102 : vector<256x128xf32>
    %c1_95 = arith.constant 1 : index
    %c0_96 = arith.constant 0 : index
    %c0_97 = arith.constant 0 : index
    %104 = vector.load %arg6[%c1_95, %c0_96, %c0_97] : memref<18x18x128xf32, #tpu.memory_space<vmem>>, vector<16x16x128xf32>
    %105 = vector.shape_cast %104 : vector<16x16x128xf32> to vector<256x128xf32>
    %106 = arith.truncf %105 : vector<256x128xf32> to vector<256x128xbf16>
    %c3_98 = arith.constant 3 : index
    %c0_99 = arith.constant 0 : index
    %c0_100 = arith.constant 0 : index
    %107 = vector.load %arg3[%c3_98, %c0_99, %c0_100] : memref<9x128x128xbf16, #tpu.memory_space<vmem>>, vector<1x128x128xbf16>
    %108 = vector.shape_cast %107 : vector<1x128x128xbf16> to vector<128x128xbf16>
    %cst_101 = arith.constant dense<0.000000e+00> : vector<256x128xf32>
    %109 = tpu.matmul %106, %108, %cst_101 {dimension_numbers = #tpu.dot_dimension_numbers<[1], [0], [0], [1], [0, 0, 1, 1], [], []>} : vector<256x128xbf16>, vector<128x128xbf16>, vector<256x128xf32> -> vector<256x128xf32>
    %110 = arith.addf %103, %109 : vector<256x128xf32>
    %c1_102 = arith.constant 1 : index
    %c1_103 = arith.constant 1 : index
    %c0_104 = arith.constant 0 : index
    %111 = vector.load %arg6[%c1_102, %c1_103, %c0_104] : memref<18x18x128xf32, #tpu.memory_space<vmem>>, vector<16x16x128xf32>
    %112 = vector.shape_cast %111 : vector<16x16x128xf32> to vector<256x128xf32>
    %113 = arith.truncf %112 : vector<256x128xf32> to vector<256x128xbf16>
    %c4_105 = arith.constant 4 : index
    %c0_106 = arith.constant 0 : index
    %c0_107 = arith.constant 0 : index
    %114 = vector.load %arg3[%c4_105, %c0_106, %c0_107] : memref<9x128x128xbf16, #tpu.memory_space<vmem>>, vector<1x128x128xbf16>
    %115 = vector.shape_cast %114 : vector<1x128x128xbf16> to vector<128x128xbf16>
    %cst_108 = arith.constant dense<0.000000e+00> : vector<256x128xf32>
    %116 = tpu.matmul %113, %115, %cst_108 {dimension_numbers = #tpu.dot_dimension_numbers<[1], [0], [0], [1], [0, 0, 1, 1], [], []>} : vector<256x128xbf16>, vector<128x128xbf16>, vector<256x128xf32> -> vector<256x128xf32>
    %117 = arith.addf %110, %116 : vector<256x128xf32>
    %c1_109 = arith.constant 1 : index
    %c2_110 = arith.constant 2 : index
    %c0_111 = arith.constant 0 : index
    %118 = vector.load %arg6[%c1_109, %c2_110, %c0_111] : memref<18x18x128xf32, #tpu.memory_space<vmem>>, vector<16x16x128xf32>
    %119 = vector.shape_cast %118 : vector<16x16x128xf32> to vector<256x128xf32>
    %120 = arith.truncf %119 : vector<256x128xf32> to vector<256x128xbf16>
    %c5_112 = arith.constant 5 : index
    %c0_113 = arith.constant 0 : index
    %c0_114 = arith.constant 0 : index
    %121 = vector.load %arg3[%c5_112, %c0_113, %c0_114] : memref<9x128x128xbf16, #tpu.memory_space<vmem>>, vector<1x128x128xbf16>
    %122 = vector.shape_cast %121 : vector<1x128x128xbf16> to vector<128x128xbf16>
    %cst_115 = arith.constant dense<0.000000e+00> : vector<256x128xf32>
    %123 = tpu.matmul %120, %122, %cst_115 {dimension_numbers = #tpu.dot_dimension_numbers<[1], [0], [0], [1], [0, 0, 1, 1], [], []>} : vector<256x128xbf16>, vector<128x128xbf16>, vector<256x128xf32> -> vector<256x128xf32>
    %124 = arith.addf %117, %123 : vector<256x128xf32>
    %c2_116 = arith.constant 2 : index
    %c0_117 = arith.constant 0 : index
    %c0_118 = arith.constant 0 : index
    %125 = vector.load %arg6[%c2_116, %c0_117, %c0_118] : memref<18x18x128xf32, #tpu.memory_space<vmem>>, vector<16x16x128xf32>
    %126 = vector.shape_cast %125 : vector<16x16x128xf32> to vector<256x128xf32>
    %127 = arith.truncf %126 : vector<256x128xf32> to vector<256x128xbf16>
    %c6_119 = arith.constant 6 : index
    %c0_120 = arith.constant 0 : index
    %c0_121 = arith.constant 0 : index
    %128 = vector.load %arg3[%c6_119, %c0_120, %c0_121] : memref<9x128x128xbf16, #tpu.memory_space<vmem>>, vector<1x128x128xbf16>
    %129 = vector.shape_cast %128 : vector<1x128x128xbf16> to vector<128x128xbf16>
    %cst_122 = arith.constant dense<0.000000e+00> : vector<256x128xf32>
    %130 = tpu.matmul %127, %129, %cst_122 {dimension_numbers = #tpu.dot_dimension_numbers<[1], [0], [0], [1], [0, 0, 1, 1], [], []>} : vector<256x128xbf16>, vector<128x128xbf16>, vector<256x128xf32> -> vector<256x128xf32>
    %131 = arith.addf %124, %130 : vector<256x128xf32>
    %c2_123 = arith.constant 2 : index
    %c1_124 = arith.constant 1 : index
    %c0_125 = arith.constant 0 : index
    %132 = vector.load %arg6[%c2_123, %c1_124, %c0_125] : memref<18x18x128xf32, #tpu.memory_space<vmem>>, vector<16x16x128xf32>
    %133 = vector.shape_cast %132 : vector<16x16x128xf32> to vector<256x128xf32>
    %134 = arith.truncf %133 : vector<256x128xf32> to vector<256x128xbf16>
    %c7_126 = arith.constant 7 : index
    %c0_127 = arith.constant 0 : index
    %c0_128 = arith.constant 0 : index
    %135 = vector.load %arg3[%c7_126, %c0_127, %c0_128] : memref<9x128x128xbf16, #tpu.memory_space<vmem>>, vector<1x128x128xbf16>
    %136 = vector.shape_cast %135 : vector<1x128x128xbf16> to vector<128x128xbf16>
    %cst_129 = arith.constant dense<0.000000e+00> : vector<256x128xf32>
    %137 = tpu.matmul %134, %136, %cst_129 {dimension_numbers = #tpu.dot_dimension_numbers<[1], [0], [0], [1], [0, 0, 1, 1], [], []>} : vector<256x128xbf16>, vector<128x128xbf16>, vector<256x128xf32> -> vector<256x128xf32>
    %138 = arith.addf %131, %137 : vector<256x128xf32>
    %c2_130 = arith.constant 2 : index
    %c2_131 = arith.constant 2 : index
    %c0_132 = arith.constant 0 : index
    %139 = vector.load %arg6[%c2_130, %c2_131, %c0_132] : memref<18x18x128xf32, #tpu.memory_space<vmem>>, vector<16x16x128xf32>
    %140 = vector.shape_cast %139 : vector<16x16x128xf32> to vector<256x128xf32>
    %141 = arith.truncf %140 : vector<256x128xf32> to vector<256x128xbf16>
    %c8_133 = arith.constant 8 : index
    %c0_134 = arith.constant 0 : index
    %c0_135 = arith.constant 0 : index
    %142 = vector.load %arg3[%c8_133, %c0_134, %c0_135] : memref<9x128x128xbf16, #tpu.memory_space<vmem>>, vector<1x128x128xbf16>
    %143 = vector.shape_cast %142 : vector<1x128x128xbf16> to vector<128x128xbf16>
    %cst_136 = arith.constant dense<0.000000e+00> : vector<256x128xf32>
    %144 = tpu.matmul %141, %143, %cst_136 {dimension_numbers = #tpu.dot_dimension_numbers<[1], [0], [0], [1], [0, 0, 1, 1], [], []>} : vector<256x128xbf16>, vector<128x128xbf16>, vector<256x128xf32> -> vector<256x128xf32>
    %145 = arith.addf %138, %144 : vector<256x128xf32>
    %c0_137 = arith.constant 0 : index
    %c1_138 = arith.constant 1 : index
    %c1_139 = arith.constant 1 : index
    %c0_140 = arith.constant 0 : index
    %146 = vector.load %arg1[%c0_137, %c1_138, %c1_139, %c0_140] : memref<1x18x18x128xf32, #tpu.memory_space<vmem>>, vector<1x16x16x128xf32>
    %147 = vector.shape_cast %146 : vector<1x16x16x128xf32> to vector<16x16x128xf32>
    %148 = vector.shape_cast %147 : vector<16x16x128xf32> to vector<256x128xf32>
    %c1_141 = arith.constant 1 : index
    %c0_142 = arith.constant 0 : index
    %149 = vector.load %arg4[%c1_141, %c0_142] : memref<2x128xf32, #tpu.memory_space<vmem>>, vector<1x128xf32>
    %150 = vector.broadcast %149 : vector<1x128xf32> to vector<256x128xf32>
    %151 = arith.addf %145, %150 : vector<256x128xf32>
    %152 = arith.addf %151, %148 : vector<256x128xf32>
    %cst_143 = arith.constant 0.000000e+00 : f32
    %153 = vector.broadcast %cst_143 : f32 to vector<256x128xf32>
    %154 = arith.maximumf %152, %153 : vector<256x128xf32>
    %155 = vector.shape_cast %154 : vector<256x128xf32> to vector<16x16x128xf32>
    %c0_144 = arith.constant 0 : index
    %c0_145 = arith.constant 0 : index
    %c0_146 = arith.constant 0 : index
    %c0_147 = arith.constant 0 : index
    %156 = vector.load %arg5[%c0_144, %c0_145, %c0_146, %c0_147] : memref<1x16x16x128xf32, #tpu.memory_space<vmem>>, vector<1x16x16x128xf32>
    %157 = vector.shape_cast %156 : vector<1x16x16x128xf32> to vector<16x16x128xf32>
    %158 = vector.shape_cast %155 : vector<16x16x128xf32> to vector<1x16x16x128xf32>
    tpu.vector_store %arg5[%c0_144, %c0_145, %c0_146, %c0_147], %158 {strides = array<i32>} : memref<1x16x16x128xf32, #tpu.memory_space<vmem>>, vector<1x16x16x128xf32>,
    return
  }
  func.func @transform_0(%arg0: i32) -> (i32, i32, i32, i32) {
    %c0_i32 = arith.constant 0 : i32
    %c0_i32_0 = arith.constant 0 : i32
    %c0_i32_1 = arith.constant 0 : i32
    %c0_i32_2 = arith.constant 0 : i32
    return %arg0, %c0_i32, %c0_i32_0, %c0_i32_1 : i32, i32, i32, i32
  }
  func.func @transform_1(%arg0: i32) -> (i32, i32, i32) {
    %c0_i32 = arith.constant 0 : i32
    %c0_i32_0 = arith.constant 0 : i32
    %c0_i32_1 = arith.constant 0 : i32
    %c0_i32_2 = arith.constant 0 : i32
    return %c0_i32, %c0_i32_0, %c0_i32_1 : i32, i32, i32
  }
  func.func @transform_2(%arg0: i32) -> (i32, i32, i32) {
    %c0_i32 = arith.constant 0 : i32
    %c0_i32_0 = arith.constant 0 : i32
    %c0_i32_1 = arith.constant 0 : i32
    %c0_i32_2 = arith.constant 0 : i32
    return %c0_i32, %c0_i32_0, %c0_i32_1 : i32, i32, i32
  }
  func.func @transform_3(%arg0: i32) -> (i32, i32) {
    %c0_i32 = arith.constant 0 : i32
    %c0_i32_0 = arith.constant 0 : i32
    %c0_i32_1 = arith.constant 0 : i32
    return %c0_i32, %c0_i32_0 : i32, i32
  }
  func.func @transform_4(%arg0: i32) -> (i32, i32, i32, i32) {
    %c0_i32 = arith.constant 0 : i32
    %c0_i32_0 = arith.constant 0 : i32
    %c0_i32_1 = arith.constant 0 : i32
    %c0_i32_2 = arith.constant 0 : i32
    return %arg0, %c0_i32, %c0_i32_0, %c0_i32_1 : i32, i32, i32, i32
  }
}

</mosaic_0001>

<llo_original>
// kernel: resblock_dhp_forward.1
$region0: #{resblock_dhp_forward.1}
  #allocation0 [shape = 'u32[]', space=smem, size = 0x4, offset = 0x4, fixed_abs, tag = 'smem constant byte address 0x4 - core index']
  #allocation1 [shape = 'u32[144,128]{1,0:T(1,128)}', space=vmem, size = 0x12000, scoped, tag = 'internal scratch']
  #allocation2 [shape = 'f32[18,18,128]{2,1,0:T(8,128)}', space=vmem, size = 0x36000, scoped, tag = 'scratch operand']
  %s0 = inlined_call_operand.vmem [shape: f32[2,18,18,128], index: 0, kind: input, shape index: {}]
  %s1 = inlined_call_operand.vmem [shape: bf16[9,128,128], index: 1, kind: input, shape index: {}]
  %s2 = inlined_call_operand.vmem [shape: bf16[9,128,128], index: 2, kind: input, shape index: {}]
  %s3 = inlined_call_operand.vmem [shape: f32[2,128], index: 3, kind: input, shape index: {}]
  %s4 = inlined_call_operand.vmem [shape: f32[2,16,16,128], index: 4, kind: output, shape index: {}]
  %s5 = sld [smem:[#allocation0]]
  $region49: #{resblock_dhp_forward.1} parent=0
    _
  %s7 = ssub.s32 1, %s5
  %s8 = scalar_select 0, %s7, %s5
  loop: start=0, step=1, limit=4
  $region2: #{resblock_dhp_forward.1} parent=0 // loop_pre_header
    _
  $region3: #{resblock_dhp_forward.1} parent=0 // loop_header
    %s10 = sphi 0, %s14
    %p11 = scmp.ge.s32.totalorder %s10, 4
    %s20 = sphi 0, %s22
    %s23 = sphi 0, %s20
    %s24 = sphi 0, %s23
    %s40 = sphi 0, %s24
    %s44 = sphi 0, %s44
    %s46 = sphi 0, %s44
    %s47 = sphi 0, %s46
    %s61 = sphi 0, %s47
    %s65 = sphi 0, %s65
    %s67 = sphi 0, %s65
    %s68 = sphi 0, %s67
    %s82 = sphi 0, %s68
    %s86 = sphi 0, %s86
    %s88 = sphi 0, %s86
    %s89 = sphi 0, %s88
    %s103 = sphi 0, %s89
    %s109 = sphi 0, %s111
    %s112 = sphi 0, %s109
    %s113 = sphi 0, %s112
    %s129 = sphi 0, %s113
  $region4: #{resblock_dhp_forward.1} parent=0 // loop_header_branch
    %13 = sbr.rel (%p11) target = $region8
  $region5: #{resblock_dhp_forward.1} parent=0 // loop_body
    %s15 = ssub.s32 %s10, 1
    %s16 = ssub.s32 %s10, 2
    %s17 = sadd.s32 %s10, 1
    %s18 = ssub.s32 %s10, %s17
    %p19 = scmp.eq.s32.totalorder %s18, 0
    %s21 = sadd.s32 %s20, 1
    %s22 = scalar_select %p19, %s20, %s21
    %p25 = pneg %p19
    %p26 = scmp.eq.s32.totalorder %s10, 1
    %p27 = por %p25, %p26
    %p28 = scmp.ne.s32.totalorder %s20, %s23
    %p29 = scmp.eq.s32.totalorder %s10, 0
    %p30 = por %p28, %p29
    %p31 = scmp.ne.s32.totalorder %s20, %s23
    %p32 = scmp.eq.s32.totalorder %s15, 1
    %p33 = por %p31, %p32
    %p34 = scmp.ne.s32.totalorder %s23, %s24
    %p35 = scmp.eq.s32.totalorder %s15, 0
    %p36 = por %p34, %p35
    %p37 = scmp.ne.s32.totalorder %s23, %s24
    %p38 = scmp.eq.s32.totalorder %s16, 1
    %p39 = por %p37, %p38
    %p41 = scmp.ne.s32.totalorder %s24, %s40
    %p42 = scmp.eq.s32.totalorder %s16, 0
    %p43 = por %p41, %p42
    %s45 = sadd.s32 %s44, 1
    %p48 = scmp.eq.s32.totalorder %s10, 1
    %p49 = scmp.ne.s32.totalorder %s44, %s46
    %p50 = scmp.eq.s32.totalorder %s10, 0
    %p51 = por %p49, %p50
    %p52 = scmp.ne.s32.totalorder %s44, %s46
    %p53 = scmp.eq.s32.totalorder %s15, 1
    %p54 = por %p52, %p53
    %p55 = scmp.ne.s32.totalorder %s46, %s47
    %p56 = scmp.eq.s32.totalorder %s15, 0
    %p57 = por %p55, %p56
    %p58 = scmp.ne.s32.totalorder %s46, %s47
    %p59 = scmp.eq.s32.totalorder %s16, 1
    %p60 = por %p58, %p59
    %p62 = scmp.ne.s32.totalorder %s47, %s61
    %p63 = scmp.eq.s32.totalorder %s16, 0
    %p64 = por %p62, %p63
    %s66 = sadd.s32 %s65, 1
    %p69 = scmp.eq.s32.totalorder %s10, 1
    %p70 = scmp.ne.s32.totalorder %s65, %s67
    %p71 = scmp.eq.s32.totalorder %s10, 0
    %p72 = por %p70, %p71
    %p73 = scmp.ne.s32.totalorder %s65, %s67
    %p74 = scmp.eq.s32.totalorder %s15, 1
    %p75 = por %p73, %p74
    %p76 = scmp.ne.s32.totalorder %s67, %s68
    %p77 = scmp.eq.s32.totalorder %s15, 0
    %p78 = por %p76, %p77
    %p79 = scmp.ne.s32.totalorder %s67, %s68
    %p80 = scmp.eq.s32.totalorder %s16, 1
    %p81 = por %p79, %p80
    %p83 = scmp.ne.s32.totalorder %s68, %s82
    %p84 = scmp.eq.s32.totalorder %s16, 0
    %p85 = por %p83, %p84
    %s87 = sadd.s32 %s86, 1
    %p90 = scmp.eq.s32.totalorder %s10, 1
    %p91 = scmp.ne.s32.totalorder %s86, %s88
    %p92 = scmp.eq.s32.totalorder %s10, 0
    %p93 = por %p91, %p92
    %p94 = scmp.ne.s32.totalorder %s86, %s88
    %p95 = scmp.eq.s32.totalorder %s15, 1
    %p96 = por %p94, %p95
    %p97 = scmp.ne.s32.totalorder %s88, %s89
    %p98 = scmp.eq.s32.totalorder %s15, 0
    %p99 = por %p97, %p98
    %p100 = scmp.ne.s32.totalorder %s88, %s89
    %p101 = scmp.eq.s32.totalorder %s16, 1
    %p102 = por %p100, %p101
    %p104 = scmp.ne.s32.totalorder %s89, %s103
    %p105 = scmp.eq.s32.totalorder %s16, 0
    %p106 = por %p104, %p105
    %s107 = ssub.s32 %s10, %s17
    %p108 = scmp.eq.s32.totalorder %s107, 0
    %s110 = sadd.s32 %s109, 1
    %s111 = scalar_select %p108, %s109, %s110
    %p114 = pneg %p108
    %p115 = scmp.eq.s32.totalorder %s10, 1
    %p116 = por %p114, %p115
    %p117 = scmp.ne.s32.totalorder %s109, %s112
    %p118 = scmp.eq.s32.totalorder %s10, 0
    %p119 = por %p117, %p118
    %p120 = scmp.ne.s32.totalorder %s109, %s112
    %p121 = scmp.eq.s32.totalorder %s15, 1
    %p122 = por %p120, %p121
    %p123 = scmp.ne.s32.totalorder %s112, %s113
    %p124 = scmp.eq.s32.totalorder %s15, 0
    %p125 = por %p123, %p124
    %p126 = scmp.ne.s32.totalorder %s112, %s113
    %p127 = scmp.eq.s32.totalorder %s16, 1
    %p128 = por %p126, %p127
    %p130 = scmp.ne.s32.totalorder %s113, %s129
    %p131 = scmp.eq.s32.totalorder %s16, 0
    %p132 = por %p130, %p131
    %p133 = scmp.le.s32.totalorder 1, %s10
    %p134 = scmp.lt.s32.totalorder %s10, 3
    %p135 = pnand %p133, %p134
    %p136 = pneg %p135
    // Predicated region
    $region9: #{resblock_dhp_forward.1} parent=5 // pred_check
      _
    $region10: #{resblock_dhp_forward.1} parent=5 // pred_check_branch
      %138 = sbr.rel (%p135) target = $region12
    $region11: #{resblock_dhp_forward.1} parent=5 // pred_region
      %s139 = ssub.s32 %s10, 1
      // Predicated region
      $region13: #{resblock_dhp_forward.1} parent=11 // pred_check
        %p140 = pneg %p57
      $region14: #{resblock_dhp_forward.1} parent=11 // pred_check_branch
        %142 = sbr.rel (%p140) target = $region16
      $region15: #{resblock_dhp_forward.1} parent=11 // pred_region
        _
      $region16: #{resblock_dhp_forward.1} parent=11 // pred_fallthru
        _
      // Predicated region
      $region17: #{resblock_dhp_forward.1} parent=11 // pred_check
        %p143 = pneg %p78
      $region18: #{resblock_dhp_forward.1} parent=11 // pred_check_branch
        %145 = sbr.rel (%p143) target = $region20
      $region19: #{resblock_dhp_forward.1} parent=11 // pred_region
        _
      $region20: #{resblock_dhp_forward.1} parent=11 // pred_fallthru
        _
      // Predicated region
      $region21: #{resblock_dhp_forward.1} parent=11 // pred_check
        %p146 = pneg %p99
      $region22: #{resblock_dhp_forward.1} parent=11 // pred_check_branch
        %148 = sbr.rel (%p146) target = $region24
      $region23: #{resblock_dhp_forward.1} parent=11 // pred_region
        _
      $region24: #{resblock_dhp_forward.1} parent=11 // pred_fallthru
        _
    $region12: #{resblock_dhp_forward.1} parent=5 // pred_fallthru
      _
    %p149 = scmp.lt.s32.totalorder %s10, 2
    // Predicated region
    $region25: #{resblock_dhp_forward.1} parent=5 // pred_check
      %p150 = pneg %p149
    $region26: #{resblock_dhp_forward.1} parent=5 // pred_check_branch
      %152 = sbr.rel (%p150) target = $region28
    $region27: #{resblock_dhp_forward.1} parent=5 // pred_region
      // Predicated region
      $region29: #{resblock_dhp_forward.1} parent=27 // pred_check
        %p153 = pneg %p30
      $region30: #{resblock_dhp_forward.1} parent=27 // pred_check_branch
        %155 = sbr.rel (%p153) target = $region32
      $region31: #{resblock_dhp_forward.1} parent=27 // pred_region
        %p156 = scmp.lt.s32.totalorder %s10, 1
        %s157 = scalar_select %p156, %s10, 1
        %s158 = smul.addr %s157, 54
        %s159 = smul.addr %s158, 8
        %s160 = scalar_lea.vmem %s0, %s159
      $region32: #{resblock_dhp_forward.1} parent=27 // pred_fallthru
        _
    $region28: #{resblock_dhp_forward.1} parent=5 // pred_fallthru
      _
    %p161 = scmp.le.s32.totalorder 1, %s10
    %p162 = scmp.lt.s32.totalorder %s10, 3
    %p163 = pnand %p161, %p162
    %p164 = pneg %p163
    // Predicated region
    $region33: #{resblock_dhp_forward.1} parent=5 // pred_check
      _
    $region34: #{resblock_dhp_forward.1} parent=5 // pred_check_branch
      %166 = sbr.rel (%p163) target = $region36
    $region35: #{resblock_dhp_forward.1} parent=5 // pred_region
      %s167 = ssub.s32 %s10, 1
      %p168 = scmp.lt.s32.totalorder %s15, 1
      %s169 = scalar_select %p168, %s15, 1
      %s170 = smul.addr %s169, 54
      %s171 = smul.addr %s170, 8
      %s172 = scalar_lea.vmem %s0, %s171
      %p173 = pneg %p36
      %p174 = pneg %p33
      %p175 = pneg %p57
      %p176 = pneg %p54
      %p177 = pneg %p78
      %p178 = pneg %p75
      %p179 = pneg %p99
      %p180 = pneg %p96
      %p181 = pneg %p125
      %p182 = pneg %p122
      %p183 = scmp.lt.s32.totalorder %s15, 1
      %s184 = scalar_select %p183, %s15, 1
      %s185 = smul.addr %s184, 32
      %s186 = smul.addr %s185, 8
      %s187 = scalar_lea.vmem %s4, %s186
      %p188 = scmp.lt.s32.totalorder %s15, 1
      %s189 = scalar_select %p188, %s15, 1
      %s190 = smul.addr %s189, 54
      %s191 = smul.addr %s190, 8
      %s192 = scalar_lea.vmem %s0, %s191
      %p193 = scmp.lt.s32.totalorder %s15, 1
      %s194 = scalar_select %p193, %s15, 1
      %s195 = smul.addr %s194, 32
      %s196 = smul.addr %s195, 8
      %s197 = scalar_lea.vmem %s4, %s196
      %v199 = vld [vmem:[%s192] sm:$0xff]
      %v200 = vld [vmem:[%s192 + $0x8] sm:$0xff]
      %v201 = vld [vmem:[%s192 + $0x18] sm:$0xff]
      %v202 = vld [vmem:[%s192 + $0x20] sm:$0xff]
      %v203 = vld [vmem:[%s192 + $0x30] sm:$0xff]
      %v204 = vld [vmem:[%s192 + $0x38] sm:$0xff]
      %v205 = vld [vmem:[%s192 + $0x48] sm:$0xff]
      %v206 = vld [vmem:[%s192 + $0x50] sm:$0xff]
      %v207 = vld [vmem:[%s192 + $0x60] sm:$0xff]
      %v208 = vld [vmem:[%s192 + $0x68] sm:$0xff]
      %v209 = vld [vmem:[%s192 + $0x78] sm:$0xff]
      %v210 = vld [vmem:[%s192 + $0x80] sm:$0xff]
      %v211 = vld [vmem:[%s192 + $0x90] sm:$0xff]
      %v212 = vld [vmem:[%s192 + $0x98] sm:$0xff]
      %v213 = vld [vmem:[%s192 + $0xa8] sm:$0xff]
      %v214 = vld [vmem:[%s192 + $0xb0] sm:$0xff]
      %v215 = vld [vmem:[%s192 + $0xc0] sm:$0xff]
      %v216 = vld [vmem:[%s192 + $0xc8] sm:$0xff]
      %v217 = vld [vmem:[%s192 + $0xd8] sm:$0xff]
      %v218 = vld [vmem:[%s192 + $0xe0] sm:$0xff]
      %v219 = vld [vmem:[%s192 + $0xf0] sm:$0xff]
      %v220 = vld [vmem:[%s192 + $0xf8] sm:$0xff]
      %v221 = vld [vmem:[%s192 + $0x108] sm:$0xff]
      %v222 = vld [vmem:[%s192 + $0x110] sm:$0xff]
      %v223 = vld [vmem:[%s192 + $0x120] sm:$0xff]
      %v224 = vld [vmem:[%s192 + $0x128] sm:$0xff]
      %v225 = vld [vmem:[%s192 + $0x138] sm:$0xff]
      %v226 = vld [vmem:[%s192 + $0x140] sm:$0xff]
      %v227 = vld [vmem:[%s192 + $0x150] sm:$0xff]
      %v228 = vld [vmem:[%s192 + $0x158] sm:$0xff]
      %v229 = vld [vmem:[%s192 + $0x168] sm:$0xff]
      %v230 = vld [vmem:[%s192 + $0x170] sm:$0xff]
      %v231 = vpack.c.bf16 %v200, %v199
      %v232 = vpack.c.bf16 %v202, %v201
      %v233 = vpack.c.bf16 %v204, %v203
      %v234 = vpack.c.bf16 %v206, %v205
      %v235 = vpack.c.bf16 %v208, %v207
      %v236 = vpack.c.bf16 %v210, %v209
      %v237 = vpack.c.bf16 %v212, %v211
      %v238 = vpack.c.bf16 %v214, %v213
      %v239 = vpack.c.bf16 %v216, %v215
      %v240 = vpack.c.bf16 %v218, %v217
      %v241 = vpack.c.bf16 %v220, %v219
      %v242 = vpack.c.bf16 %v222, %v221
      %v243 = vpack.c.bf16 %v224, %v223
      %v244 = vpack.c.bf16 %v226, %v225
      %v245 = vpack.c.bf16 %v228, %v227
      %v246 = vpack.c.bf16 %v230, %v229
      %v247 = vld [vmem:[%s1] sm:$0xf]
      %v248 = vld [vmem:[%s1 + $0x4] sm:$0xf]
      %v249 = vld [vmem:[%s1 + $0x8] sm:$0xf]
      %v250 = vld [vmem:[%s1 + $0xc] sm:$0xf]
      %v251 = vld [vmem:[%s1 + $0x10] sm:$0xf]
      %v252 = vld [vmem:[%s1 + $0x14] sm:$0xf]
      %v253 = vld [vmem:[%s1 + $0x18] sm:$0xf]
      %v254 = vld [vmem:[%s1 + $0x1c] sm:$0xf]
      %v255 = vld [vmem:[%s1 + $0x20] sm:$0xf]
      %v256 = vld [vmem:[%s1 + $0x24] sm:$0xf]
      %v257 = vld [vmem:[%s1 + $0x28] sm:$0xf]
      %v258 = vld [vmem:[%s1 + $0x2c] sm:$0xf]
      %v259 = vld [vmem:[%s1 + $0x30] sm:$0xf]
      %v260 = vld [vmem:[%s1 + $0x34] sm:$0xf]
      %v261 = vld [vmem:[%s1 + $0x38] sm:$0xf]
      %v262 = vld [vmem:[%s1 + $0x3c] sm:$0xf]
      %v263 = vld [vmem:[%s192 + $0x1] sm:$0xff]
      %v264 = vld [vmem:[%s192 + $0x9] sm:$0xff]
      %v265 = vld [vmem:[%s192 + $0x19] sm:$0xff]
      %v266 = vld [vmem:[%s192 + $0x21] sm:$0xff]
      %v267 = vld [vmem:[%s192 + $0x31] sm:$0xff]
      %v268 = vld [vmem:[%s192 + $0x39] sm:$0xff]
      %v269 = vld [vmem:[%s192 + $0x49] sm:$0xff]
      %v270 = vld [vmem:[%s192 + $0x51] sm:$0xff]
      %v271 = vld [vmem:[%s192 + $0x61] sm:$0xff]
      %v272 = vld [vmem:[%s192 + $0x69] sm:$0xff]
      %v273 = vld [vmem:[%s192 + $0x79] sm:$0xff]
      %v274 = vld [vmem:[%s192 + $0x81] sm:$0xff]
      %v275 = vld [vmem:[%s192 + $0x91] sm:$0xff]
      %v276 = vld [vmem:[%s192 + $0x99] sm:$0xff]
      %v277 = vld [vmem:[%s192 + $0xa9] sm:$0xff]
      %v278 = vld [vmem:[%s192 + $0xb1] sm:$0xff]
      %v279 = vld [vmem:[%s192 + $0xc1] sm:$0xff]
      %v280 = vld [vmem:[%s192 + $0xc9] sm:$0xff]
      %v281 = vld [vmem:[%s192 + $0xd9] sm:$0xff]
      %v282 = vld [vmem:[%s192 + $0xe1] sm:$0xff]
      %v283 = vld [vmem:[%s192 + $0xf1] sm:$0xff]
      %v284 = vld [vmem:[%s192 + $0xf9] sm:$0xff]
      %v285 = vld [vmem:[%s192 + $0x109] sm:$0xff]
      %v286 = vld [vmem:[%s192 + $0x111] sm:$0xff]
      %v287 = vld [vmem:[%s192 + $0x121] sm:$0xff]
      %v288 = vld [vmem:[%s192 + $0x129] sm:$0xff]
      %v289 = vld [vmem:[%s192 + $0x139] sm:$0xff]
      %v290 = vld [vmem:[%s192 + $0x141] sm:$0xff]
      %v291 = vld [vmem:[%s192 + $0x151] sm:$0xff]
      %v292 = vld [vmem:[%s192 + $0x159] sm:$0xff]
      %v293 = vld [vmem:[%s192 + $0x169] sm:$0xff]
      %v294 = vld [vmem:[%s192 + $0x171] sm:$0xff]
      %v295 = vpack.c.bf16 %v264, %v263
      %v296 = vpack.c.bf16 %v266, %v265
      %v297 = vpack.c.bf16 %v268, %v267
      %v298 = vpack.c.bf16 %v270, %v269
      %v299 = vpack.c.bf16 %v272, %v271
      %v300 = vpack.c.bf16 %v274, %v273
      %v301 = vpack.c.bf16 %v276, %v275
      %v302 = vpack.c.bf16 %v278, %v277
      %v303 = vpack.c.bf16 %v280, %v279
      %v304 = vpack.c.bf16 %v282, %v281
      %v305 = vpack.c.bf16 %v284, %v283
      %v306 = vpack.c.bf16 %v286, %v285
      %v307 = vpack.c.bf16 %v288, %v287
      %v308 = vpack.c.bf16 %v290, %v289
      %v309 = vpack.c.bf16 %v292, %v291
      %v310 = vpack.c.bf16 %v294, %v293
      %s311 = scalar_lea.vmem %s1, 64
      %v312 = vld [vmem:[%s311] sm:$0xf]
      %v313 = vld [vmem:[%s311 + $0x4] sm:$0xf]
      %v314 = vld [vmem:[%s311 + $0x8] sm:$0xf]
      %v315 = vld [vmem:[%s311 + $0xc] sm:$0xf]
      %v316 = vld [vmem:[%s311 + $0x10] sm:$0xf]
      %v317 = vld [vmem:[%s311 + $0x14] sm:$0xf]
      %v318 = vld [vmem:[%s311 + $0x18] sm:$0xf]
      %v319 = vld [vmem:[%s311 + $0x1c] sm:$0xf]
      %v320 = vld [vmem:[%s311 + $0x20] sm:$0xf]
      %v321 = vld [vmem:[%s311 + $0x24] sm:$0xf]
      %v322 = vld [vmem:[%s311 + $0x28] sm:$0xf]
      %v323 = vld [vmem:[%s311 + $0x2c] sm:$0xf]
      %v324 = vld [vmem:[%s311 + $0x30] sm:$0xf]
      %v325 = vld [vmem:[%s311 + $0x34] sm:$0xf]
      %v326 = vld [vmem:[%s311 + $0x38] sm:$0xf]
      %v327 = vld [vmem:[%s311 + $0x3c] sm:$0xf]
      %v344 = vunpack.c.l.b16 %v312
      %v345 = vunpack.c.l.b16 %v313
      %v346 = vunpack.c.l.b16 %v314
      %v347 = vunpack.c.l.b16 %v315
      %v348 = vunpack.c.l.b16 %v316
      %v349 = vunpack.c.l.b16 %v317
      %v350 = vunpack.c.l.b16 %v318
      %v351 = vunpack.c.l.b16 %v319
      %v352 = vunpack.c.l.b16 %v320
      %v353 = vunpack.c.l.b16 %v321
      %v354 = vunpack.c.l.b16 %v322
      %v355 = vunpack.c.l.b16 %v323
      %v356 = vunpack.c.l.b16 %v324
      %v357 = vunpack.c.l.b16 %v325
      %v358 = vunpack.c.l.b16 %v326
      %v359 = vunpack.c.l.b16 %v327
      %v360 = vpack.c.b16 %v345, %v344
      %v361 = vpack.c.b16 %v347, %v346
      %v362 = vpack.c.b16 %v349, %v348
      %v363 = vpack.c.b16 %v351, %v350
      %v364 = vpack.c.b16 %v353, %v352
      %v365 = vpack.c.b16 %v355, %v354
      %v366 = vpack.c.b16 %v357, %v356
      %v367 = vpack.c.b16 %v359, %v358
      %376 = vmatprep.subr.bf16.mxu0 0
      %377 = vmatpush1.bf16.msra.mxu0 %v367
      %378 = vmatprep.subr.bf16.mxu0 0
      %379 = vmatpush1.bf16.msra.mxu0 %v366
      %380 = vmatprep.subr.bf16.mxu0 0
      %381 = vmatpush1.bf16.msra.mxu0 %v365
      %382 = vmatprep.subr.bf16.mxu0 0
      %383 = vmatpush1.bf16.msra.mxu0 %v364
      %384 = vmatprep.subr.bf16.mxu0 0
      %385 = vmatpush1.bf16.msra.mxu0 %v363
      %386 = vmatprep.subr.bf16.mxu0 0
      %387 = vmatpush1.bf16.msra.mxu0 %v362
      %388 = vmatprep.subr.bf16.mxu0 0
      %389 = vmatpush1.bf16.msra.mxu0 %v361
      %390 = vmatprep.subr.bf16.mxu0 0
      %391 = vmatpush1.bf16.msra.mxu0 %v360
      %392 = vmatprep.subr.bf16.mxu0 0
      %393 = vmatpush2.bf16.msra.mxu0 0
      %394 = vmatprep.subr.bf16.mxu0 0
      %395 = vmatpush2.bf16.msra.mxu0 0
      %396 = vmatprep.subr.bf16.mxu0 0
      %397 = vmatpush2.bf16.msra.mxu0 0
      %398 = vmatprep.subr.bf16.mxu0 0
      %399 = vmatpush2.bf16.msra.mxu0 0
      %400 = vmatprep.subr.bf16.mxu0 0
      %401 = vmatpush2.bf16.msra.mxu0 0
      %402 = vmatprep.subr.bf16.mxu0 0
      %403 = vmatpush2.bf16.msra.mxu0 0
      %404 = vmatprep.subr.bf16.mxu0 0
      %405 = vmatpush2.bf16.msra.mxu0 0
      %406 = vmatprep.subr.bf16.mxu0 0
      %407 = vmatpush2.bf16.msra.mxu0 0
      %408 = vmatprep.mubr.bf16.mxu0 0
      %409 = vmatmul.mubr.bf16.gmra.mxu0 %v295
      %v410 = vpop.f32.mrf.mxu0
      %v411 = vadd.f32 0.0, %v410
      %v412 = vpop.f32.mrf.mxu0
      %v413 = vpop.f32.mrf.mxu0
      %v414 = vadd.f32 0.0, %v413
      %v415 = vpop.f32.mrf.mxu0
      %416 = vmatprep.mubr.bf16.mxu0 0
      %417 = vmatmul.mubr.bf16.gmra.mxu0 %v296
      %v418 = vpop.f32.mrf.mxu0
      %v419 = vadd.f32 0.0, %v418
      %v420 = vpop.f32.mrf.mxu0
      %v421 = vpop.f32.mrf.mxu0
      %v422 = vadd.f32 0.0, %v421
      %v423 = vpop.f32.mrf.mxu0
      %424 = vmatprep.mubr.bf16.mxu0 0
      %425 = vmatmul.mubr.bf16.gmra.mxu0 %v297
      %v426 = vpop.f32.mrf.mxu0
      %v427 = vadd.f32 0.0, %v426
      %v428 = vpop.f32.mrf.mxu0
      %v429 = vpop.f32.mrf.mxu0
      %v430 = vadd.f32 0.0, %v429
      %v431 = vpop.f32.mrf.mxu0
      %432 = vmatprep.mubr.bf16.mxu0 0
      %433 = vmatmul.mubr.bf16.gmra.mxu0 %v298
      %v434 = vpop.f32.mrf.mxu0
      %v435 = vadd.f32 0.0, %v434
      %v436 = vpop.f32.mrf.mxu0
      %v437 = vpop.f32.mrf.mxu0
      %v438 = vadd.f32 0.0, %v437
      %v439 = vpop.f32.mrf.mxu0
      %440 = vmatprep.mubr.bf16.mxu0 0
      %441 = vmatmul.mubr.bf16.gmra.mxu0 %v299
      %v442 = vpop.f32.mrf.mxu0
      %v443 = vadd.f32 0.0, %v442
      %v444 = vpop.f32.mrf.mxu0
      %v445 = vpop.f32.mrf.mxu0
      %v446 = vadd.f32 0.0, %v445
      %v447 = vpop.f32.mrf.mxu0
      %448 = vmatprep.mubr.bf16.mxu0 0
      %449 = vmatmul.mubr.bf16.gmra.mxu0 %v300
      %v450 = vpop.f32.mrf.mxu0
      %v451 = vadd.f32 0.0, %v450
      %v452 = vpop.f32.mrf.mxu0
      %v453 = vpop.f32.mrf.mxu0
      %v454 = vadd.f32 0.0, %v453
      %v455 = vpop.f32.mrf.mxu0
      %456 = vmatprep.mubr.bf16.mxu0 0
      %457 = vmatmul.mubr.bf16.gmra.mxu0 %v301
      %v458 = vpop.f32.mrf.mxu0
      %v459 = vadd.f32 0.0, %v458
      %v460 = vpop.f32.mrf.mxu0
      %v461 = vpop.f32.mrf.mxu0
      %v462 = vadd.f32 0.0, %v461
      %v463 = vpop.f32.mrf.mxu0
      %464 = vmatprep.mubr.bf16.mxu0 0
      %465 = vmatmul.mubr.bf16.gmra.mxu0 %v302
      %v466 = vpop.f32.mrf.mxu0
      %v467 = vadd.f32 0.0, %v466
      %v468 = vpop.f32.mrf.mxu0
      %v469 = vpop.f32.mrf.mxu0
      %v470 = vadd.f32 0.0, %v469
      %v471 = vpop.f32.mrf.mxu0
      %472 = vmatprep.mubr.bf16.mxu0 0
      %473 = vmatmul.mubr.bf16.gmra.mxu0 %v303
      %v474 = vpop.f32.mrf.mxu0
      %v475 = vadd.f32 0.0, %v474
      %v476 = vpop.f32.mrf.mxu0
      %v477 = vpop.f32.mrf.mxu0
      %v478 = vadd.f32 0.0, %v477
      %v479 = vpop.f32.mrf.mxu0
      %480 = vmatprep.mubr.bf16.mxu0 0
      %481 = vmatmul.mubr.bf16.gmra.mxu0 %v304
      %v482 = vpop.f32.mrf.mxu0
      %v483 = vadd.f32 0.0, %v482
      %v484 = vpop.f32.mrf.mxu0
      %v485 = vpop.f32.mrf.mxu0
      %v486 = vadd.f32 0.0, %v485
      %v487 = vpop.f32.mrf.mxu0
      %488 = vmatprep.mubr.bf16.mxu0 0
      %489 = vmatmul.mubr.bf16.gmra.mxu0 %v305
      %v490 = vpop.f32.mrf.mxu0
      %v491 = vadd.f32 0.0, %v490
      %v492 = vpop.f32.mrf.mxu0
      %v493 = vpop.f32.mrf.mxu0
      %v494 = vadd.f32 0.0, %v493
      %v495 = vpop.f32.mrf.mxu0
      %496 = vmatprep.mubr.bf16.mxu0 0
      %497 = vmatmul.mubr.bf16.gmra.mxu0 %v306
      %v498 = vpop.f32.mrf.mxu0
      %v499 = vadd.f32 0.0, %v498
      %v500 = vpop.f32.mrf.mxu0
      %v501 = vpop.f32.mrf.mxu0
      %v502 = vadd.f32 0.0, %v501
      %v503 = vpop.f32.mrf.mxu0
      %504 = vmatprep.mubr.bf16.mxu0 0
      %505 = vmatmul.mubr.bf16.gmra.mxu0 %v307
      %v506 = vpop.f32.mrf.mxu0
      %v507 = vadd.f32 0.0, %v506
      %v508 = vpop.f32.mrf.mxu0
      %v509 = vpop.f32.mrf.mxu0
      %v510 = vadd.f32 0.0, %v509
      %v511 = vpop.f32.mrf.mxu0
      %512 = vmatprep.mubr.bf16.mxu0 0
      %513 = vmatmul.mubr.bf16.gmra.mxu0 %v308
      %v514 = vpop.f32.mrf.mxu0
      %v515 = vadd.f32 0.0, %v514
      %v516 = vpop.f32.mrf.mxu0
      %v517 = vpop.f32.mrf.mxu0
      %v518 = vadd.f32 0.0, %v517
      %v519 = vpop.f32.mrf.mxu0
      %520 = vmatprep.mubr.bf16.mxu0 0
      %521 = vmatmul.mubr.bf16.gmra.mxu0 %v309
      %v522 = vpop.f32.mrf.mxu0
      %v523 = vadd.f32 0.0, %v522
      %v524 = vpop.f32.mrf.mxu0
      %v525 = vpop.f32.mrf.mxu0
      %v526 = vadd.f32 0.0, %v525
      %v527 = vpop.f32.mrf.mxu0
      %528 = vmatprep.mubr.bf16.mxu0 0
      %529 = vmatmul.mubr.bf16.gmra.mxu0 %v310
      %v530 = vpop.f32.mrf.mxu0
      %v531 = vadd.f32 0.0, %v530
      %v532 = vpop.f32.mrf.mxu0
      %v533 = vpop.f32.mrf.mxu0
      %v534 = vadd.f32 0.0, %v533
      %v535 = vpop.f32.mrf.mxu0
      %536 = vdwg.mxu0
      %v553 = vunpack.c.l.b16 %v247
      %v554 = vunpack.c.l.b16 %v248
      %v555 = vunpack.c.l.b16 %v249
      %v556 = vunpack.c.l.b16 %v250
      %v557 = vunpack.c.l.b16 %v251
      %v558 = vunpack.c.l.b16 %v252
      %v559 = vunpack.c.l.b16 %v253
      %v560 = vunpack.c.l.b16 %v254
      %v561 = vunpack.c.l.b16 %v255
      %v562 = vunpack.c.l.b16 %v256
      %v563 = vunpack.c.l.b16 %v257
      %v564 = vunpack.c.l.b16 %v258
      %v565 = vunpack.c.l.b16 %v259
      %v566 = vunpack.c.l.b16 %v260
      %v567 = vunpack.c.l.b16 %v261
      %v568 = vunpack.c.l.b16 %v262
      %v569 = vpack.c.b16 %v554, %v553
      %v570 = vpack.c.b16 %v556, %v555
      %v571 = vpack.c.b16 %v558, %v557
      %v572 = vpack.c.b16 %v560, %v559
      %v573 = vpack.c.b16 %v562, %v561
      %v574 = vpack.c.b16 %v564, %v563
      %v575 = vpack.c.b16 %v566, %v565
      %v576 = vpack.c.b16 %v568, %v567
      %585 = vmatprep.subr.bf16.mxu0 0
      %586 = vmatpush1.bf16.msra.mxu0 %v576
      %587 = vmatprep.subr.bf16.mxu0 0
      %588 = vmatpush1.bf16.msra.mxu0 %v575
      %589 = vmatprep.subr.bf16.mxu0 0
      %590 = vmatpush1.bf16.msra.mxu0 %v574
      %591 = vmatprep.subr.bf16.mxu0 0
      %592 = vmatpush1.bf16.msra.mxu0 %v573
      %593 = vmatprep.subr.bf16.mxu0 0
      %594 = vmatpush1.bf16.msra.mxu0 %v572
      %595 = vmatprep.subr.bf16.mxu0 0
      %596 = vmatpush1.bf16.msra.mxu0 %v571
      %597 = vmatprep.subr.bf16.mxu0 0
      %598 = vmatpush1.bf16.msra.mxu0 %v570
      %599 = vmatprep.subr.bf16.mxu0 0
      %600 = vmatpush1.bf16.msra.mxu0 %v569
      %601 = vmatprep.subr.bf16.mxu0 0
      %602 = vmatpush2.bf16.msra.mxu0 0
      %603 = vmatprep.subr.bf16.mxu0 0
      %604 = vmatpush2.bf16.msra.mxu0 0
      %605 = vmatprep.subr.bf16.mxu0 0
      %606 = vmatpush2.bf16.msra.mxu0 0
      %607 = vmatprep.subr.bf16.mxu0 0
      %608 = vmatpush2.bf16.msra.mxu0 0
      %609 = vmatprep.subr.bf16.mxu0 0
      %610 = vmatpush2.bf16.msra.mxu0 0
      %611 = vmatprep.subr.bf16.mxu0 0
      %612 = vmatpush2.bf16.msra.mxu0 0
      %613 = vmatprep.subr.bf16.mxu0 0
      %614 = vmatpush2.bf16.msra.mxu0 0
      %615 = vmatprep.subr.bf16.mxu0 0
      %616 = vmatpush2.bf16.msra.mxu0 0
      %617 = vmatprep.mubr.bf16.mxu0 0
      %618 = vmatmul.mubr.bf16.gmra.mxu0 %v231
      %v619 = vpop.f32.mrf.mxu0
      %v620 = vadd.f32 %v411, %v619
      %v621 = vpop.f32.mrf.mxu0
      %v622 = vpop.f32.mrf.mxu0
      %v623 = vadd.f32 %v414, %v622
      %v624 = vpop.f32.mrf.mxu0
      %625 = vmatprep.mubr.bf16.mxu0 0
      %626 = vmatmul.mubr.bf16.gmra.mxu0 %v232
      %v627 = vpop.f32.mrf.mxu0
      %v628 = vadd.f32 %v419, %v627
      %v629 = vpop.f32.mrf.mxu0
      %v630 = vpop.f32.mrf.mxu0
      %v631 = vadd.f32 %v422, %v630
      %v632 = vpop.f32.mrf.mxu0
      %633 = vmatprep.mubr.bf16.mxu0 0
      %634 = vmatmul.mubr.bf16.gmra.mxu0 %v233
      %v635 = vpop.f32.mrf.mxu0
      %v636 = vadd.f32 %v427, %v635
      %v637 = vpop.f32.mrf.mxu0
      %v638 = vpop.f32.mrf.mxu0
      %v639 = vadd.f32 %v430, %v638
      %v640 = vpop.f32.mrf.mxu0
      %641 = vmatprep.mubr.bf16.mxu0 0
      %642 = vmatmul.mubr.bf16.gmra.mxu0 %v234
      %v643 = vpop.f32.mrf.mxu0
      %v644 = vadd.f32 %v435, %v643
      %v645 = vpop.f32.mrf.mxu0
      %v646 = vpop.f32.mrf.mxu0
      %v647 = vadd.f32 %v438, %v646
      %v648 = vpop.f32.mrf.mxu0
      %649 = vmatprep.mubr.bf16.mxu0 0
      %650 = vmatmul.mubr.bf16.gmra.mxu0 %v235
      %v651 = vpop.f32.mrf.mxu0
      %v652 = vadd.f32 %v443, %v651
      %v653 = vpop.f32.mrf.mxu0
      %v654 = vpop.f32.mrf.mxu0
      %v655 = vadd.f32 %v446, %v654
      %v656 = vpop.f32.mrf.mxu0
      %657 = vmatprep.mubr.bf16.mxu0 0
      %658 = vmatmul.mubr.bf16.gmra.mxu0 %v236
      %v659 = vpop.f32.mrf.mxu0
      %v660 = vadd.f32 %v451, %v659
      %v661 = vpop.f32.mrf.mxu0
      %v662 = vpop.f32.mrf.mxu0
      %v663 = vadd.f32 %v454, %v662
      %v664 = vpop.f32.mrf.mxu0
      %665 = vmatprep.mubr.bf16.mxu0 0
      %666 = vmatmul.mubr.bf16.gmra.mxu0 %v237
      %v667 = vpop.f32.mrf.mxu0
      %v668 = vadd.f32 %v459, %v667
      %v669 = vpop.f32.mrf.mxu0
      %v670 = vpop.f32.mrf.mxu0
      %v671 = vadd.f32 %v462, %v670
      %v672 = vpop.f32.mrf.mxu0
      %673 = vmatprep.mubr.bf16.mxu0 0
      %674 = vmatmul.mubr.bf16.gmra.mxu0 %v238
      %v675 = vpop.f32.mrf.mxu0
      %v676 = vadd.f32 %v467, %v675
      %v677 = vpop.f32.mrf.mxu0
      %v678 = vpop.f32.mrf.mxu0
      %v679 = vadd.f32 %v470, %v678
      %v680 = vpop.f32.mrf.mxu0
      %681 = vmatprep.mubr.bf16.mxu0 0
      %682 = vmatmul.mubr.bf16.gmra.mxu0 %v239
      %v683 = vpop.f32.mrf.mxu0
      %v684 = vadd.f32 %v475, %v683
      %v685 = vpop.f32.mrf.mxu0
      %v686 = vpop.f32.mrf.mxu0
      %v687 = vadd.f32 %v478, %v686
      %v688 = vpop.f32.mrf.mxu0
      %689 = vmatprep.mubr.bf16.mxu0 0
      %690 = vmatmul.mubr.bf16.gmra.mxu0 %v240
      %v691 = vpop.f32.mrf.mxu0
      %v692 = vadd.f32 %v483, %v691
      %v693 = vpop.f32.mrf.mxu0
      %v694 = vpop.f32.mrf.mxu0
      %v695 = vadd.f32 %v486, %v694
      %v696 = vpop.f32.mrf.mxu0
      %697 = vmatprep.mubr.bf16.mxu0 0
      %698 = vmatmul.mubr.bf16.gmra.mxu0 %v241
      %v699 = vpop.f32.mrf.mxu0
      %v700 = vadd.f32 %v491, %v699
      %v701 = vpop.f32.mrf.mxu0
      %v702 = vpop.f32.mrf.mxu0
      %v703 = vadd.f32 %v494, %v702
      %v704 = vpop.f32.mrf.mxu0
      %705 = vmatprep.mubr.bf16.mxu0 0
      %706 = vmatmul.mubr.bf16.gmra.mxu0 %v242
      %v707 = vpop.f32.mrf.mxu0
      %v708 = vadd.f32 %v499, %v707
      %v709 = vpop.f32.mrf.mxu0
      %v710 = vpop.f32.mrf.mxu0
      %v711 = vadd.f32 %v502, %v710
      %v712 = vpop.f32.mrf.mxu0
      %713 = vmatprep.mubr.bf16.mxu0 0
      %714 = vmatmul.mubr.bf16.gmra.mxu0 %v243
      %v715 = vpop.f32.mrf.mxu0
      %v716 = vadd.f32 %v507, %v715
      %v717 = vpop.f32.mrf.mxu0
      %v718 = vpop.f32.mrf.mxu0
      %v719 = vadd.f32 %v510, %v718
      %v720 = vpop.f32.mrf.mxu0
      %721 = vmatprep.mubr.bf16.mxu0 0
      %722 = vmatmul.mubr.bf16.gmra.mxu0 %v244
      %v723 = vpop.f32.mrf.mxu0
      %v724 = vadd.f32 %v515, %v723
      %v725 = vpop.f32.mrf.mxu0
      %v726 = vpop.f32.mrf.mxu0
      %v727 = vadd.f32 %v518, %v726
      %v728 = vpop.f32.mrf.mxu0
      %729 = vmatprep.mubr.bf16.mxu0 0
      %730 = vmatmul.mubr.bf16.gmra.mxu0 %v245
      %v731 = vpop.f32.mrf.mxu0
      %v732 = vadd.f32 %v523, %v731
      %v733 = vpop.f32.mrf.mxu0
      %v734 = vpop.f32.mrf.mxu0
      %v735 = vadd.f32 %v526, %v734
      %v736 = vpop.f32.mrf.mxu0
      %737 = vmatprep.mubr.bf16.mxu0 0
      %738 = vmatmul.mubr.bf16.gmra.mxu0 %v246
      %v739 = vpop.f32.mrf.mxu0
      %v740 = vadd.f32 %v531, %v739
      %v741 = vpop.f32.mrf.mxu0
      %v742 = vpop.f32.mrf.mxu0
      %v743 = vadd.f32 %v534, %v742
      %v744 = vpop.f32.mrf.mxu0
      %745 = vdwg.mxu0
      %v746 = vld [vmem:[%s192 + $0x2] sm:$0xff]
      %v747 = vld [vmem:[%s192 + $0xa] sm:$0xff]
      %v748 = vld [vmem:[%s192 + $0x1a] sm:$0xff]
      %v749 = vld [vmem:[%s192 + $0x22] sm:$0xff]
      %v750 = vld [vmem:[%s192 + $0x32] sm:$0xff]
      %v751 = vld [vmem:[%s192 + $0x3a] sm:$0xff]
      %v752 = vld [vmem:[%s192 + $0x4a] sm:$0xff]
      %v753 = vld [vmem:[%s192 + $0x52] sm:$0xff]
      %v754 = vld [vmem:[%s192 + $0x62] sm:$0xff]
      %v755 = vld [vmem:[%s192 + $0x6a] sm:$0xff]
      %v756 = vld [vmem:[%s192 + $0x7a] sm:$0xff]
      %v757 = vld [vmem:[%s192 + $0x82] sm:$0xff]
      %v758 = vld [vmem:[%s192 + $0x92] sm:$0xff]
      %v759 = vld [vmem:[%s192 + $0x9a] sm:$0xff]
      %v760 = vld [vmem:[%s192 + $0xaa] sm:$0xff]
      %v761 = vld [vmem:[%s192 + $0xb2] sm:$0xff]
      %v762 = vld [vmem:[%s192 + $0xc2] sm:$0xff]
      %v763 = vld [vmem:[%s192 + $0xca] sm:$0xff]
      %v764 = vld [vmem:[%s192 + $0xda] sm:$0xff]
      %v765 = vld [vmem:[%s192 + $0xe2] sm:$0xff]
      %v766 = vld [vmem:[%s192 + $0xf2] sm:$0xff]
      %v767 = vld [vmem:[%s192 + $0xfa] sm:$0xff]
      %v768 = vld [vmem:[%s192 + $0x10a] sm:$0xff]
      %v769 = vld [vmem:[%s192 + $0x112] sm:$0xff]
      %v770 = vld [vmem:[%s192 + $0x122] sm:$0xff]
      %v771 = vld [vmem:[%s192 + $0x12a] sm:$0xff]
      %v772 = vld [vmem:[%s192 + $0x13a] sm:$0xff]
      %v773 = vld [vmem:[%s192 + $0x142] sm:$0xff]
      %v774 = vld [vmem:[%s192 + $0x152] sm:$0xff]
      %v775 = vld [vmem:[%s192 + $0x15a] sm:$0xff]
      %v776 = vld [vmem:[%s192 + $0x16a] sm:$0xff]
      %v777 = vld [vmem:[%s192 + $0x172] sm:$0xff]
      %v778 = vpack.c.bf16 %v747, %v746
      %v779 = vpack.c.bf16 %v749, %v748
      %v780 = vpack.c.bf16 %v751, %v750
      %v781 = vpack.c.bf16 %v753, %v752
      %v782 = vpack.c.bf16 %v755, %v754
      %v783 = vpack.c.bf16 %v757, %v756
      %v784 = vpack.c.bf16 %v759, %v758
      %v785 = vpack.c.bf16 %v761, %v760
      %v786 = vpack.c.bf16 %v763, %v762
      %v787 = vpack.c.bf16 %v765, %v764
      %v788 = vpack.c.bf16 %v767, %v766
      %v789 = vpack.c.bf16 %v769, %v768
      %v790 = vpack.c.bf16 %v771, %v770
      %v791 = vpack.c.bf16 %v773, %v772
      %v792 = vpack.c.bf16 %v775, %v774
      %v793 = vpack.c.bf16 %v777, %v776
      %s794 = scalar_lea.vmem %s1, 128
      %v795 = vld [vmem:[%s794] sm:$0xf]
      %v796 = vld [vmem:[%s794 + $0x4] sm:$0xf]
      %v797 = vld [vmem:[%s794 + $0x8] sm:$0xf]
      %v798 = vld [vmem:[%s794 + $0xc] sm:$0xf]
      %v799 = vld [vmem:[%s794 + $0x10] sm:$0xf]
      %v800 = vld [vmem:[%s794 + $0x14] sm:$0xf]
      %v801 = vld [vmem:[%s794 + $0x18] sm:$0xf]
      %v802 = vld [vmem:[%s794 + $0x1c] sm:$0xf]
      %v803 = vld [vmem:[%s794 + $0x20] sm:$0xf]
      %v804 = vld [vmem:[%s794 + $0x24] sm:$0xf]
      %v805 = vld [vmem:[%s794 + $0x28] sm:$0xf]
      %v806 = vld [vmem:[%s794 + $0x2c] sm:$0xf]
      %v807 = vld [vmem:[%s794 + $0x30] sm:$0xf]
      %v808 = vld [vmem:[%s794 + $0x34] sm:$0xf]
      %v809 = vld [vmem:[%s794 + $0x38] sm:$0xf]
      %v810 = vld [vmem:[%s794 + $0x3c] sm:$0xf]
      %v827 = vunpack.c.l.b16 %v795
      %v828 = vunpack.c.l.b16 %v796
      %v829 = vunpack.c.l.b16 %v797
      %v830 = vunpack.c.l.b16 %v798
      %v831 = vunpack.c.l.b16 %v799
      %v832 = vunpack.c.l.b16 %v800
      %v833 = vunpack.c.l.b16 %v801
      %v834 = vunpack.c.l.b16 %v802
      %v835 = vunpack.c.l.b16 %v803
      %v836 = vunpack.c.l.b16 %v804
      %v837 = vunpack.c.l.b16 %v805
      %v838 = vunpack.c.l.b16 %v806
      %v839 = vunpack.c.l.b16 %v807
      %v840 = vunpack.c.l.b16 %v808
      %v841 = vunpack.c.l.b16 %v809
      %v842 = vunpack.c.l.b16 %v810
      %v843 = vpack.c.b16 %v828, %v827
      %v844 = vpack.c.b16 %v830, %v829
      %v845 = vpack.c.b16 %v832, %v831
      %v846 = vpack.c.b16 %v834, %v833
      %v847 = vpack.c.b16 %v836, %v835
      %v848 = vpack.c.b16 %v838, %v837
      %v849 = vpack.c.b16 %v840, %v839
      %v850 = vpack.c.b16 %v842, %v841
      %859 = vmatprep.subr.bf16.mxu0 0
      %860 = vmatpush1.bf16.msra.mxu0 %v850
      %861 = vmatprep.subr.bf16.mxu0 0
      %862 = vmatpush1.bf16.msra.mxu0 %v849
      %863 = vmatprep.subr.bf16.mxu0 0
      %864 = vmatpush1.bf16.msra.mxu0 %v848
      %865 = vmatprep.subr.bf16.mxu0 0
      %866 = vmatpush1.bf16.msra.mxu0 %v847
      %867 = vmatprep.subr.bf16.mxu0 0
      %868 = vmatpush1.bf16.msra.mxu0 %v846
      %869 = vmatprep.subr.bf16.mxu0 0
      %870 = vmatpush1.bf16.msra.mxu0 %v845
      %871 = vmatprep.subr.bf16.mxu0 0
      %872 = vmatpush1.bf16.msra.mxu0 %v844
      %873 = vmatprep.subr.bf16.mxu0 0
      %874 = vmatpush1.bf16.msra.mxu0 %v843
      %875 = vmatprep.subr.bf16.mxu0 0
      %876 = vmatpush2.bf16.msra.mxu0 0
      %877 = vmatprep.subr.bf16.mxu0 0
      %878 = vmatpush2.bf16.msra.mxu0 0
      %879 = vmatprep.subr.bf16.mxu0 0
      %880 = vmatpush2.bf16.msra.mxu0 0
      %881 = vmatprep.subr.bf16.mxu0 0
      %882 = vmatpush2.bf16.msra.mxu0 0
      %883 = vmatprep.subr.bf16.mxu0 0
      %884 = vmatpush2.bf16.msra.mxu0 0
      %885 = vmatprep.subr.bf16.mxu0 0
      %886 = vmatpush2.bf16.msra.mxu0 0
      %887 = vmatprep.subr.bf16.mxu0 0
      %888 = vmatpush2.bf16.msra.mxu0 0
      %889 = vmatprep.subr.bf16.mxu0 0
      %890 = vmatpush2.bf16.msra.mxu0 0
      %891 = vmatprep.mubr.bf16.mxu0 0
      %892 = vmatmul.mubr.bf16.gmra.mxu0 %v778
      %v893 = vpop.f32.mrf.mxu0
      %v894 = vadd.f32 0.0, %v893
      %v895 = vpop.f32.mrf.mxu0
      %v896 = vpop.f32.mrf.mxu0
      %v897 = vadd.f32 0.0, %v896
      %v898 = vpop.f32.mrf.mxu0
      %899 = vmatprep.mubr.bf16.mxu0 0
      %900 = vmatmul.mubr.bf16.gmra.mxu0 %v779
      %v901 = vpop.f32.mrf.mxu0
      %v902 = vadd.f32 0.0, %v901
      %v903 = vpop.f32.mrf.mxu0
      %v904 = vpop.f32.mrf.mxu0
      %v905 = vadd.f32 0.0, %v904
      %v906 = vpop.f32.mrf.mxu0
      %907 = vmatprep.mubr.bf16.mxu0 0
      %908 = vmatmul.mubr.bf16.gmra.mxu0 %v780
      %v909 = vpop.f32.mrf.mxu0
      %v910 = vadd.f32 0.0, %v909
      %v911 = vpop.f32.mrf.mxu0
      %v912 = vpop.f32.mrf.mxu0
      %v913 = vadd.f32 0.0, %v912
      %v914 = vpop.f32.mrf.mxu0
      %915 = vmatprep.mubr.bf16.mxu0 0
      %916 = vmatmul.mubr.bf16.gmra.mxu0 %v781
      %v917 = vpop.f32.mrf.mxu0
      %v918 = vadd.f32 0.0, %v917
      %v919 = vpop.f32.mrf.mxu0
      %v920 = vpop.f32.mrf.mxu0
      %v921 = vadd.f32 0.0, %v920
      %v922 = vpop.f32.mrf.mxu0
      %923 = vmatprep.mubr.bf16.mxu0 0
      %924 = vmatmul.mubr.bf16.gmra.mxu0 %v782
      %v925 = vpop.f32.mrf.mxu0
      %v926 = vadd.f32 0.0, %v925
      %v927 = vpop.f32.mrf.mxu0
      %v928 = vpop.f32.mrf.mxu0
      %v929 = vadd.f32 0.0, %v928
      %v930 = vpop.f32.mrf.mxu0
      %931 = vmatprep.mubr.bf16.mxu0 0
      %932 = vmatmul.mubr.bf16.gmra.mxu0 %v783
      %v933 = vpop.f32.mrf.mxu0
      %v934 = vadd.f32 0.0, %v933
      %v935 = vpop.f32.mrf.mxu0
      %v936 = vpop.f32.mrf.mxu0
      %v937 = vadd.f32 0.0, %v936
      %v938 = vpop.f32.mrf.mxu0
      %939 = vmatprep.mubr.bf16.mxu0 0
      %940 = vmatmul.mubr.bf16.gmra.mxu0 %v784
      %v941 = vpop.f32.mrf.mxu0
      %v942 = vadd.f32 0.0, %v941
      %v943 = vpop.f32.mrf.mxu0
      %v944 = vpop.f32.mrf.mxu0
      %v945 = vadd.f32 0.0, %v944
      %v946 = vpop.f32.mrf.mxu0
      %947 = vmatprep.mubr.bf16.mxu0 0
      %948 = vmatmul.mubr.bf16.gmra.mxu0 %v785
      %v949 = vpop.f32.mrf.mxu0
      %v950 = vadd.f32 0.0, %v949
      %v951 = vpop.f32.mrf.mxu0
      %v952 = vpop.f32.mrf.mxu0
      %v953 = vadd.f32 0.0, %v952
      %v954 = vpop.f32.mrf.mxu0
      %955 = vmatprep.mubr.bf16.mxu0 0
      %956 = vmatmul.mubr.bf16.gmra.mxu0 %v786
      %v957 = vpop.f32.mrf.mxu0
      %v958 = vadd.f32 0.0, %v957
      %v959 = vpop.f32.mrf.mxu0
      %v960 = vpop.f32.mrf.mxu0
      %v961 = vadd.f32 0.0, %v960
      %v962 = vpop.f32.mrf.mxu0
      %963 = vmatprep.mubr.bf16.mxu0 0
      %964 = vmatmul.mubr.bf16.gmra.mxu0 %v787
      %v965 = vpop.f32.mrf.mxu0
      %v966 = vadd.f32 0.0, %v965
      %v967 = vpop.f32.mrf.mxu0
      %v968 = vpop.f32.mrf.mxu0
      %v969 = vadd.f32 0.0, %v968
      %v970 = vpop.f32.mrf.mxu0
      %971 = vmatprep.mubr.bf16.mxu0 0
      %972 = vmatmul.mubr.bf16.gmra.mxu0 %v788
      %v973 = vpop.f32.mrf.mxu0
      %v974 = vadd.f32 0.0, %v973
      %v975 = vpop.f32.mrf.mxu0
      %v976 = vpop.f32.mrf.mxu0
      %v977 = vadd.f32 0.0, %v976
      %v978 = vpop.f32.mrf.mxu0
      %979 = vmatprep.mubr.bf16.mxu0 0
      %980 = vmatmul.mubr.bf16.gmra.mxu0 %v789
      %v981 = vpop.f32.mrf.mxu0
      %v982 = vadd.f32 0.0, %v981
      %v983 = vpop.f32.mrf.mxu0
      %v984 = vpop.f32.mrf.mxu0
      %v985 = vadd.f32 0.0, %v984
      %v986 = vpop.f32.mrf.mxu0
      %987 = vmatprep.mubr.bf16.mxu0 0
      %988 = vmatmul.mubr.bf16.gmra.mxu0 %v790
      %v989 = vpop.f32.mrf.mxu0
      %v990 = vadd.f32 0.0, %v989
      %v991 = vpop.f32.mrf.mxu0
      %v992 = vpop.f32.mrf.mxu0
      %v993 = vadd.f32 0.0, %v992
      %v994 = vpop.f32.mrf.mxu0
      %995 = vmatprep.mubr.bf16.mxu0 0
      %996 = vmatmul.mubr.bf16.gmra.mxu0 %v791
      %v997 = vpop.f32.mrf.mxu0
      %v998 = vadd.f32 0.0, %v997
      %v999 = vpop.f32.mrf.mxu0
      %v1000 = vpop.f32.mrf.mxu0
      %v1001 = vadd.f32 0.0, %v1000
      %v1002 = vpop.f32.mrf.mxu0
      %1003 = vmatprep.mubr.bf16.mxu0 0
      %1004 = vmatmul.mubr.bf16.gmra.mxu0 %v792
      %v1005 = vpop.f32.mrf.mxu0
      %v1006 = vadd.f32 0.0, %v1005
      %v1007 = vpop.f32.mrf.mxu0
      %v1008 = vpop.f32.mrf.mxu0
      %v1009 = vadd.f32 0.0, %v1008
      %v1010 = vpop.f32.mrf.mxu0
      %1011 = vmatprep.mubr.bf16.mxu0 0
      %1012 = vmatmul.mubr.bf16.gmra.mxu0 %v793
      %v1013 = vpop.f32.mrf.mxu0
      %v1014 = vadd.f32 0.0, %v1013
      %v1015 = vpop.f32.mrf.mxu0
      %v1016 = vpop.f32.mrf.mxu0
      %v1017 = vadd.f32 0.0, %v1016
      %v1018 = vpop.f32.mrf.mxu0
      %1019 = vdwg.mxu0
      %v1020 = vadd.f32 %v620, %v894
      %v1021 = vadd.f32 %v623, %v897
      %v1022 = vadd.f32 %v628, %v902
      %v1023 = vadd.f32 %v631, %v905
      %v1024 = vadd.f32 %v636, %v910
      %v1025 = vadd.f32 %v639, %v913
      %v1026 = vadd.f32 %v644, %v918
      %v1027 = vadd.f32 %v647, %v921
      %v1028 = vadd.f32 %v652, %v926
      %v1029 = vadd.f32 %v655, %v929
      %v1030 = vadd.f32 %v660, %v934
      %v1031 = vadd.f32 %v663, %v937
      %v1032 = vadd.f32 %v668, %v942
      %v1033 = vadd.f32 %v671, %v945
      %v1034 = vadd.f32 %v676, %v950
      %v1035 = vadd.f32 %v679, %v953
      %v1036 = vadd.f32 %v684, %v958
      %v1037 = vadd.f32 %v687, %v961
      %v1038 = vadd.f32 %v692, %v966
      %v1039 = vadd.f32 %v695, %v969
      %v1040 = vadd.f32 %v700, %v974
      %v1041 = vadd.f32 %v703, %v977
      %v1042 = vadd.f32 %v708, %v982
      %v1043 = vadd.f32 %v711, %v985
      %v1044 = vadd.f32 %v716, %v990
      %v1045 = vadd.f32 %v719, %v993
      %v1046 = vadd.f32 %v724, %v998
      %v1047 = vadd.f32 %v727, %v1001
      %v1048 = vadd.f32 %v732, %v1006
      %v1049 = vadd.f32 %v735, %v1009
      %v1050 = vadd.f32 %v740, %v1014
      %v1051 = vadd.f32 %v743, %v1017
      %s1052 = scalar_lea.vmem %s192, 24
      %v1053 = vld [vmem:[%s1052] sm:$0xff]
      %v1054 = vld [vmem:[%s1052 + $0x8] sm:$0xff]
      %v1055 = vld [vmem:[%s1052 + $0x18] sm:$0xff]
      %v1056 = vld [vmem:[%s1052 + $0x20] sm:$0xff]
      %v1057 = vld [vmem:[%s1052 + $0x30] sm:$0xff]
      %v1058 = vld [vmem:[%s1052 + $0x38] sm:$0xff]
      %v1059 = vld [vmem:[%s1052 + $0x48] sm:$0xff]
      %v1060 = vld [vmem:[%s1052 + $0x50] sm:$0xff]
      %v1061 = vld [vmem:[%s1052 + $0x60] sm:$0xff]
      %v1062 = vld [vmem:[%s1052 + $0x68] sm:$0xff]
      %v1063 = vld [vmem:[%s1052 + $0x78] sm:$0xff]
      %v1064 = vld [vmem:[%s1052 + $0x80] sm:$0xff]
      %v1065 = vld [vmem:[%s1052 + $0x90] sm:$0xff]
      %v1066 = vld [vmem:[%s1052 + $0x98] sm:$0xff]
      %v1067 = vld [vmem:[%s1052 + $0xa8] sm:$0xff]
      %v1068 = vld [vmem:[%s1052 + $0xb0] sm:$0xff]
      %v1069 = vld [vmem:[%s1052 + $0xc0] sm:$0xff]
      %v1070 = vld [vmem:[%s1052 + $0xc8] sm:$0xff]
      %v1071 = vld [vmem:[%s1052 + $0xd8] sm:$0xff]
      %v1072 = vld [vmem:[%s1052 + $0xe0] sm:$0xff]
      %v1073 = vld [vmem:[%s1052 + $0xf0] sm:$0xff]
      %v1074 = vld [vmem:[%s1052 + $0xf8] sm:$0xff]
      %v1075 = vld [vmem:[%s1052 + $0x108] sm:$0xff]
      %v1076 = vld [vmem:[%s1052 + $0x110] sm:$0xff]
      %v1077 = vld [vmem:[%s1052 + $0x120] sm:$0xff]
      %v1078 = vld [vmem:[%s1052 + $0x128] sm:$0xff]
      %v1079 = vld [vmem:[%s1052 + $0x138] sm:$0xff]
      %v1080 = vld [vmem:[%s1052 + $0x140] sm:$0xff]
      %v1081 = vld [vmem:[%s1052 + $0x150] sm:$0xff]
      %v1082 = vld [vmem:[%s1052 + $0x158] sm:$0xff]
      %v1083 = vld [vmem:[%s1052 + $0x168] sm:$0xff]
      %v1084 = vld [vmem:[%s1052 + $0x170] sm:$0xff]
      %v1085 = vpack.c.bf16 %v1054, %v1053
      %v1086 = vpack.c.bf16 %v1056, %v1055
      %v1087 = vpack.c.bf16 %v1058, %v1057
      %v1088 = vpack.c.bf16 %v1060, %v1059
      %v1089 = vpack.c.bf16 %v1062, %v1061
      %v1090 = vpack.c.bf16 %v1064, %v1063
      %v1091 = vpack.c.bf16 %v1066, %v1065
      %v1092 = vpack.c.bf16 %v1068, %v1067
      %v1093 = vpack.c.bf16 %v1070, %v1069
      %v1094 = vpack.c.bf16 %v1072, %v1071
      %v1095 = vpack.c.bf16 %v1074, %v1073
      %v1096 = vpack.c.bf16 %v1076, %v1075
      %v1097 = vpack.c.bf16 %v1078, %v1077
      %v1098 = vpack.c.bf16 %v1080, %v1079
      %v1099 = vpack.c.bf16 %v1082, %v1081
      %v1100 = vpack.c.bf16 %v1084, %v1083
      %s1101 = scalar_lea.vmem %s1, 192
      %v1102 = vld [vmem:[%s1101] sm:$0xf]
      %v1103 = vld [vmem:[%s1101 + $0x4] sm:$0xf]
      %v1104 = vld [vmem:[%s1101 + $0x8] sm:$0xf]
      %v1105 = vld [vmem:[%s1101 + $0xc] sm:$0xf]
      %v1106 = vld [vmem:[%s1101 + $0x10] sm:$0xf]
      %v1107 = vld [vmem:[%s1101 + $0x14] sm:$0xf]
      %v1108 = vld [vmem:[%s1101 + $0x18] sm:$0xf]
      %v1109 = vld [vmem:[%s1101 + $0x1c] sm:$0xf]
      %v1110 = vld [vmem:[%s1101 + $0x20] sm:$0xf]
      %v1111 = vld [vmem:[%s1101 + $0x24] sm:$0xf]
      %v1112 = vld [vmem:[%s1101 + $0x28] sm:$0xf]
      %v1113 = vld [vmem:[%s1101 + $0x2c] sm:$0xf]
      %v1114 = vld [vmem:[%s1101 + $0x30] sm:$0xf]
      %v1115 = vld [vmem:[%s1101 + $0x34] sm:$0xf]
      %v1116 = vld [vmem:[%s1101 + $0x38] sm:$0xf]
      %v1117 = vld [vmem:[%s1101 + $0x3c] sm:$0xf]
      %v1134 = vunpack.c.l.b16 %v1102
      %v1135 = vunpack.c.l.b16 %v1103
      %v1136 = vunpack.c.l.b16 %v1104
      %v1137 = vunpack.c.l.b16 %v1105
      %v1138 = vunpack.c.l.b16 %v1106
      %v1139 = vunpack.c.l.b16 %v1107
      %v1140 = vunpack.c.l.b16 %v1108
      %v1141 = vunpack.c.l.b16 %v1109
      %v1142 = vunpack.c.l.b16 %v1110
      %v1143 = vunpack.c.l.b16 %v1111
      %v1144 = vunpack.c.l.b16 %v1112
      %v1145 = vunpack.c.l.b16 %v1113
      %v1146 = vunpack.c.l.b16 %v1114
      %v1147 = vunpack.c.l.b16 %v1115
      %v1148 = vunpack.c.l.b16 %v1116
      %v1149 = vunpack.c.l.b16 %v1117
      %v1150 = vpack.c.b16 %v1135, %v1134
      %v1151 = vpack.c.b16 %v1137, %v1136
      %v1152 = vpack.c.b16 %v1139, %v1138
      %v1153 = vpack.c.b16 %v1141, %v1140
      %v1154 = vpack.c.b16 %v1143, %v1142
      %v1155 = vpack.c.b16 %v1145, %v1144
      %v1156 = vpack.c.b16 %v1147, %v1146
      %v1157 = vpack.c.b16 %v1149, %v1148
      %1166 = vmatprep.subr.bf16.mxu0 0
      %1167 = vmatpush1.bf16.msra.mxu0 %v1157
      %1168 = vmatprep.subr.bf16.mxu0 0
      %1169 = vmatpush1.bf16.msra.mxu0 %v1156
      %1170 = vmatprep.subr.bf16.mxu0 0
      %1171 = vmatpush1.bf16.msra.mxu0 %v1155
      %1172 = vmatprep.subr.bf16.mxu0 0
      %1173 = vmatpush1.bf16.msra.mxu0 %v1154
      %1174 = vmatprep.subr.bf16.mxu0 0
      %1175 = vmatpush1.bf16.msra.mxu0 %v1153
      %1176 = vmatprep.subr.bf16.mxu0 0
      %1177 = vmatpush1.bf16.msra.mxu0 %v1152
      %1178 = vmatprep.subr.bf16.mxu0 0
      %1179 = vmatpush1.bf16.msra.mxu0 %v1151
      %1180 = vmatprep.subr.bf16.mxu0 0
      %1181 = vmatpush1.bf16.msra.mxu0 %v1150
      %1182 = vmatprep.subr.bf16.mxu0 0
      %1183 = vmatpush2.bf16.msra.mxu0 0
      %1184 = vmatprep.subr.bf16.mxu0 0
      %1185 = vmatpush2.bf16.msra.mxu0 0
      %1186 = vmatprep.subr.bf16.mxu0 0
      %1187 = vmatpush2.bf16.msra.mxu0 0
      %1188 = vmatprep.subr.bf16.mxu0 0
      %1189 = vmatpush2.bf16.msra.mxu0 0
      %1190 = vmatprep.subr.bf16.mxu0 0
      %1191 = vmatpush2.bf16.msra.mxu0 0
      %1192 = vmatprep.subr.bf16.mxu0 0
      %1193 = vmatpush2.bf16.msra.mxu0 0
      %1194 = vmatprep.subr.bf16.mxu0 0
      %1195 = vmatpush2.bf16.msra.mxu0 0
      %1196 = vmatprep.subr.bf16.mxu0 0
      %1197 = vmatpush2.bf16.msra.mxu0 0
      %1198 = vmatprep.mubr.bf16.mxu0 0
      %1199 = vmatmul.mubr.bf16.gmra.mxu0 %v1085
      %v1200 = vpop.f32.mrf.mxu0
      %v1201 = vadd.f32 0.0, %v1200
      %v1202 = vpop.f32.mrf.mxu0
      %v1203 = vpop.f32.mrf.mxu0
      %v1204 = vadd.f32 0.0, %v1203
      %v1205 = vpop.f32.mrf.mxu0
      %1206 = vmatprep.mubr.bf16.mxu0 0
      %1207 = vmatmul.mubr.bf16.gmra.mxu0 %v1086
      %v1208 = vpop.f32.mrf.mxu0
      %v1209 = vadd.f32 0.0, %v1208
      %v1210 = vpop.f32.mrf.mxu0
      %v1211 = vpop.f32.mrf.mxu0
      %v1212 = vadd.f32 0.0, %v1211
      %v1213 = vpop.f32.mrf.mxu0
      %1214 = vmatprep.mubr.bf16.mxu0 0
      %1215 = vmatmul.mubr.bf16.gmra.mxu0 %v1087
      %v1216 = vpop.f32.mrf.mxu0
      %v1217 = vadd.f32 0.0, %v1216
      %v1218 = vpop.f32.mrf.mxu0
      %v1219 = vpop.f32.mrf.mxu0
      %v1220 = vadd.f32 0.0, %v1219
      %v1221 = vpop.f32.mrf.mxu0
      %1222 = vmatprep.mubr.bf16.mxu0 0
      %1223 = vmatmul.mubr.bf16.gmra.mxu0 %v1088
      %v1224 = vpop.f32.mrf.mxu0
      %v1225 = vadd.f32 0.0, %v1224
      %v1226 = vpop.f32.mrf.mxu0
      %v1227 = vpop.f32.mrf.mxu0
      %v1228 = vadd.f32 0.0, %v1227
      %v1229 = vpop.f32.mrf.mxu0
      %1230 = vmatprep.mubr.bf16.mxu0 0
      %1231 = vmatmul.mubr.bf16.gmra.mxu0 %v1089
      %v1232 = vpop.f32.mrf.mxu0
      %v1233 = vadd.f32 0.0, %v1232
      %v1234 = vpop.f32.mrf.mxu0
      %v1235 = vpop.f32.mrf.mxu0
      %v1236 = vadd.f32 0.0, %v1235
      %v1237 = vpop.f32.mrf.mxu0
      %1238 = vmatprep.mubr.bf16.mxu0 0
      %1239 = vmatmul.mubr.bf16.gmra.mxu0 %v1090
      %v1240 = vpop.f32.mrf.mxu0
      %v1241 = vadd.f32 0.0, %v1240
      %v1242 = vpop.f32.mrf.mxu0
      %v1243 = vpop.f32.mrf.mxu0
      %v1244 = vadd.f32 0.0, %v1243
      %v1245 = vpop.f32.mrf.mxu0
      %1246 = vmatprep.mubr.bf16.mxu0 0
      %1247 = vmatmul.mubr.bf16.gmra.mxu0 %v1091
      %v1248 = vpop.f32.mrf.mxu0
      %v1249 = vadd.f32 0.0, %v1248
      %v1250 = vpop.f32.mrf.mxu0
      %v1251 = vpop.f32.mrf.mxu0
      %v1252 = vadd.f32 0.0, %v1251
      %v1253 = vpop.f32.mrf.mxu0
      %1254 = vmatprep.mubr.bf16.mxu0 0
      %1255 = vmatmul.mubr.bf16.gmra.mxu0 %v1092
      %v1256 = vpop.f32.mrf.mxu0
      %v1257 = vadd.f32 0.0, %v1256
      %v1258 = vpop.f32.mrf.mxu0
      %v1259 = vpop.f32.mrf.mxu0
      %v1260 = vadd.f32 0.0, %v1259
      %v1261 = vpop.f32.mrf.mxu0
      %1262 = vmatprep.mubr.bf16.mxu0 0
      %1263 = vmatmul.mubr.bf16.gmra.mxu0 %v1093
      %v1264 = vpop.f32.mrf.mxu0
      %v1265 = vadd.f32 0.0, %v1264
      %v1266 = vpop.f32.mrf.mxu0
      %v1267 = vpop.f32.mrf.mxu0
      %v1268 = vadd.f32 0.0, %v1267
      %v1269 = vpop.f32.mrf.mxu0
      %1270 = vmatprep.mubr.bf16.mxu0 0
      %1271 = vmatmul.mubr.bf16.gmra.mxu0 %v1094
      %v1272 = vpop.f32.mrf.mxu0
      %v1273 = vadd.f32 0.0, %v1272
      %v1274 = vpop.f32.mrf.mxu0
      %v1275 = vpop.f32.mrf.mxu0
      %v1276 = vadd.f32 0.0, %v1275
      %v1277 = vpop.f32.mrf.mxu0
      %1278 = vmatprep.mubr.bf16.mxu0 0
      %1279 = vmatmul.mubr.bf16.gmra.mxu0 %v1095
      %v1280 = vpop.f32.mrf.mxu0
      %v1281 = vadd.f32 0.0, %v1280
      %v1282 = vpop.f32.mrf.mxu0
      %v1283 = vpop.f32.mrf.mxu0
      %v1284 = vadd.f32 0.0, %v1283
      %v1285 = vpop.f32.mrf.mxu0
      %1286 = vmatprep.mubr.bf16.mxu0 0
      %1287 = vmatmul.mubr.bf16.gmra.mxu0 %v1096
      %v1288 = vpop.f32.mrf.mxu0
      %v1289 = vadd.f32 0.0, %v1288
      %v1290 = vpop.f32.mrf.mxu0
      %v1291 = vpop.f32.mrf.mxu0
      %v1292 = vadd.f32 0.0, %v1291
      %v1293 = vpop.f32.mrf.mxu0
      %1294 = vmatprep.mubr.bf16.mxu0 0
      %1295 = vmatmul.mubr.bf16.gmra.mxu0 %v1097
      %v1296 = vpop.f32.mrf.mxu0
      %v1297 = vadd.f32 0.0, %v1296
      %v1298 = vpop.f32.mrf.mxu0
      %v1299 = vpop.f32.mrf.mxu0
      %v1300 = vadd.f32 0.0, %v1299
      %v1301 = vpop.f32.mrf.mxu0
      %1302 = vmatprep.mubr.bf16.mxu0 0
      %1303 = vmatmul.mubr.bf16.gmra.mxu0 %v1098
      %v1304 = vpop.f32.mrf.mxu0
      %v1305 = vadd.f32 0.0, %v1304
      %v1306 = vpop.f32.mrf.mxu0
      %v1307 = vpop.f32.mrf.mxu0
      %v1308 = vadd.f32 0.0, %v1307
      %v1309 = vpop.f32.mrf.mxu0
      %1310 = vmatprep.mubr.bf16.mxu0 0
      %1311 = vmatmul.mubr.bf16.gmra.mxu0 %v1099
      %v1312 = vpop.f32.mrf.mxu0
      %v1313 = vadd.f32 0.0, %v1312
      %v1314 = vpop.f32.mrf.mxu0
      %v1315 = vpop.f32.mrf.mxu0
      %v1316 = vadd.f32 0.0, %v1315
      %v1317 = vpop.f32.mrf.mxu0
      %1318 = vmatprep.mubr.bf16.mxu0 0
      %1319 = vmatmul.mubr.bf16.gmra.mxu0 %v1100
      %v1320 = vpop.f32.mrf.mxu0
      %v1321 = vadd.f32 0.0, %v1320
      %v1322 = vpop.f32.mrf.mxu0
      %v1323 = vpop.f32.mrf.mxu0
      %v1324 = vadd.f32 0.0, %v1323
      %v1325 = vpop.f32.mrf.mxu0
      %1326 = vdwg.mxu0
      %v1327 = vadd.f32 %v1020, %v1201
      %v1328 = vadd.f32 %v1021, %v1204
      %v1329 = vadd.f32 %v1022, %v1209
      %v1330 = vadd.f32 %v1023, %v1212
      %v1331 = vadd.f32 %v1024, %v1217
      %v1332 = vadd.f32 %v1025, %v1220
      %v1333 = vadd.f32 %v1026, %v1225
      %v1334 = vadd.f32 %v1027, %v1228
      %v1335 = vadd.f32 %v1028, %v1233
      %v1336 = vadd.f32 %v1029, %v1236
      %v1337 = vadd.f32 %v1030, %v1241
      %v1338 = vadd.f32 %v1031, %v1244
      %v1339 = vadd.f32 %v1032, %v1249
      %v1340 = vadd.f32 %v1033, %v1252
      %v1341 = vadd.f32 %v1034, %v1257
      %v1342 = vadd.f32 %v1035, %v1260
      %v1343 = vadd.f32 %v1036, %v1265
      %v1344 = vadd.f32 %v1037, %v1268
      %v1345 = vadd.f32 %v1038, %v1273
      %v1346 = vadd.f32 %v1039, %v1276
      %v1347 = vadd.f32 %v1040, %v1281
      %v1348 = vadd.f32 %v1041, %v1284
      %v1349 = vadd.f32 %v1042, %v1289
      %v1350 = vadd.f32 %v1043, %v1292
      %v1351 = vadd.f32 %v1044, %v1297
      %v1352 = vadd.f32 %v1045, %v1300
      %v1353 = vadd.f32 %v1046, %v1305
      %v1354 = vadd.f32 %v1047, %v1308
      %v1355 = vadd.f32 %v1048, %v1313
      %v1356 = vadd.f32 %v1049, %v1316
      %v1357 = vadd.f32 %v1050, %v1321
      %v1358 = vadd.f32 %v1051, %v1324
      %v1359 = vld [vmem:[%s1052 + $0x1] sm:$0xff]
      %v1360 = vld [vmem:[%s1052 + $0x9] sm:$0xff]
      %v1361 = vld [vmem:[%s1052 + $0x19] sm:$0xff]
      %v1362 = vld [vmem:[%s1052 + $0x21] sm:$0xff]
      %v1363 = vld [vmem:[%s1052 + $0x31] sm:$0xff]
      %v1364 = vld [vmem:[%s1052 + $0x39] sm:$0xff]
      %v1365 = vld [vmem:[%s1052 + $0x49] sm:$0xff]
      %v1366 = vld [vmem:[%s1052 + $0x51] sm:$0xff]
      %v1367 = vld [vmem:[%s1052 + $0x61] sm:$0xff]
      %v1368 = vld [vmem:[%s1052 + $0x69] sm:$0xff]
      %v1369 = vld [vmem:[%s1052 + $0x79] sm:$0xff]
      %v1370 = vld [vmem:[%s1052 + $0x81] sm:$0xff]
      %v1371 = vld [vmem:[%s1052 + $0x91] sm:$0xff]
      %v1372 = vld [vmem:[%s1052 + $0x99] sm:$0xff]
      %v1373 = vld [vmem:[%s1052 + $0xa9] sm:$0xff]
      %v1374 = vld [vmem:[%s1052 + $0xb1] sm:$0xff]
      %v1375 = vld [vmem:[%s1052 + $0xc1] sm:$0xff]
      %v1376 = vld [vmem:[%s1052 + $0xc9] sm:$0xff]
      %v1377 = vld [vmem:[%s1052 + $0xd9] sm:$0xff]
      %v1378 = vld [vmem:[%s1052 + $0xe1] sm:$0xff]
      %v1379 = vld [vmem:[%s1052 + $0xf1] sm:$0xff]
      %v1380 = vld [vmem:[%s1052 + $0xf9] sm:$0xff]
      %v1381 = vld [vmem:[%s1052 + $0x109] sm:$0xff]
      %v1382 = vld [vmem:[%s1052 + $0x111] sm:$0xff]
      %v1383 = vld [vmem:[%s1052 + $0x121] sm:$0xff]
      %v1384 = vld [vmem:[%s1052 + $0x129] sm:$0xff]
      %v1385 = vld [vmem:[%s1052 + $0x139] sm:$0xff]
      %v1386 = vld [vmem:[%s1052 + $0x141] sm:$0xff]
      %v1387 = vld [vmem:[%s1052 + $0x151] sm:$0xff]
      %v1388 = vld [vmem:[%s1052 + $0x159] sm:$0xff]
      %v1389 = vld [vmem:[%s1052 + $0x169] sm:$0xff]
      %v1390 = vld [vmem:[%s1052 + $0x171] sm:$0xff]
      %v1391 = vpack.c.bf16 %v1360, %v1359
      %v1392 = vpack.c.bf16 %v1362, %v1361
      %v1393 = vpack.c.bf16 %v1364, %v1363
      %v1394 = vpack.c.bf16 %v1366, %v1365
      %v1395 = vpack.c.bf16 %v1368, %v1367
      %v1396 = vpack.c.bf16 %v1370, %v1369
      %v1397 = vpack.c.bf16 %v1372, %v1371
      %v1398 = vpack.c.bf16 %v1374, %v1373
      %v1399 = vpack.c.bf16 %v1376, %v1375
      %v1400 = vpack.c.bf16 %v1378, %v1377
      %v1401 = vpack.c.bf16 %v1380, %v1379
      %v1402 = vpack.c.bf16 %v1382, %v1381
      %v1403 = vpack.c.bf16 %v1384, %v1383
      %v1404 = vpack.c.bf16 %v1386, %v1385
      %v1405 = vpack.c.bf16 %v1388, %v1387
      %v1406 = vpack.c.bf16 %v1390, %v1389
      %s1407 = scalar_lea.vmem %s1, 256
      %v1408 = vld [vmem:[%s1407] sm:$0xf]
      %v1409 = vld [vmem:[%s1407 + $0x4] sm:$0xf]
      %v1410 = vld [vmem:[%s1407 + $0x8] sm:$0xf]
      %v1411 = vld [vmem:[%s1407 + $0xc] sm:$0xf]
      %v1412 = vld [vmem:[%s1407 + $0x10] sm:$0xf]
      %v1413 = vld [vmem:[%s1407 + $0x14] sm:$0xf]
      %v1414 = vld [vmem:[%s1407 + $0x18] sm:$0xf]
      %v1415 = vld [vmem:[%s1407 + $0x1c] sm:$0xf]
      %v1416 = vld [vmem:[%s1407 + $0x20] sm:$0xf]
      %v1417 = vld [vmem:[%s1407 + $0x24] sm:$0xf]
      %v1418 = vld [vmem:[%s1407 + $0x28] sm:$0xf]
      %v1419 = vld [vmem:[%s1407 + $0x2c] sm:$0xf]
      %v1420 = vld [vmem:[%s1407 + $0x30] sm:$0xf]
      %v1421 = vld [vmem:[%s1407 + $0x34] sm:$0xf]
      %v1422 = vld [vmem:[%s1407 + $0x38] sm:$0xf]
      %v1423 = vld [vmem:[%s1407 + $0x3c] sm:$0xf]
      %v1440 = vunpack.c.l.b16 %v1408
      %v1441 = vunpack.c.l.b16 %v1409
      %v1442 = vunpack.c.l.b16 %v1410
      %v1443 = vunpack.c.l.b16 %v1411
      %v1444 = vunpack.c.l.b16 %v1412
      %v1445 = vunpack.c.l.b16 %v1413
      %v1446 = vunpack.c.l.b16 %v1414
      %v1447 = vunpack.c.l.b16 %v1415
      %v1448 = vunpack.c.l.b16 %v1416
      %v1449 = vunpack.c.l.b16 %v1417
      %v1450 = vunpack.c.l.b16 %v1418
      %v1451 = vunpack.c.l.b16 %v1419
      %v1452 = vunpack.c.l.b16 %v1420
      %v1453 = vunpack.c.l.b16 %v1421
      %v1454 = vunpack.c.l.b16 %v1422
      %v1455 = vunpack.c.l.b16 %v1423
      %v1456 = vpack.c.b16 %v1441, %v1440
      %v1457 = vpack.c.b16 %v1443, %v1442
      %v1458 = vpack.c.b16 %v1445, %v1444
      %v1459 = vpack.c.b16 %v1447, %v1446
      %v1460 = vpack.c.b16 %v1449, %v1448
      %v1461 = vpack.c.b16 %v1451, %v1450
      %v1462 = vpack.c.b16 %v1453, %v1452
      %v1463 = vpack.c.b16 %v1455, %v1454
      %1472 = vmatprep.subr.bf16.mxu0 0
      %1473 = vmatpush1.bf16.msra.mxu0 %v1463
      %1474 = vmatprep.subr.bf16.mxu0 0
      %1475 = vmatpush1.bf16.msra.mxu0 %v1462
      %1476 = vmatprep.subr.bf16.mxu0 0
      %1477 = vmatpush1.bf16.msra.mxu0 %v1461
      %1478 = vmatprep.subr.bf16.mxu0 0
      %1479 = vmatpush1.bf16.msra.mxu0 %v1460
      %1480 = vmatprep.subr.bf16.mxu0 0
      %1481 = vmatpush1.bf16.msra.mxu0 %v1459
      %1482 = vmatprep.subr.bf16.mxu0 0
      %1483 = vmatpush1.bf16.msra.mxu0 %v1458
      %1484 = vmatprep.subr.bf16.mxu0 0
      %1485 = vmatpush1.bf16.msra.mxu0 %v1457
      %1486 = vmatprep.subr.bf16.mxu0 0
      %1487 = vmatpush1.bf16.msra.mxu0 %v1456
      %1488 = vmatprep.subr.bf16.mxu0 0
      %1489 = vmatpush2.bf16.msra.mxu0 0
      %1490 = vmatprep.subr.bf16.mxu0 0
      %1491 = vmatpush2.bf16.msra.mxu0 0
      %1492 = vmatprep.subr.bf16.mxu0 0
      %1493 = vmatpush2.bf16.msra.mxu0 0
      %1494 = vmatprep.subr.bf16.mxu0 0
      %1495 = vmatpush2.bf16.msra.mxu0 0
      %1496 = vmatprep.subr.bf16.mxu0 0
      %1497 = vmatpush2.bf16.msra.mxu0 0
      %1498 = vmatprep.subr.bf16.mxu0 0
      %1499 = vmatpush2.bf16.msra.mxu0 0
      %1500 = vmatprep.subr.bf16.mxu0 0
      %1501 = vmatpush2.bf16.msra.mxu0 0
      %1502 = vmatprep.subr.bf16.mxu0 0
      %1503 = vmatpush2.bf16.msra.mxu0 0
      %1504 = vmatprep.mubr.bf16.mxu0 0
      %1505 = vmatmul.mubr.bf16.gmra.mxu0 %v1391
      %v1506 = vpop.f32.mrf.mxu0
      %v1507 = vadd.f32 0.0, %v1506
      %v1508 = vpop.f32.mrf.mxu0
      %v1509 = vpop.f32.mrf.mxu0
      %v1510 = vadd.f32 0.0, %v1509
      %v1511 = vpop.f32.mrf.mxu0
      %1512 = vmatprep.mubr.bf16.mxu0 0
      %1513 = vmatmul.mubr.bf16.gmra.mxu0 %v1392
      %v1514 = vpop.f32.mrf.mxu0
      %v1515 = vadd.f32 0.0, %v1514
      %v1516 = vpop.f32.mrf.mxu0
      %v1517 = vpop.f32.mrf.mxu0
      %v1518 = vadd.f32 0.0, %v1517
      %v1519 = vpop.f32.mrf.mxu0
      %1520 = vmatprep.mubr.bf16.mxu0 0
      %1521 = vmatmul.mubr.bf16.gmra.mxu0 %v1393
      %v1522 = vpop.f32.mrf.mxu0
      %v1523 = vadd.f32 0.0, %v1522
      %v1524 = vpop.f32.mrf.mxu0
      %v1525 = vpop.f32.mrf.mxu0
      %v1526 = vadd.f32 0.0, %v1525
      %v1527 = vpop.f32.mrf.mxu0
      %1528 = vmatprep.mubr.bf16.mxu0 0
      %1529 = vmatmul.mubr.bf16.gmra.mxu0 %v1394
      %v1530 = vpop.f32.mrf.mxu0
      %v1531 = vadd.f32 0.0, %v1530
      %v1532 = vpop.f32.mrf.mxu0
      %v1533 = vpop.f32.mrf.mxu0
      %v1534 = vadd.f32 0.0, %v1533
      %v1535 = vpop.f32.mrf.mxu0
      %1536 = vmatprep.mubr.bf16.mxu0 0
      %1537 = vmatmul.mubr.bf16.gmra.mxu0 %v1395
      %v1538 = vpop.f32.mrf.mxu0
      %v1539 = vadd.f32 0.0, %v1538
      %v1540 = vpop.f32.mrf.mxu0
      %v1541 = vpop.f32.mrf.mxu0
      %v1542 = vadd.f32 0.0, %v1541
      %v1543 = vpop.f32.mrf.mxu0
      %1544 = vmatprep.mubr.bf16.mxu0 0
      %1545 = vmatmul.mubr.bf16.gmra.mxu0 %v1396
      %v1546 = vpop.f32.mrf.mxu0
      %v1547 = vadd.f32 0.0, %v1546
      %v1548 = vpop.f32.mrf.mxu0
      %v1549 = vpop.f32.mrf.mxu0
      %v1550 = vadd.f32 0.0, %v1549
      %v1551 = vpop.f32.mrf.mxu0
      %1552 = vmatprep.mubr.bf16.mxu0 0
      %1553 = vmatmul.mubr.bf16.gmra.mxu0 %v1397
      %v1554 = vpop.f32.mrf.mxu0
      %v1555 = vadd.f32 0.0, %v1554
      %v1556 = vpop.f32.mrf.mxu0
      %v1557 = vpop.f32.mrf.mxu0
      %v1558 = vadd.f32 0.0, %v1557
      %v1559 = vpop.f32.mrf.mxu0
      %1560 = vmatprep.mubr.bf16.mxu0 0
      %1561 = vmatmul.mubr.bf16.gmra.mxu0 %v1398
      %v1562 = vpop.f32.mrf.mxu0
      %v1563 = vadd.f32 0.0, %v1562
      %v1564 = vpop.f32.mrf.mxu0
      %v1565 = vpop.f32.mrf.mxu0
      %v1566 = vadd.f32 0.0, %v1565
      %v1567 = vpop.f32.mrf.mxu0
      %1568 = vmatprep.mubr.bf16.mxu0 0
      %1569 = vmatmul.mubr.bf16.gmra.mxu0 %v1399
      %v1570 = vpop.f32.mrf.mxu0
      %v1571 = vadd.f32 0.0, %v1570
      %v1572 = vpop.f32.mrf.mxu0
      %v1573 = vpop.f32.mrf.mxu0
      %v1574 = vadd.f32 0.0, %v1573
      %v1575 = vpop.f32.mrf.mxu0
      %1576 = vmatprep.mubr.bf16.mxu0 0
      %1577 = vmatmul.mubr.bf16.gmra.mxu0 %v1400
      %v1578 = vpop.f32.mrf.mxu0
      %v1579 = vadd.f32 0.0, %v1578
      %v1580 = vpop.f32.mrf.mxu0
      %v1581 = vpop.f32.mrf.mxu0
      %v1582 = vadd.f32 0.0, %v1581
      %v1583 = vpop.f32.mrf.mxu0
      %1584 = vmatprep.mubr.bf16.mxu0 0
      %1585 = vmatmul.mubr.bf16.gmra.mxu0 %v1401
      %v1586 = vpop.f32.mrf.mxu0
      %v1587 = vadd.f32 0.0, %v1586
      %v1588 = vpop.f32.mrf.mxu0
      %v1589 = vpop.f32.mrf.mxu0
      %v1590 = vadd.f32 0.0, %v1589
      %v1591 = vpop.f32.mrf.mxu0
      %1592 = vmatprep.mubr.bf16.mxu0 0
      %1593 = vmatmul.mubr.bf16.gmra.mxu0 %v1402
      %v1594 = vpop.f32.mrf.mxu0
      %v1595 = vadd.f32 0.0, %v1594
      %v1596 = vpop.f32.mrf.mxu0
      %v1597 = vpop.f32.mrf.mxu0
      %v1598 = vadd.f32 0.0, %v1597
      %v1599 = vpop.f32.mrf.mxu0
      %1600 = vmatprep.mubr.bf16.mxu0 0
      %1601 = vmatmul.mubr.bf16.gmra.mxu0 %v1403
      %v1602 = vpop.f32.mrf.mxu0
      %v1603 = vadd.f32 0.0, %v1602
      %v1604 = vpop.f32.mrf.mxu0
      %v1605 = vpop.f32.mrf.mxu0
      %v1606 = vadd.f32 0.0, %v1605
      %v1607 = vpop.f32.mrf.mxu0
      %1608 = vmatprep.mubr.bf16.mxu0 0
      %1609 = vmatmul.mubr.bf16.gmra.mxu0 %v1404
      %v1610 = vpop.f32.mrf.mxu0
      %v1611 = vadd.f32 0.0, %v1610
      %v1612 = vpop.f32.mrf.mxu0
      %v1613 = vpop.f32.mrf.mxu0
      %v1614 = vadd.f32 0.0, %v1613
      %v1615 = vpop.f32.mrf.mxu0
      %1616 = vmatprep.mubr.bf16.mxu0 0
      %1617 = vmatmul.mubr.bf16.gmra.mxu0 %v1405
      %v1618 = vpop.f32.mrf.mxu0
      %v1619 = vadd.f32 0.0, %v1618
      %v1620 = vpop.f32.mrf.mxu0
      %v1621 = vpop.f32.mrf.mxu0
      %v1622 = vadd.f32 0.0, %v1621
      %v1623 = vpop.f32.mrf.mxu0
      %1624 = vmatprep.mubr.bf16.mxu0 0
      %1625 = vmatmul.mubr.bf16.gmra.mxu0 %v1406
      %v1626 = vpop.f32.mrf.mxu0
      %v1627 = vadd.f32 0.0, %v1626
      %v1628 = vpop.f32.mrf.mxu0
      %v1629 = vpop.f32.mrf.mxu0
      %v1630 = vadd.f32 0.0, %v1629
      %v1631 = vpop.f32.mrf.mxu0
      %1632 = vdwg.mxu0
      %v1633 = vadd.f32 %v1327, %v1507
      %v1634 = vadd.f32 %v1328, %v1510
      %v1635 = vadd.f32 %v1329, %v1515
      %v1636 = vadd.f32 %v1330, %v1518
      %v1637 = vadd.f32 %v1331, %v1523
      %v1638 = vadd.f32 %v1332, %v1526
      %v1639 = vadd.f32 %v1333, %v1531
      %v1640 = vadd.f32 %v1334, %v1534
      %v1641 = vadd.f32 %v1335, %v1539
      %v1642 = vadd.f32 %v1336, %v1542
      %v1643 = vadd.f32 %v1337, %v1547
      %v1644 = vadd.f32 %v1338, %v1550
      %v1645 = vadd.f32 %v1339, %v1555
      %v1646 = vadd.f32 %v1340, %v1558
      %v1647 = vadd.f32 %v1341, %v1563
      %v1648 = vadd.f32 %v1342, %v1566
      %v1649 = vadd.f32 %v1343, %v1571
      %v1650 = vadd.f32 %v1344, %v1574
      %v1651 = vadd.f32 %v1345, %v1579
      %v1652 = vadd.f32 %v1346, %v1582
      %v1653 = vadd.f32 %v1347, %v1587
      %v1654 = vadd.f32 %v1348, %v1590
      %v1655 = vadd.f32 %v1349, %v1595
      %v1656 = vadd.f32 %v1350, %v1598
      %v1657 = vadd.f32 %v1351, %v1603
      %v1658 = vadd.f32 %v1352, %v1606
      %v1659 = vadd.f32 %v1353, %v1611
      %v1660 = vadd.f32 %v1354, %v1614
      %v1661 = vadd.f32 %v1355, %v1619
      %v1662 = vadd.f32 %v1356, %v1622
      %v1663 = vadd.f32 %v1357, %v1627
      %v1664 = vadd.f32 %v1358, %v1630
      %v1665 = vld [vmem:[%s1052 + $0x2] sm:$0xff]
      %v1666 = vld [vmem:[%s1052 + $0xa] sm:$0xff]
      %v1667 = vld [vmem:[%s1052 + $0x1a] sm:$0xff]
      %v1668 = vld [vmem:[%s1052 + $0x22] sm:$0xff]
      %v1669 = vld [vmem:[%s1052 + $0x32] sm:$0xff]
      %v1670 = vld [vmem:[%s1052 + $0x3a] sm:$0xff]
      %v1671 = vld [vmem:[%s1052 + $0x4a] sm:$0xff]
      %v1672 = vld [vmem:[%s1052 + $0x52] sm:$0xff]
      %v1673 = vld [vmem:[%s1052 + $0x62] sm:$0xff]
      %v1674 = vld [vmem:[%s1052 + $0x6a] sm:$0xff]
      %v1675 = vld [vmem:[%s1052 + $0x7a] sm:$0xff]
      %v1676 = vld [vmem:[%s1052 + $0x82] sm:$0xff]
      %v1677 = vld [vmem:[%s1052 + $0x92] sm:$0xff]
      %v1678 = vld [vmem:[%s1052 + $0x9a] sm:$0xff]
      %v1679 = vld [vmem:[%s1052 + $0xaa] sm:$0xff]
      %v1680 = vld [vmem:[%s1052 + $0xb2] sm:$0xff]
      %v1681 = vld [vmem:[%s1052 + $0xc2] sm:$0xff]
      %v1682 = vld [vmem:[%s1052 + $0xca] sm:$0xff]
      %v1683 = vld [vmem:[%s1052 + $0xda] sm:$0xff]
      %v1684 = vld [vmem:[%s1052 + $0xe2] sm:$0xff]
      %v1685 = vld [vmem:[%s1052 + $0xf2] sm:$0xff]
      %v1686 = vld [vmem:[%s1052 + $0xfa] sm:$0xff]
      %v1687 = vld [vmem:[%s1052 + $0x10a] sm:$0xff]
      %v1688 = vld [vmem:[%s1052 + $0x112] sm:$0xff]
      %v1689 = vld [vmem:[%s1052 + $0x122] sm:$0xff]
      %v1690 = vld [vmem:[%s1052 + $0x12a] sm:$0xff]
      %v1691 = vld [vmem:[%s1052 + $0x13a] sm:$0xff]
      %v1692 = vld [vmem:[%s1052 + $0x142] sm:$0xff]
      %v1693 = vld [vmem:[%s1052 + $0x152] sm:$0xff]
      %v1694 = vld [vmem:[%s1052 + $0x15a] sm:$0xff]
      %v1695 = vld [vmem:[%s1052 + $0x16a] sm:$0xff]
      %v1696 = vld [vmem:[%s1052 + $0x172] sm:$0xff]
      %v1697 = vpack.c.bf16 %v1666, %v1665
      %v1698 = vpack.c.bf16 %v1668, %v1667
      %v1699 = vpack.c.bf16 %v1670, %v1669
      %v1700 = vpack.c.bf16 %v1672, %v1671
      %v1701 = vpack.c.bf16 %v1674, %v1673
      %v1702 = vpack.c.bf16 %v1676, %v1675
      %v1703 = vpack.c.bf16 %v1678, %v1677
      %v1704 = vpack.c.bf16 %v1680, %v1679
      %v1705 = vpack.c.bf16 %v1682, %v1681
      %v1706 = vpack.c.bf16 %v1684, %v1683
      %v1707 = vpack.c.bf16 %v1686, %v1685
      %v1708 = vpack.c.bf16 %v1688, %v1687
      %v1709 = vpack.c.bf16 %v1690, %v1689
      %v1710 = vpack.c.bf16 %v1692, %v1691
      %v1711 = vpack.c.bf16 %v1694, %v1693
      %v1712 = vpack.c.bf16 %v1696, %v1695
      %s1713 = scalar_lea.vmem %s1, 320
      %v1714 = vld [vmem:[%s1713] sm:$0xf]
      %v1715 = vld [vmem:[%s1713 + $0x4] sm:$0xf]
      %v1716 = vld [vmem:[%s1713 + $0x8] sm:$0xf]
      %v1717 = vld [vmem:[%s1713 + $0xc] sm:$0xf]
      %v1718 = vld [vmem:[%s1713 + $0x10] sm:$0xf]
      %v1719 = vld [vmem:[%s1713 + $0x14] sm:$0xf]
      %v1720 = vld [vmem:[%s1713 + $0x18] sm:$0xf]
      %v1721 = vld [vmem:[%s1713 + $0x1c] sm:$0xf]
      %v1722 = vld [vmem:[%s1713 + $0x20] sm:$0xf]
      %v1723 = vld [vmem:[%s1713 + $0x24] sm:$0xf]
      %v1724 = vld [vmem:[%s1713 + $0x28] sm:$0xf]
      %v1725 = vld [vmem:[%s1713 + $0x2c] sm:$0xf]
      %v1726 = vld [vmem:[%s1713 + $0x30] sm:$0xf]
      %v1727 = vld [vmem:[%s1713 + $0x34] sm:$0xf]
      %v1728 = vld [vmem:[%s1713 + $0x38] sm:$0xf]
      %v1729 = vld [vmem:[%s1713 + $0x3c] sm:$0xf]
      %v1746 = vunpack.c.l.b16 %v1714
      %v1747 = vunpack.c.l.b16 %v1715
      %v1748 = vunpack.c.l.b16 %v1716
      %v1749 = vunpack.c.l.b16 %v1717
      %v1750 = vunpack.c.l.b16 %v1718
      %v1751 = vunpack.c.l.b16 %v1719
      %v1752 = vunpack.c.l.b16 %v1720
      %v1753 = vunpack.c.l.b16 %v1721
      %v1754 = vunpack.c.l.b16 %v1722
      %v1755 = vunpack.c.l.b16 %v1723
      %v1756 = vunpack.c.l.b16 %v1724
      %v1757 = vunpack.c.l.b16 %v1725
      %v1758 = vunpack.c.l.b16 %v1726
      %v1759 = vunpack.c.l.b16 %v1727
      %v1760 = vunpack.c.l.b16 %v1728
      %v1761 = vunpack.c.l.b16 %v1729
      %v1762 = vpack.c.b16 %v1747, %v1746
      %v1763 = vpack.c.b16 %v1749, %v1748
      %v1764 = vpack.c.b16 %v1751, %v1750
      %v1765 = vpack.c.b16 %v1753, %v1752
      %v1766 = vpack.c.b16 %v1755, %v1754
      %v1767 = vpack.c.b16 %v1757, %v1756
      %v1768 = vpack.c.b16 %v1759, %v1758
      %v1769 = vpack.c.b16 %v1761, %v1760
      %1778 = vmatprep.subr.bf16.mxu0 0
      %1779 = vmatpush1.bf16.msra.mxu0 %v1769
      %1780 = vmatprep.subr.bf16.mxu0 0
      %1781 = vmatpush1.bf16.msra.mxu0 %v1768
      %1782 = vmatprep.subr.bf16.mxu0 0
      %1783 = vmatpush1.bf16.msra.mxu0 %v1767
      %1784 = vmatprep.subr.bf16.mxu0 0
      %1785 = vmatpush1.bf16.msra.mxu0 %v1766
      %1786 = vmatprep.subr.bf16.mxu0 0
      %1787 = vmatpush1.bf16.msra.mxu0 %v1765
      %1788 = vmatprep.subr.bf16.mxu0 0
      %1789 = vmatpush1.bf16.msra.mxu0 %v1764
      %1790 = vmatprep.subr.bf16.mxu0 0
      %1791 = vmatpush1.bf16.msra.mxu0 %v1763
      %1792 = vmatprep.subr.bf16.mxu0 0
      %1793 = vmatpush1.bf16.msra.mxu0 %v1762
      %1794 = vmatprep.subr.bf16.mxu0 0
      %1795 = vmatpush2.bf16.msra.mxu0 0
      %1796 = vmatprep.subr.bf16.mxu0 0
      %1797 = vmatpush2.bf16.msra.mxu0 0
      %1798 = vmatprep.subr.bf16.mxu0 0
      %1799 = vmatpush2.bf16.msra.mxu0 0
      %1800 = vmatprep.subr.bf16.mxu0 0
      %1801 = vmatpush2.bf16.msra.mxu0 0
      %1802 = vmatprep.subr.bf16.mxu0 0
      %1803 = vmatpush2.bf16.msra.mxu0 0
      %1804 = vmatprep.subr.bf16.mxu0 0
      %1805 = vmatpush2.bf16.msra.mxu0 0
      %1806 = vmatprep.subr.bf16.mxu0 0
      %1807 = vmatpush2.bf16.msra.mxu0 0
      %1808 = vmatprep.subr.bf16.mxu0 0
      %1809 = vmatpush2.bf16.msra.mxu0 0
      %1810 = vmatprep.mubr.bf16.mxu0 0
      %1811 = vmatmul.mubr.bf16.gmra.mxu0 %v1697
      %v1812 = vpop.f32.mrf.mxu0
      %v1813 = vadd.f32 0.0, %v1812
      %v1814 = vpop.f32.mrf.mxu0
      %v1815 = vpop.f32.mrf.mxu0
      %v1816 = vadd.f32 0.0, %v1815
      %v1817 = vpop.f32.mrf.mxu0
      %1818 = vmatprep.mubr.bf16.mxu0 0
      %1819 = vmatmul.mubr.bf16.gmra.mxu0 %v1698
      %v1820 = vpop.f32.mrf.mxu0
      %v1821 = vadd.f32 0.0, %v1820
      %v1822 = vpop.f32.mrf.mxu0
      %v1823 = vpop.f32.mrf.mxu0
      %v1824 = vadd.f32 0.0, %v1823
      %v1825 = vpop.f32.mrf.mxu0
      %1826 = vmatprep.mubr.bf16.mxu0 0
      %1827 = vmatmul.mubr.bf16.gmra.mxu0 %v1699
      %v1828 = vpop.f32.mrf.mxu0
      %v1829 = vadd.f32 0.0, %v1828
      %v1830 = vpop.f32.mrf.mxu0
      %v1831 = vpop.f32.mrf.mxu0
      %v1832 = vadd.f32 0.0, %v1831
      %v1833 = vpop.f32.mrf.mxu0
      %1834 = vmatprep.mubr.bf16.mxu0 0
      %1835 = vmatmul.mubr.bf16.gmra.mxu0 %v1700
      %v1836 = vpop.f32.mrf.mxu0
      %v1837 = vadd.f32 0.0, %v1836
      %v1838 = vpop.f32.mrf.mxu0
      %v1839 = vpop.f32.mrf.mxu0
      %v1840 = vadd.f32 0.0, %v1839
      %v1841 = vpop.f32.mrf.mxu0
      %1842 = vmatprep.mubr.bf16.mxu0 0
      %1843 = vmatmul.mubr.bf16.gmra.mxu0 %v1701
      %v1844 = vpop.f32.mrf.mxu0
      %v1845 = vadd.f32 0.0, %v1844
      %v1846 = vpop.f32.mrf.mxu0
      %v1847 = vpop.f32.mrf.mxu0
      %v1848 = vadd.f32 0.0, %v1847
      %v1849 = vpop.f32.mrf.mxu0
      %1850 = vmatprep.mubr.bf16.mxu0 0
      %1851 = vmatmul.mubr.bf16.gmra.mxu0 %v1702
      %v1852 = vpop.f32.mrf.mxu0
      %v1853 = vadd.f32 0.0, %v1852
      %v1854 = vpop.f32.mrf.mxu0
      %v1855 = vpop.f32.mrf.mxu0
      %v1856 = vadd.f32 0.0, %v1855
      %v1857 = vpop.f32.mrf.mxu0
      %1858 = vmatprep.mubr.bf16.mxu0 0
      %1859 = vmatmul.mubr.bf16.gmra.mxu0 %v1703
      %v1860 = vpop.f32.mrf.mxu0
      %v1861 = vadd.f32 0.0, %v1860
      %v1862 = vpop.f32.mrf.mxu0
      %v1863 = vpop.f32.mrf.mxu0
      %v1864 = vadd.f32 0.0, %v1863
      %v1865 = vpop.f32.mrf.mxu0
      %1866 = vmatprep.mubr.bf16.mxu0 0
      %1867 = vmatmul.mubr.bf16.gmra.mxu0 %v1704
      %v1868 = vpop.f32.mrf.mxu0
      %v1869 = vadd.f32 0.0, %v1868
      %v1870 = vpop.f32.mrf.mxu0
      %v1871 = vpop.f32.mrf.mxu0
      %v1872 = vadd.f32 0.0, %v1871
      %v1873 = vpop.f32.mrf.mxu0
      %1874 = vmatprep.mubr.bf16.mxu0 0
      %1875 = vmatmul.mubr.bf16.gmra.mxu0 %v1705
      %v1876 = vpop.f32.mrf.mxu0
      %v1877 = vadd.f32 0.0, %v1876
      %v1878 = vpop.f32.mrf.mxu0
      %v1879 = vpop.f32.mrf.mxu0
      %v1880 = vadd.f32 0.0, %v1879
      %v1881 = vpop.f32.mrf.mxu0
      %1882 = vmatprep.mubr.bf16.mxu0 0
      %1883 = vmatmul.mubr.bf16.gmra.mxu0 %v1706
      %v1884 = vpop.f32.mrf.mxu0
      %v1885 = vadd.f32 0.0, %v1884
      %v1886 = vpop.f32.mrf.mxu0
      %v1887 = vpop.f32.mrf.mxu0
      %v1888 = vadd.f32 0.0, %v1887
      %v1889 = vpop.f32.mrf.mxu0
      %1890 = vmatprep.mubr.bf16.mxu0 0
      %1891 = vmatmul.mubr.bf16.gmra.mxu0 %v1707
      %v1892 = vpop.f32.mrf.mxu0
      %v1893 = vadd.f32 0.0, %v1892
      %v1894 = vpop.f32.mrf.mxu0
      %v1895 = vpop.f32.mrf.mxu0
      %v1896 = vadd.f32 0.0, %v1895
      %v1897 = vpop.f32.mrf.mxu0
      %1898 = vmatprep.mubr.bf16.mxu0 0
      %1899 = vmatmul.mubr.bf16.gmra.mxu0 %v1708
      %v1900 = vpop.f32.mrf.mxu0
      %v1901 = vadd.f32 0.0, %v1900
      %v1902 = vpop.f32.mrf.mxu0
      %v1903 = vpop.f32.mrf.mxu0
      %v1904 = vadd.f32 0.0, %v1903
      %v1905 = vpop.f32.mrf.mxu0
      %1906 = vmatprep.mubr.bf16.mxu0 0
      %1907 = vmatmul.mubr.bf16.gmra.mxu0 %v1709
      %v1908 = vpop.f32.mrf.mxu0
      %v1909 = vadd.f32 0.0, %v1908
      %v1910 = vpop.f32.mrf.mxu0
      %v1911 = vpop.f32.mrf.mxu0
      %v1912 = vadd.f32 0.0, %v1911
      %v1913 = vpop.f32.mrf.mxu0
      %1914 = vmatprep.mubr.bf16.mxu0 0
      %1915 = vmatmul.mubr.bf16.gmra.mxu0 %v1710
      %v1916 = vpop.f32.mrf.mxu0
      %v1917 = vadd.f32 0.0, %v1916
      %v1918 = vpop.f32.mrf.mxu0
      %v1919 = vpop.f32.mrf.mxu0
      %v1920 = vadd.f32 0.0, %v1919
      %v1921 = vpop.f32.mrf.mxu0
      %1922 = vmatprep.mubr.bf16.mxu0 0
      %1923 = vmatmul.mubr.bf16.gmra.mxu0 %v1711
      %v1924 = vpop.f32.mrf.mxu0
      %v1925 = vadd.f32 0.0, %v1924
      %v1926 = vpop.f32.mrf.mxu0
      %v1927 = vpop.f32.mrf.mxu0
      %v1928 = vadd.f32 0.0, %v1927
      %v1929 = vpop.f32.mrf.mxu0
      %1930 = vmatprep.mubr.bf16.mxu0 0
      %1931 = vmatmul.mubr.bf16.gmra.mxu0 %v1712
      %v1932 = vpop.f32.mrf.mxu0
      %v1933 = vadd.f32 0.0, %v1932
      %v1934 = vpop.f32.mrf.mxu0
      %v1935 = vpop.f32.mrf.mxu0
      %v1936 = vadd.f32 0.0, %v1935
      %v1937 = vpop.f32.mrf.mxu0
      %1938 = vdwg.mxu0
      %v1939 = vadd.f32 %v1633, %v1813
      %v1940 = vadd.f32 %v1634, %v1816
      %v1941 = vadd.f32 %v1635, %v1821
      %v1942 = vadd.f32 %v1636, %v1824
      %v1943 = vadd.f32 %v1637, %v1829
      %v1944 = vadd.f32 %v1638, %v1832
      %v1945 = vadd.f32 %v1639, %v1837
      %v1946 = vadd.f32 %v1640, %v1840
      %v1947 = vadd.f32 %v1641, %v1845
      %v1948 = vadd.f32 %v1642, %v1848
      %v1949 = vadd.f32 %v1643, %v1853
      %v1950 = vadd.f32 %v1644, %v1856
      %v1951 = vadd.f32 %v1645, %v1861
      %v1952 = vadd.f32 %v1646, %v1864
      %v1953 = vadd.f32 %v1647, %v1869
      %v1954 = vadd.f32 %v1648, %v1872
      %v1955 = vadd.f32 %v1649, %v1877
      %v1956 = vadd.f32 %v1650, %v1880
      %v1957 = vadd.f32 %v1651, %v1885
      %v1958 = vadd.f32 %v1652, %v1888
      %v1959 = vadd.f32 %v1653, %v1893
      %v1960 = vadd.f32 %v1654, %v1896
      %v1961 = vadd.f32 %v1655, %v1901
      %v1962 = vadd.f32 %v1656, %v1904
      %v1963 = vadd.f32 %v1657, %v1909
      %v1964 = vadd.f32 %v1658, %v1912
      %v1965 = vadd.f32 %v1659, %v1917
      %v1966 = vadd.f32 %v1660, %v1920
      %v1967 = vadd.f32 %v1661, %v1925
      %v1968 = vadd.f32 %v1662, %v1928
      %v1969 = vadd.f32 %v1663, %v1933
      %v1970 = vadd.f32 %v1664, %v1936
      %s1971 = scalar_lea.vmem %s192, 48
      %v1972 = vld [vmem:[%s1971] sm:$0xff]
      %v1973 = vld [vmem:[%s1971 + $0x8] sm:$0xff]
      %v1974 = vld [vmem:[%s1971 + $0x18] sm:$0xff]
      %v1975 = vld [vmem:[%s1971 + $0x20] sm:$0xff]
      %v1976 = vld [vmem:[%s1971 + $0x30] sm:$0xff]
      %v1977 = vld [vmem:[%s1971 + $0x38] sm:$0xff]
      %v1978 = vld [vmem:[%s1971 + $0x48] sm:$0xff]
      %v1979 = vld [vmem:[%s1971 + $0x50] sm:$0xff]
      %v1980 = vld [vmem:[%s1971 + $0x60] sm:$0xff]
      %v1981 = vld [vmem:[%s1971 + $0x68] sm:$0xff]
      %v1982 = vld [vmem:[%s1971 + $0x78] sm:$0xff]
      %v1983 = vld [vmem:[%s1971 + $0x80] sm:$0xff]
      %v1984 = vld [vmem:[%s1971 + $0x90] sm:$0xff]
      %v1985 = vld [vmem:[%s1971 + $0x98] sm:$0xff]
      %v1986 = vld [vmem:[%s1971 + $0xa8] sm:$0xff]
      %v1987 = vld [vmem:[%s1971 + $0xb0] sm:$0xff]
      %v1988 = vld [vmem:[%s1971 + $0xc0] sm:$0xff]
      %v1989 = vld [vmem:[%s1971 + $0xc8] sm:$0xff]
      %v1990 = vld [vmem:[%s1971 + $0xd8] sm:$0xff]
      %v1991 = vld [vmem:[%s1971 + $0xe0] sm:$0xff]
      %v1992 = vld [vmem:[%s1971 + $0xf0] sm:$0xff]
      %v1993 = vld [vmem:[%s1971 + $0xf8] sm:$0xff]
      %v1994 = vld [vmem:[%s1971 + $0x108] sm:$0xff]
      %v1995 = vld [vmem:[%s1971 + $0x110] sm:$0xff]
      %v1996 = vld [vmem:[%s1971 + $0x120] sm:$0xff]
      %v1997 = vld [vmem:[%s1971 + $0x128] sm:$0xff]
      %v1998 = vld [vmem:[%s1971 + $0x138] sm:$0xff]
      %v1999 = vld [vmem:[%s1971 + $0x140] sm:$0xff]
      %v2000 = vld [vmem:[%s1971 + $0x150] sm:$0xff]
      %v2001 = vld [vmem:[%s1971 + $0x158] sm:$0xff]
      %v2002 = vld [vmem:[%s1971 + $0x168] sm:$0xff]
      %v2003 = vld [vmem:[%s1971 + $0x170] sm:$0xff]
      %v2004 = vpack.c.bf16 %v1973, %v1972
      %v2005 = vpack.c.bf16 %v1975, %v1974
      %v2006 = vpack.c.bf16 %v1977, %v1976
      %v2007 = vpack.c.bf16 %v1979, %v1978
      %v2008 = vpack.c.bf16 %v1981, %v1980
      %v2009 = vpack.c.bf16 %v1983, %v1982
      %v2010 = vpack.c.bf16 %v1985, %v1984
      %v2011 = vpack.c.bf16 %v1987, %v1986
      %v2012 = vpack.c.bf16 %v1989, %v1988
      %v2013 = vpack.c.bf16 %v1991, %v1990
      %v2014 = vpack.c.bf16 %v1993, %v1992
      %v2015 = vpack.c.bf16 %v1995, %v1994
      %v2016 = vpack.c.bf16 %v1997, %v1996
      %v2017 = vpack.c.bf16 %v1999, %v1998
      %v2018 = vpack.c.bf16 %v2001, %v2000
      %v2019 = vpack.c.bf16 %v2003, %v2002
      %s2020 = scalar_lea.vmem %s1, 384
      %v2021 = vld [vmem:[%s2020] sm:$0xf]
      %v2022 = vld [vmem:[%s2020 + $0x4] sm:$0xf]
      %v2023 = vld [vmem:[%s2020 + $0x8] sm:$0xf]
      %v2024 = vld [vmem:[%s2020 + $0xc] sm:$0xf]
      %v2025 = vld [vmem:[%s2020 + $0x10] sm:$0xf]
      %v2026 = vld [vmem:[%s2020 + $0x14] sm:$0xf]
      %v2027 = vld [vmem:[%s2020 + $0x18] sm:$0xf]
      %v2028 = vld [vmem:[%s2020 + $0x1c] sm:$0xf]
      %v2029 = vld [vmem:[%s2020 + $0x20] sm:$0xf]
      %v2030 = vld [vmem:[%s2020 + $0x24] sm:$0xf]
      %v2031 = vld [vmem:[%s2020 + $0x28] sm:$0xf]
      %v2032 = vld [vmem:[%s2020 + $0x2c] sm:$0xf]
      %v2033 = vld [vmem:[%s2020 + $0x30] sm:$0xf]
      %v2034 = vld [vmem:[%s2020 + $0x34] sm:$0xf]
      %v2035 = vld [vmem:[%s2020 + $0x38] sm:$0xf]
      %v2036 = vld [vmem:[%s2020 + $0x3c] sm:$0xf]
      %v2053 = vunpack.c.l.b16 %v2021
      %v2054 = vunpack.c.l.b16 %v2022
      %v2055 = vunpack.c.l.b16 %v2023
      %v2056 = vunpack.c.l.b16 %v2024
      %v2057 = vunpack.c.l.b16 %v2025
      %v2058 = vunpack.c.l.b16 %v2026
      %v2059 = vunpack.c.l.b16 %v2027
      %v2060 = vunpack.c.l.b16 %v2028
      %v2061 = vunpack.c.l.b16 %v2029
      %v2062 = vunpack.c.l.b16 %v2030
      %v2063 = vunpack.c.l.b16 %v2031
      %v2064 = vunpack.c.l.b16 %v2032
      %v2065 = vunpack.c.l.b16 %v2033
      %v2066 = vunpack.c.l.b16 %v2034
      %v2067 = vunpack.c.l.b16 %v2035
      %v2068 = vunpack.c.l.b16 %v2036
      %v2069 = vpack.c.b16 %v2054, %v2053
      %v2070 = vpack.c.b16 %v2056, %v2055
      %v2071 = vpack.c.b16 %v2058, %v2057
      %v2072 = vpack.c.b16 %v2060, %v2059
      %v2073 = vpack.c.b16 %v2062, %v2061
      %v2074 = vpack.c.b16 %v2064, %v2063
      %v2075 = vpack.c.b16 %v2066, %v2065
      %v2076 = vpack.c.b16 %v2068, %v2067
      %2085 = vmatprep.subr.bf16.mxu0 0
      %2086 = vmatpush1.bf16.msra.mxu0 %v2076
      %2087 = vmatprep.subr.bf16.mxu0 0
      %2088 = vmatpush1.bf16.msra.mxu0 %v2075
      %2089 = vmatprep.subr.bf16.mxu0 0
      %2090 = vmatpush1.bf16.msra.mxu0 %v2074
      %2091 = vmatprep.subr.bf16.mxu0 0
      %2092 = vmatpush1.bf16.msra.mxu0 %v2073
      %2093 = vmatprep.subr.bf16.mxu0 0
      %2094 = vmatpush1.bf16.msra.mxu0 %v2072
      %2095 = vmatprep.subr.bf16.mxu0 0
      %2096 = vmatpush1.bf16.msra.mxu0 %v2071
      %2097 = vmatprep.subr.bf16.mxu0 0
      %2098 = vmatpush1.bf16.msra.mxu0 %v2070
      %2099 = vmatprep.subr.bf16.mxu0 0
      %2100 = vmatpush1.bf16.msra.mxu0 %v2069
      %2101 = vmatprep.subr.bf16.mxu0 0
      %2102 = vmatpush2.bf16.msra.mxu0 0
      %2103 = vmatprep.subr.bf16.mxu0 0
      %2104 = vmatpush2.bf16.msra.mxu0 0
      %2105 = vmatprep.subr.bf16.mxu0 0
      %2106 = vmatpush2.bf16.msra.mxu0 0
      %2107 = vmatprep.subr.bf16.mxu0 0
      %2108 = vmatpush2.bf16.msra.mxu0 0
      %2109 = vmatprep.subr.bf16.mxu0 0
      %2110 = vmatpush2.bf16.msra.mxu0 0
      %2111 = vmatprep.subr.bf16.mxu0 0
      %2112 = vmatpush2.bf16.msra.mxu0 0
      %2113 = vmatprep.subr.bf16.mxu0 0
      %2114 = vmatpush2.bf16.msra.mxu0 0
      %2115 = vmatprep.subr.bf16.mxu0 0
      %2116 = vmatpush2.bf16.msra.mxu0 0
      %2117 = vmatprep.mubr.bf16.mxu0 0
      %2118 = vmatmul.mubr.bf16.gmra.mxu0 %v2004
      %v2119 = vpop.f32.mrf.mxu0
      %v2120 = vadd.f32 0.0, %v2119
      %v2121 = vpop.f32.mrf.mxu0
      %v2122 = vpop.f32.mrf.mxu0
      %v2123 = vadd.f32 0.0, %v2122
      %v2124 = vpop.f32.mrf.mxu0
      %2125 = vmatprep.mubr.bf16.mxu0 0
      %2126 = vmatmul.mubr.bf16.gmra.mxu0 %v2005
      %v2127 = vpop.f32.mrf.mxu0
      %v2128 = vadd.f32 0.0, %v2127
      %v2129 = vpop.f32.mrf.mxu0
      %v2130 = vpop.f32.mrf.mxu0
      %v2131 = vadd.f32 0.0, %v2130
      %v2132 = vpop.f32.mrf.mxu0
      %2133 = vmatprep.mubr.bf16.mxu0 0
      %2134 = vmatmul.mubr.bf16.gmra.mxu0 %v2006
      %v2135 = vpop.f32.mrf.mxu0
      %v2136 = vadd.f32 0.0, %v2135
      %v2137 = vpop.f32.mrf.mxu0
      %v2138 = vpop.f32.mrf.mxu0
      %v2139 = vadd.f32 0.0, %v2138
      %v2140 = vpop.f32.mrf.mxu0
      %2141 = vmatprep.mubr.bf16.mxu0 0
      %2142 = vmatmul.mubr.bf16.gmra.mxu0 %v2007
      %v2143 = vpop.f32.mrf.mxu0
      %v2144 = vadd.f32 0.0, %v2143
      %v2145 = vpop.f32.mrf.mxu0
      %v2146 = vpop.f32.mrf.mxu0
      %v2147 = vadd.f32 0.0, %v2146
      %v2148 = vpop.f32.mrf.mxu0
      %2149 = vmatprep.mubr.bf16.mxu0 0
      %2150 = vmatmul.mubr.bf16.gmra.mxu0 %v2008
      %v2151 = vpop.f32.mrf.mxu0
      %v2152 = vadd.f32 0.0, %v2151
      %v2153 = vpop.f32.mrf.mxu0
      %v2154 = vpop.f32.mrf.mxu0
      %v2155 = vadd.f32 0.0, %v2154
      %v2156 = vpop.f32.mrf.mxu0
      %2157 = vmatprep.mubr.bf16.mxu0 0
      %2158 = vmatmul.mubr.bf16.gmra.mxu0 %v2009
      %v2159 = vpop.f32.mrf.mxu0
      %v2160 = vadd.f32 0.0, %v2159
      %v2161 = vpop.f32.mrf.mxu0
      %v2162 = vpop.f32.mrf.mxu0
      %v2163 = vadd.f32 0.0, %v2162
      %v2164 = vpop.f32.mrf.mxu0
      %2165 = vmatprep.mubr.bf16.mxu0 0
      %2166 = vmatmul.mubr.bf16.gmra.mxu0 %v2010
      %v2167 = vpop.f32.mrf.mxu0
      %v2168 = vadd.f32 0.0, %v2167
      %v2169 = vpop.f32.mrf.mxu0
      %v2170 = vpop.f32.mrf.mxu0
      %v2171 = vadd.f32 0.0, %v2170
      %v2172 = vpop.f32.mrf.mxu0
      %2173 = vmatprep.mubr.bf16.mxu0 0
      %2174 = vmatmul.mubr.bf16.gmra.mxu0 %v2011
      %v2175 = vpop.f32.mrf.mxu0
      %v2176 = vadd.f32 0.0, %v2175
      %v2177 = vpop.f32.mrf.mxu0
      %v2178 = vpop.f32.mrf.mxu0
      %v2179 = vadd.f32 0.0, %v2178
      %v2180 = vpop.f32.mrf.mxu0
      %2181 = vmatprep.mubr.bf16.mxu0 0
      %2182 = vmatmul.mubr.bf16.gmra.mxu0 %v2012
      %v2183 = vpop.f32.mrf.mxu0
      %v2184 = vadd.f32 0.0, %v2183
      %v2185 = vpop.f32.mrf.mxu0
      %v2186 = vpop.f32.mrf.mxu0
      %v2187 = vadd.f32 0.0, %v2186
      %v2188 = vpop.f32.mrf.mxu0
      %2189 = vmatprep.mubr.bf16.mxu0 0
      %2190 = vmatmul.mubr.bf16.gmra.mxu0 %v2013
      %v2191 = vpop.f32.mrf.mxu0
      %v2192 = vadd.f32 0.0, %v2191
      %v2193 = vpop.f32.mrf.mxu0
      %v2194 = vpop.f32.mrf.mxu0
      %v2195 = vadd.f32 0.0, %v2194
      %v2196 = vpop.f32.mrf.mxu0
      %2197 = vmatprep.mubr.bf16.mxu0 0
      %2198 = vmatmul.mubr.bf16.gmra.mxu0 %v2014
      %v2199 = vpop.f32.mrf.mxu0
      %v2200 = vadd.f32 0.0, %v2199
      %v2201 = vpop.f32.mrf.mxu0
      %v2202 = vpop.f32.mrf.mxu0
      %v2203 = vadd.f32 0.0, %v2202
      %v2204 = vpop.f32.mrf.mxu0
      %2205 = vmatprep.mubr.bf16.mxu0 0
      %2206 = vmatmul.mubr.bf16.gmra.mxu0 %v2015
      %v2207 = vpop.f32.mrf.mxu0
      %v2208 = vadd.f32 0.0, %v2207
      %v2209 = vpop.f32.mrf.mxu0
      %v2210 = vpop.f32.mrf.mxu0
      %v2211 = vadd.f32 0.0, %v2210
      %v2212 = vpop.f32.mrf.mxu0
      %2213 = vmatprep.mubr.bf16.mxu0 0
      %2214 = vmatmul.mubr.bf16.gmra.mxu0 %v2016
      %v2215 = vpop.f32.mrf.mxu0
      %v2216 = vadd.f32 0.0, %v2215
      %v2217 = vpop.f32.mrf.mxu0
      %v2218 = vpop.f32.mrf.mxu0
      %v2219 = vadd.f32 0.0, %v2218
      %v2220 = vpop.f32.mrf.mxu0
      %2221 = vmatprep.mubr.bf16.mxu0 0
      %2222 = vmatmul.mubr.bf16.gmra.mxu0 %v2017
      %v2223 = vpop.f32.mrf.mxu0
      %v2224 = vadd.f32 0.0, %v2223
      %v2225 = vpop.f32.mrf.mxu0
      %v2226 = vpop.f32.mrf.mxu0
      %v2227 = vadd.f32 0.0, %v2226
      %v2228 = vpop.f32.mrf.mxu0
      %2229 = vmatprep.mubr.bf16.mxu0 0
      %2230 = vmatmul.mubr.bf16.gmra.mxu0 %v2018
      %v2231 = vpop.f32.mrf.mxu0
      %v2232 = vadd.f32 0.0, %v2231
      %v2233 = vpop.f32.mrf.mxu0
      %v2234 = vpop.f32.mrf.mxu0
      %v2235 = vadd.f32 0.0, %v2234
      %v2236 = vpop.f32.mrf.mxu0
      %2237 = vmatprep.mubr.bf16.mxu0 0
      %2238 = vmatmul.mubr.bf16.gmra.mxu0 %v2019
      %v2239 = vpop.f32.mrf.mxu0
      %v2240 = vadd.f32 0.0, %v2239
      %v2241 = vpop.f32.mrf.mxu0
      %v2242 = vpop.f32.mrf.mxu0
      %v2243 = vadd.f32 0.0, %v2242
      %v2244 = vpop.f32.mrf.mxu0
      %2245 = vdwg.mxu0
      %v2246 = vadd.f32 %v1939, %v2120
      %v2247 = vadd.f32 %v1940, %v2123
      %v2248 = vadd.f32 %v1941, %v2128
      %v2249 = vadd.f32 %v1942, %v2131
      %v2250 = vadd.f32 %v1943, %v2136
      %v2251 = vadd.f32 %v1944, %v2139
      %v2252 = vadd.f32 %v1945, %v2144
      %v2253 = vadd.f32 %v1946, %v2147
      %v2254 = vadd.f32 %v1947, %v2152
      %v2255 = vadd.f32 %v1948, %v2155
      %v2256 = vadd.f32 %v1949, %v2160
      %v2257 = vadd.f32 %v1950, %v2163
      %v2258 = vadd.f32 %v1951, %v2168
      %v2259 = vadd.f32 %v1952, %v2171
      %v2260 = vadd.f32 %v1953, %v2176
      %v2261 = vadd.f32 %v1954, %v2179
      %v2262 = vadd.f32 %v1955, %v2184
      %v2263 = vadd.f32 %v1956, %v2187
      %v2264 = vadd.f32 %v1957, %v2192
      %v2265 = vadd.f32 %v1958, %v2195
      %v2266 = vadd.f32 %v1959, %v2200
      %v2267 = vadd.f32 %v1960, %v2203
      %v2268 = vadd.f32 %v1961, %v2208
      %v2269 = vadd.f32 %v1962, %v2211
      %v2270 = vadd.f32 %v1963, %v2216
      %v2271 = vadd.f32 %v1964, %v2219
      %v2272 = vadd.f32 %v1965, %v2224
      %v2273 = vadd.f32 %v1966, %v2227
      %v2274 = vadd.f32 %v1967, %v2232
      %v2275 = vadd.f32 %v1968, %v2235
      %v2276 = vadd.f32 %v1969, %v2240
      %v2277 = vadd.f32 %v1970, %v2243
      %v2278 = vld [vmem:[%s1971 + $0x1] sm:$0xff]
      %v2279 = vld [vmem:[%s1971 + $0x9] sm:$0xff]
      %v2280 = vld [vmem:[%s1971 + $0x19] sm:$0xff]
      %v2281 = vld [vmem:[%s1971 + $0x21] sm:$0xff]
      %v2282 = vld [vmem:[%s1971 + $0x31] sm:$0xff]
      %v2283 = vld [vmem:[%s1971 + $0x39] sm:$0xff]
      %v2284 = vld [vmem:[%s1971 + $0x49] sm:$0xff]
      %v2285 = vld [vmem:[%s1971 + $0x51] sm:$0xff]
      %v2286 = vld [vmem:[%s1971 + $0x61] sm:$0xff]
      %v2287 = vld [vmem:[%s1971 + $0x69] sm:$0xff]
      %v2288 = vld [vmem:[%s1971 + $0x79] sm:$0xff]
      %v2289 = vld [vmem:[%s1971 + $0x81] sm:$0xff]
      %v2290 = vld [vmem:[%s1971 + $0x91] sm:$0xff]
      %v2291 = vld [vmem:[%s1971 + $0x99] sm:$0xff]
      %v2292 = vld [vmem:[%s1971 + $0xa9] sm:$0xff]
      %v2293 = vld [vmem:[%s1971 + $0xb1] sm:$0xff]
      %v2294 = vld [vmem:[%s1971 + $0xc1] sm:$0xff]
      %v2295 = vld [vmem:[%s1971 + $0xc9] sm:$0xff]
      %v2296 = vld [vmem:[%s1971 + $0xd9] sm:$0xff]
      %v2297 = vld [vmem:[%s1971 + $0xe1] sm:$0xff]
      %v2298 = vld [vmem:[%s1971 + $0xf1] sm:$0xff]
      %v2299 = vld [vmem:[%s1971 + $0xf9] sm:$0xff]
      %v2300 = vld [vmem:[%s1971 + $0x109] sm:$0xff]
      %v2301 = vld [vmem:[%s1971 + $0x111] sm:$0xff]
      %v2302 = vld [vmem:[%s1971 + $0x121] sm:$0xff]
      %v2303 = vld [vmem:[%s1971 + $0x129] sm:$0xff]
      %v2304 = vld [vmem:[%s1971 + $0x139] sm:$0xff]
      %v2305 = vld [vmem:[%s1971 + $0x141] sm:$0xff]
      %v2306 = vld [vmem:[%s1971 + $0x151] sm:$0xff]
      %v2307 = vld [vmem:[%s1971 + $0x159] sm:$0xff]
      %v2308 = vld [vmem:[%s1971 + $0x169] sm:$0xff]
      %v2309 = vld [vmem:[%s1971 + $0x171] sm:$0xff]
      %v2310 = vpack.c.bf16 %v2279, %v2278
      %v2311 = vpack.c.bf16 %v2281, %v2280
      %v2312 = vpack.c.bf16 %v2283, %v2282
      %v2313 = vpack.c.bf16 %v2285, %v2284
      %v2314 = vpack.c.bf16 %v2287, %v2286
      %v2315 = vpack.c.bf16 %v2289, %v2288
      %v2316 = vpack.c.bf16 %v2291, %v2290
      %v2317 = vpack.c.bf16 %v2293, %v2292
      %v2318 = vpack.c.bf16 %v2295, %v2294
      %v2319 = vpack.c.bf16 %v2297, %v2296
      %v2320 = vpack.c.bf16 %v2299, %v2298
      %v2321 = vpack.c.bf16 %v2301, %v2300
      %v2322 = vpack.c.bf16 %v2303, %v2302
      %v2323 = vpack.c.bf16 %v2305, %v2304
      %v2324 = vpack.c.bf16 %v2307, %v2306
      %v2325 = vpack.c.bf16 %v2309, %v2308
      %s2326 = scalar_lea.vmem %s1, 448
      %v2327 = vld [vmem:[%s2326] sm:$0xf]
      %v2328 = vld [vmem:[%s2326 + $0x4] sm:$0xf]
      %v2329 = vld [vmem:[%s2326 + $0x8] sm:$0xf]
      %v2330 = vld [vmem:[%s2326 + $0xc] sm:$0xf]
      %v2331 = vld [vmem:[%s2326 + $0x10] sm:$0xf]
      %v2332 = vld [vmem:[%s2326 + $0x14] sm:$0xf]
      %v2333 = vld [vmem:[%s2326 + $0x18] sm:$0xf]
      %v2334 = vld [vmem:[%s2326 + $0x1c] sm:$0xf]
      %v2335 = vld [vmem:[%s2326 + $0x20] sm:$0xf]
      %v2336 = vld [vmem:[%s2326 + $0x24] sm:$0xf]
      %v2337 = vld [vmem:[%s2326 + $0x28] sm:$0xf]
      %v2338 = vld [vmem:[%s2326 + $0x2c] sm:$0xf]
      %v2339 = vld [vmem:[%s2326 + $0x30] sm:$0xf]
      %v2340 = vld [vmem:[%s2326 + $0x34] sm:$0xf]
      %v2341 = vld [vmem:[%s2326 + $0x38] sm:$0xf]
      %v2342 = vld [vmem:[%s2326 + $0x3c] sm:$0xf]
      %v2359 = vunpack.c.l.b16 %v2327
      %v2360 = vunpack.c.l.b16 %v2328
      %v2361 = vunpack.c.l.b16 %v2329
      %v2362 = vunpack.c.l.b16 %v2330
      %v2363 = vunpack.c.l.b16 %v2331
      %v2364 = vunpack.c.l.b16 %v2332
      %v2365 = vunpack.c.l.b16 %v2333
      %v2366 = vunpack.c.l.b16 %v2334
      %v2367 = vunpack.c.l.b16 %v2335
      %v2368 = vunpack.c.l.b16 %v2336
      %v2369 = vunpack.c.l.b16 %v2337
      %v2370 = vunpack.c.l.b16 %v2338
      %v2371 = vunpack.c.l.b16 %v2339
      %v2372 = vunpack.c.l.b16 %v2340
      %v2373 = vunpack.c.l.b16 %v2341
      %v2374 = vunpack.c.l.b16 %v2342
      %v2375 = vpack.c.b16 %v2360, %v2359
      %v2376 = vpack.c.b16 %v2362, %v2361
      %v2377 = vpack.c.b16 %v2364, %v2363
      %v2378 = vpack.c.b16 %v2366, %v2365
      %v2379 = vpack.c.b16 %v2368, %v2367
      %v2380 = vpack.c.b16 %v2370, %v2369
      %v2381 = vpack.c.b16 %v2372, %v2371
      %v2382 = vpack.c.b16 %v2374, %v2373
      %2391 = vmatprep.subr.bf16.mxu0 0
      %2392 = vmatpush1.bf16.msra.mxu0 %v2382
      %2393 = vmatprep.subr.bf16.mxu0 0
      %2394 = vmatpush1.bf16.msra.mxu0 %v2381
      %2395 = vmatprep.subr.bf16.mxu0 0
      %2396 = vmatpush1.bf16.msra.mxu0 %v2380
      %2397 = vmatprep.subr.bf16.mxu0 0
      %2398 = vmatpush1.bf16.msra.mxu0 %v2379
      %2399 = vmatprep.subr.bf16.mxu0 0
      %2400 = vmatpush1.bf16.msra.mxu0 %v2378
      %2401 = vmatprep.subr.bf16.mxu0 0
      %2402 = vmatpush1.bf16.msra.mxu0 %v2377
      %2403 = vmatprep.subr.bf16.mxu0 0
      %2404 = vmatpush1.bf16.msra.mxu0 %v2376
      %2405 = vmatprep.subr.bf16.mxu0 0
      %2406 = vmatpush1.bf16.msra.mxu0 %v2375
      %2407 = vmatprep.subr.bf16.mxu0 0
      %2408 = vmatpush2.bf16.msra.mxu0 0
      %2409 = vmatprep.subr.bf16.mxu0 0
      %2410 = vmatpush2.bf16.msra.mxu0 0
      %2411 = vmatprep.subr.bf16.mxu0 0
      %2412 = vmatpush2.bf16.msra.mxu0 0
      %2413 = vmatprep.subr.bf16.mxu0 0
      %2414 = vmatpush2.bf16.msra.mxu0 0
      %2415 = vmatprep.subr.bf16.mxu0 0
      %2416 = vmatpush2.bf16.msra.mxu0 0
      %2417 = vmatprep.subr.bf16.mxu0 0
      %2418 = vmatpush2.bf16.msra.mxu0 0
      %2419 = vmatprep.subr.bf16.mxu0 0
      %2420 = vmatpush2.bf16.msra.mxu0 0
      %2421 = vmatprep.subr.bf16.mxu0 0
      %2422 = vmatpush2.bf16.msra.mxu0 0
      %2423 = vmatprep.mubr.bf16.mxu0 0
      %2424 = vmatmul.mubr.bf16.gmra.mxu0 %v2310
      %v2425 = vpop.f32.mrf.mxu0
      %v2426 = vadd.f32 0.0, %v2425
      %v2427 = vpop.f32.mrf.mxu0
      %v2428 = vpop.f32.mrf.mxu0
      %v2429 = vadd.f32 0.0, %v2428
      %v2430 = vpop.f32.mrf.mxu0
      %2431 = vmatprep.mubr.bf16.mxu0 0
      %2432 = vmatmul.mubr.bf16.gmra.mxu0 %v2311
      %v2433 = vpop.f32.mrf.mxu0
      %v2434 = vadd.f32 0.0, %v2433
      %v2435 = vpop.f32.mrf.mxu0
      %v2436 = vpop.f32.mrf.mxu0
      %v2437 = vadd.f32 0.0, %v2436
      %v2438 = vpop.f32.mrf.mxu0
      %2439 = vmatprep.mubr.bf16.mxu0 0
      %2440 = vmatmul.mubr.bf16.gmra.mxu0 %v2312
      %v2441 = vpop.f32.mrf.mxu0
      %v2442 = vadd.f32 0.0, %v2441
      %v2443 = vpop.f32.mrf.mxu0
      %v2444 = vpop.f32.mrf.mxu0
      %v2445 = vadd.f32 0.0, %v2444
      %v2446 = vpop.f32.mrf.mxu0
      %2447 = vmatprep.mubr.bf16.mxu0 0
      %2448 = vmatmul.mubr.bf16.gmra.mxu0 %v2313
      %v2449 = vpop.f32.mrf.mxu0
      %v2450 = vadd.f32 0.0, %v2449
      %v2451 = vpop.f32.mrf.mxu0
      %v2452 = vpop.f32.mrf.mxu0
      %v2453 = vadd.f32 0.0, %v2452
      %v2454 = vpop.f32.mrf.mxu0
      %2455 = vmatprep.mubr.bf16.mxu0 0
      %2456 = vmatmul.mubr.bf16.gmra.mxu0 %v2314
      %v2457 = vpop.f32.mrf.mxu0
      %v2458 = vadd.f32 0.0, %v2457
      %v2459 = vpop.f32.mrf.mxu0
      %v2460 = vpop.f32.mrf.mxu0
      %v2461 = vadd.f32 0.0, %v2460
      %v2462 = vpop.f32.mrf.mxu0
      %2463 = vmatprep.mubr.bf16.mxu0 0
      %2464 = vmatmul.mubr.bf16.gmra.mxu0 %v2315
      %v2465 = vpop.f32.mrf.mxu0
      %v2466 = vadd.f32 0.0, %v2465
      %v2467 = vpop.f32.mrf.mxu0
      %v2468 = vpop.f32.mrf.mxu0
      %v2469 = vadd.f32 0.0, %v2468
      %v2470 = vpop.f32.mrf.mxu0
      %2471 = vmatprep.mubr.bf16.mxu0 0
      %2472 = vmatmul.mubr.bf16.gmra.mxu0 %v2316
      %v2473 = vpop.f32.mrf.mxu0
      %v2474 = vadd.f32 0.0, %v2473
      %v2475 = vpop.f32.mrf.mxu0
      %v2476 = vpop.f32.mrf.mxu0
      %v2477 = vadd.f32 0.0, %v2476
      %v2478 = vpop.f32.mrf.mxu0
      %2479 = vmatprep.mubr.bf16.mxu0 0
      %2480 = vmatmul.mubr.bf16.gmra.mxu0 %v2317
      %v2481 = vpop.f32.mrf.mxu0
      %v2482 = vadd.f32 0.0, %v2481
      %v2483 = vpop.f32.mrf.mxu0
      %v2484 = vpop.f32.mrf.mxu0
      %v2485 = vadd.f32 0.0, %v2484
      %v2486 = vpop.f32.mrf.mxu0
      %2487 = vmatprep.mubr.bf16.mxu0 0
      %2488 = vmatmul.mubr.bf16.gmra.mxu0 %v2318
      %v2489 = vpop.f32.mrf.mxu0
      %v2490 = vadd.f32 0.0, %v2489
      %v2491 = vpop.f32.mrf.mxu0
      %v2492 = vpop.f32.mrf.mxu0
      %v2493 = vadd.f32 0.0, %v2492
      %v2494 = vpop.f32.mrf.mxu0
      %2495 = vmatprep.mubr.bf16.mxu0 0
      %2496 = vmatmul.mubr.bf16.gmra.mxu0 %v2319
      %v2497 = vpop.f32.mrf.mxu0
      %v2498 = vadd.f32 0.0, %v2497
      %v2499 = vpop.f32.mrf.mxu0
      %v2500 = vpop.f32.mrf.mxu0
      %v2501 = vadd.f32 0.0, %v2500
      %v2502 = vpop.f32.mrf.mxu0
      %2503 = vmatprep.mubr.bf16.mxu0 0
      %2504 = vmatmul.mubr.bf16.gmra.mxu0 %v2320
      %v2505 = vpop.f32.mrf.mxu0
      %v2506 = vadd.f32 0.0, %v2505
      %v2507 = vpop.f32.mrf.mxu0
      %v2508 = vpop.f32.mrf.mxu0
      %v2509 = vadd.f32 0.0, %v2508
      %v2510 = vpop.f32.mrf.mxu0
      %2511 = vmatprep.mubr.bf16.mxu0 0
      %2512 = vmatmul.mubr.bf16.gmra.mxu0 %v2321
      %v2513 = vpop.f32.mrf.mxu0
      %v2514 = vadd.f32 0.0, %v2513
      %v2515 = vpop.f32.mrf.mxu0
      %v2516 = vpop.f32.mrf.mxu0
      %v2517 = vadd.f32 0.0, %v2516
      %v2518 = vpop.f32.mrf.mxu0
      %2519 = vmatprep.mubr.bf16.mxu0 0
      %2520 = vmatmul.mubr.bf16.gmra.mxu0 %v2322
      %v2521 = vpop.f32.mrf.mxu0
      %v2522 = vadd.f32 0.0, %v2521
      %v2523 = vpop.f32.mrf.mxu0
      %v2524 = vpop.f32.mrf.mxu0
      %v2525 = vadd.f32 0.0, %v2524
      %v2526 = vpop.f32.mrf.mxu0
      %2527 = vmatprep.mubr.bf16.mxu0 0
      %2528 = vmatmul.mubr.bf16.gmra.mxu0 %v2323
      %v2529 = vpop.f32.mrf.mxu0
      %v2530 = vadd.f32 0.0, %v2529
      %v2531 = vpop.f32.mrf.mxu0
      %v2532 = vpop.f32.mrf.mxu0
      %v2533 = vadd.f32 0.0, %v2532
      %v2534 = vpop.f32.mrf.mxu0
      %2535 = vmatprep.mubr.bf16.mxu0 0
      %2536 = vmatmul.mubr.bf16.gmra.mxu0 %v2324
      %v2537 = vpop.f32.mrf.mxu0
      %v2538 = vadd.f32 0.0, %v2537
      %v2539 = vpop.f32.mrf.mxu0
      %v2540 = vpop.f32.mrf.mxu0
      %v2541 = vadd.f32 0.0, %v2540
      %v2542 = vpop.f32.mrf.mxu0
      %2543 = vmatprep.mubr.bf16.mxu0 0
      %2544 = vmatmul.mubr.bf16.gmra.mxu0 %v2325
      %v2545 = vpop.f32.mrf.mxu0
      %v2546 = vadd.f32 0.0, %v2545
      %v2547 = vpop.f32.mrf.mxu0
      %v2548 = vpop.f32.mrf.mxu0
      %v2549 = vadd.f32 0.0, %v2548
      %v2550 = vpop.f32.mrf.mxu0
      %2551 = vdwg.mxu0
      %v2552 = vadd.f32 %v2246, %v2426
      %v2553 = vadd.f32 %v2247, %v2429
      %v2554 = vadd.f32 %v2248, %v2434
      %v2555 = vadd.f32 %v2249, %v2437
      %v2556 = vadd.f32 %v2250, %v2442
      %v2557 = vadd.f32 %v2251, %v2445
      %v2558 = vadd.f32 %v2252, %v2450
      %v2559 = vadd.f32 %v2253, %v2453
      %v2560 = vadd.f32 %v2254, %v2458
      %v2561 = vadd.f32 %v2255, %v2461
      %v2562 = vadd.f32 %v2256, %v2466
      %v2563 = vadd.f32 %v2257, %v2469
      %v2564 = vadd.f32 %v2258, %v2474
      %v2565 = vadd.f32 %v2259, %v2477
      %v2566 = vadd.f32 %v2260, %v2482
      %v2567 = vadd.f32 %v2261, %v2485
      %v2568 = vadd.f32 %v2262, %v2490
      %v2569 = vadd.f32 %v2263, %v2493
      %v2570 = vadd.f32 %v2264, %v2498
      %v2571 = vadd.f32 %v2265, %v2501
      %v2572 = vadd.f32 %v2266, %v2506
      %v2573 = vadd.f32 %v2267, %v2509
      %v2574 = vadd.f32 %v2268, %v2514
      %v2575 = vadd.f32 %v2269, %v2517
      %v2576 = vadd.f32 %v2270, %v2522
      %v2577 = vadd.f32 %v2271, %v2525
      %v2578 = vadd.f32 %v2272, %v2530
      %v2579 = vadd.f32 %v2273, %v2533
      %v2580 = vadd.f32 %v2274, %v2538
      %v2581 = vadd.f32 %v2275, %v2541
      %v2582 = vadd.f32 %v2276, %v2546
      %v2583 = vadd.f32 %v2277, %v2549
      %v2584 = vld [vmem:[%s1971 + $0x2] sm:$0xff]
      %v2585 = vld [vmem:[%s1971 + $0xa] sm:$0xff]
      %v2586 = vld [vmem:[%s1971 + $0x1a] sm:$0xff]
      %v2587 = vld [vmem:[%s1971 + $0x22] sm:$0xff]
      %v2588 = vld [vmem:[%s1971 + $0x32] sm:$0xff]
      %v2589 = vld [vmem:[%s1971 + $0x3a] sm:$0xff]
      %v2590 = vld [vmem:[%s1971 + $0x4a] sm:$0xff]
      %v2591 = vld [vmem:[%s1971 + $0x52] sm:$0xff]
      %v2592 = vld [vmem:[%s1971 + $0x62] sm:$0xff]
      %v2593 = vld [vmem:[%s1971 + $0x6a] sm:$0xff]
      %v2594 = vld [vmem:[%s1971 + $0x7a] sm:$0xff]
      %v2595 = vld [vmem:[%s1971 + $0x82] sm:$0xff]
      %v2596 = vld [vmem:[%s1971 + $0x92] sm:$0xff]
      %v2597 = vld [vmem:[%s1971 + $0x9a] sm:$0xff]
      %v2598 = vld [vmem:[%s1971 + $0xaa] sm:$0xff]
      %v2599 = vld [vmem:[%s1971 + $0xb2] sm:$0xff]
      %v2600 = vld [vmem:[%s1971 + $0xc2] sm:$0xff]
      %v2601 = vld [vmem:[%s1971 + $0xca] sm:$0xff]
      %v2602 = vld [vmem:[%s1971 + $0xda] sm:$0xff]
      %v2603 = vld [vmem:[%s1971 + $0xe2] sm:$0xff]
      %v2604 = vld [vmem:[%s1971 + $0xf2] sm:$0xff]
      %v2605 = vld [vmem:[%s1971 + $0xfa] sm:$0xff]
      %v2606 = vld [vmem:[%s1971 + $0x10a] sm:$0xff]
      %v2607 = vld [vmem:[%s1971 + $0x112] sm:$0xff]
      %v2608 = vld [vmem:[%s1971 + $0x122] sm:$0xff]
      %v2609 = vld [vmem:[%s1971 + $0x12a] sm:$0xff]
      %v2610 = vld [vmem:[%s1971 + $0x13a] sm:$0xff]
      %v2611 = vld [vmem:[%s1971 + $0x142] sm:$0xff]
      %v2612 = vld [vmem:[%s1971 + $0x152] sm:$0xff]
      %v2613 = vld [vmem:[%s1971 + $0x15a] sm:$0xff]
      %v2614 = vld [vmem:[%s1971 + $0x16a] sm:$0xff]
      %v2615 = vld [vmem:[%s1971 + $0x172] sm:$0xff]
      %v2616 = vpack.c.bf16 %v2585, %v2584
      %v2617 = vpack.c.bf16 %v2587, %v2586
      %v2618 = vpack.c.bf16 %v2589, %v2588
      %v2619 = vpack.c.bf16 %v2591, %v2590
      %v2620 = vpack.c.bf16 %v2593, %v2592
      %v2621 = vpack.c.bf16 %v2595, %v2594
      %v2622 = vpack.c.bf16 %v2597, %v2596
      %v2623 = vpack.c.bf16 %v2599, %v2598
      %v2624 = vpack.c.bf16 %v2601, %v2600
      %v2625 = vpack.c.bf16 %v2603, %v2602
      %v2626 = vpack.c.bf16 %v2605, %v2604
      %v2627 = vpack.c.bf16 %v2607, %v2606
      %v2628 = vpack.c.bf16 %v2609, %v2608
      %v2629 = vpack.c.bf16 %v2611, %v2610
      %v2630 = vpack.c.bf16 %v2613, %v2612
      %v2631 = vpack.c.bf16 %v2615, %v2614
      %s2632 = scalar_lea.vmem %s1, 512
      %v2633 = vld [vmem:[%s2632] sm:$0xf]
      %v2634 = vld [vmem:[%s2632 + $0x4] sm:$0xf]
      %v2635 = vld [vmem:[%s2632 + $0x8] sm:$0xf]
      %v2636 = vld [vmem:[%s2632 + $0xc] sm:$0xf]
      %v2637 = vld [vmem:[%s2632 + $0x10] sm:$0xf]
      %v2638 = vld [vmem:[%s2632 + $0x14] sm:$0xf]
      %v2639 = vld [vmem:[%s2632 + $0x18] sm:$0xf]
      %v2640 = vld [vmem:[%s2632 + $0x1c] sm:$0xf]
      %v2641 = vld [vmem:[%s2632 + $0x20] sm:$0xf]
      %v2642 = vld [vmem:[%s2632 + $0x24] sm:$0xf]
      %v2643 = vld [vmem:[%s2632 + $0x28] sm:$0xf]
      %v2644 = vld [vmem:[%s2632 + $0x2c] sm:$0xf]
      %v2645 = vld [vmem:[%s2632 + $0x30] sm:$0xf]
      %v2646 = vld [vmem:[%s2632 + $0x34] sm:$0xf]
      %v2647 = vld [vmem:[%s2632 + $0x38] sm:$0xf]
      %v2648 = vld [vmem:[%s2632 + $0x3c] sm:$0xf]
      %v2665 = vunpack.c.l.b16 %v2633
      %v2666 = vunpack.c.l.b16 %v2634
      %v2667 = vunpack.c.l.b16 %v2635
      %v2668 = vunpack.c.l.b16 %v2636
      %v2669 = vunpack.c.l.b16 %v2637
      %v2670 = vunpack.c.l.b16 %v2638
      %v2671 = vunpack.c.l.b16 %v2639
      %v2672 = vunpack.c.l.b16 %v2640
      %v2673 = vunpack.c.l.b16 %v2641
      %v2674 = vunpack.c.l.b16 %v2642
      %v2675 = vunpack.c.l.b16 %v2643
      %v2676 = vunpack.c.l.b16 %v2644
      %v2677 = vunpack.c.l.b16 %v2645
      %v2678 = vunpack.c.l.b16 %v2646
      %v2679 = vunpack.c.l.b16 %v2647
      %v2680 = vunpack.c.l.b16 %v2648
      %v2681 = vpack.c.b16 %v2666, %v2665
      %v2682 = vpack.c.b16 %v2668, %v2667
      %v2683 = vpack.c.b16 %v2670, %v2669
      %v2684 = vpack.c.b16 %v2672, %v2671
      %v2685 = vpack.c.b16 %v2674, %v2673
      %v2686 = vpack.c.b16 %v2676, %v2675
      %v2687 = vpack.c.b16 %v2678, %v2677
      %v2688 = vpack.c.b16 %v2680, %v2679
      %2697 = vmatprep.subr.bf16.mxu0 0
      %2698 = vmatpush1.bf16.msra.mxu0 %v2688
      %2699 = vmatprep.subr.bf16.mxu0 0
      %2700 = vmatpush1.bf16.msra.mxu0 %v2687
      %2701 = vmatprep.subr.bf16.mxu0 0
      %2702 = vmatpush1.bf16.msra.mxu0 %v2686
      %2703 = vmatprep.subr.bf16.mxu0 0
      %2704 = vmatpush1.bf16.msra.mxu0 %v2685
      %2705 = vmatprep.subr.bf16.mxu0 0
      %2706 = vmatpush1.bf16.msra.mxu0 %v2684
      %2707 = vmatprep.subr.bf16.mxu0 0
      %2708 = vmatpush1.bf16.msra.mxu0 %v2683
      %2709 = vmatprep.subr.bf16.mxu0 0
      %2710 = vmatpush1.bf16.msra.mxu0 %v2682
      %2711 = vmatprep.subr.bf16.mxu0 0
      %2712 = vmatpush1.bf16.msra.mxu0 %v2681
      %2713 = vmatprep.subr.bf16.mxu0 0
      %2714 = vmatpush2.bf16.msra.mxu0 0
      %2715 = vmatprep.subr.bf16.mxu0 0
      %2716 = vmatpush2.bf16.msra.mxu0 0
      %2717 = vmatprep.subr.bf16.mxu0 0
      %2718 = vmatpush2.bf16.msra.mxu0 0
      %2719 = vmatprep.subr.bf16.mxu0 0
      %2720 = vmatpush2.bf16.msra.mxu0 0
      %2721 = vmatprep.subr.bf16.mxu0 0
      %2722 = vmatpush2.bf16.msra.mxu0 0
      %2723 = vmatprep.subr.bf16.mxu0 0
      %2724 = vmatpush2.bf16.msra.mxu0 0
      %2725 = vmatprep.subr.bf16.mxu0 0
      %2726 = vmatpush2.bf16.msra.mxu0 0
      %2727 = vmatprep.subr.bf16.mxu0 0
      %2728 = vmatpush2.bf16.msra.mxu0 0
      %2729 = vmatprep.mubr.bf16.mxu0 0
      %2730 = vmatmul.mubr.bf16.gmra.mxu0 %v2616
      %v2731 = vpop.f32.mrf.mxu0
      %v2732 = vadd.f32 0.0, %v2731
      %v2733 = vpop.f32.mrf.mxu0
      %v2734 = vpop.f32.mrf.mxu0
      %v2735 = vadd.f32 0.0, %v2734
      %v2736 = vpop.f32.mrf.mxu0
      %2737 = vmatprep.mubr.bf16.mxu0 0
      %2738 = vmatmul.mubr.bf16.gmra.mxu0 %v2617
      %v2739 = vpop.f32.mrf.mxu0
      %v2740 = vadd.f32 0.0, %v2739
      %v2741 = vpop.f32.mrf.mxu0
      %v2742 = vpop.f32.mrf.mxu0
      %v2743 = vadd.f32 0.0, %v2742
      %v2744 = vpop.f32.mrf.mxu0
      %2745 = vmatprep.mubr.bf16.mxu0 0
      %2746 = vmatmul.mubr.bf16.gmra.mxu0 %v2618
      %v2747 = vpop.f32.mrf.mxu0
      %v2748 = vadd.f32 0.0, %v2747
      %v2749 = vpop.f32.mrf.mxu0
      %v2750 = vpop.f32.mrf.mxu0
      %v2751 = vadd.f32 0.0, %v2750
      %v2752 = vpop.f32.mrf.mxu0
      %2753 = vmatprep.mubr.bf16.mxu0 0
      %2754 = vmatmul.mubr.bf16.gmra.mxu0 %v2619
      %v2755 = vpop.f32.mrf.mxu0
      %v2756 = vadd.f32 0.0, %v2755
      %v2757 = vpop.f32.mrf.mxu0
      %v2758 = vpop.f32.mrf.mxu0
      %v2759 = vadd.f32 0.0, %v2758
      %v2760 = vpop.f32.mrf.mxu0
      %2761 = vmatprep.mubr.bf16.mxu0 0
      %2762 = vmatmul.mubr.bf16.gmra.mxu0 %v2620
      %v2763 = vpop.f32.mrf.mxu0
      %v2764 = vadd.f32 0.0, %v2763
      %v2765 = vpop.f32.mrf.mxu0
      %v2766 = vpop.f32.mrf.mxu0
      %v2767 = vadd.f32 0.0, %v2766
      %v2768 = vpop.f32.mrf.mxu0
      %2769 = vmatprep.mubr.bf16.mxu0 0
      %2770 = vmatmul.mubr.bf16.gmra.mxu0 %v2621
      %v2771 = vpop.f32.mrf.mxu0
      %v2772 = vadd.f32 0.0, %v2771
      %v2773 = vpop.f32.mrf.mxu0
      %v2774 = vpop.f32.mrf.mxu0
      %v2775 = vadd.f32 0.0, %v2774
      %v2776 = vpop.f32.mrf.mxu0
      %2777 = vmatprep.mubr.bf16.mxu0 0
      %2778 = vmatmul.mubr.bf16.gmra.mxu0 %v2622
      %v2779 = vpop.f32.mrf.mxu0
      %v2780 = vadd.f32 0.0, %v2779
      %v2781 = vpop.f32.mrf.mxu0
      %v2782 = vpop.f32.mrf.mxu0
      %v2783 = vadd.f32 0.0, %v2782
      %v2784 = vpop.f32.mrf.mxu0
      %2785 = vmatprep.mubr.bf16.mxu0 0
      %2786 = vmatmul.mubr.bf16.gmra.mxu0 %v2623
      %v2787 = vpop.f32.mrf.mxu0
      %v2788 = vadd.f32 0.0, %v2787
      %v2789 = vpop.f32.mrf.mxu0
      %v2790 = vpop.f32.mrf.mxu0
      %v2791 = vadd.f32 0.0, %v2790
      %v2792 = vpop.f32.mrf.mxu0
      %2793 = vmatprep.mubr.bf16.mxu0 0
      %2794 = vmatmul.mubr.bf16.gmra.mxu0 %v2624
      %v2795 = vpop.f32.mrf.mxu0
      %v2796 = vadd.f32 0.0, %v2795
      %v2797 = vpop.f32.mrf.mxu0
      %v2798 = vpop.f32.mrf.mxu0
      %v2799 = vadd.f32 0.0, %v2798
      %v2800 = vpop.f32.mrf.mxu0
      %2801 = vmatprep.mubr.bf16.mxu0 0
      %2802 = vmatmul.mubr.bf16.gmra.mxu0 %v2625
      %v2803 = vpop.f32.mrf.mxu0
      %v2804 = vadd.f32 0.0, %v2803
      %v2805 = vpop.f32.mrf.mxu0
      %v2806 = vpop.f32.mrf.mxu0
      %v2807 = vadd.f32 0.0, %v2806
      %v2808 = vpop.f32.mrf.mxu0
      %2809 = vmatprep.mubr.bf16.mxu0 0
      %2810 = vmatmul.mubr.bf16.gmra.mxu0 %v2626
      %v2811 = vpop.f32.mrf.mxu0
      %v2812 = vadd.f32 0.0, %v2811
      %v2813 = vpop.f32.mrf.mxu0
      %v2814 = vpop.f32.mrf.mxu0
      %v2815 = vadd.f32 0.0, %v2814
      %v2816 = vpop.f32.mrf.mxu0
      %2817 = vmatprep.mubr.bf16.mxu0 0
      %2818 = vmatmul.mubr.bf16.gmra.mxu0 %v2627
      %v2819 = vpop.f32.mrf.mxu0
      %v2820 = vadd.f32 0.0, %v2819
      %v2821 = vpop.f32.mrf.mxu0
      %v2822 = vpop.f32.mrf.mxu0
      %v2823 = vadd.f32 0.0, %v2822
      %v2824 = vpop.f32.mrf.mxu0
      %2825 = vmatprep.mubr.bf16.mxu0 0
      %2826 = vmatmul.mubr.bf16.gmra.mxu0 %v2628
      %v2827 = vpop.f32.mrf.mxu0
      %v2828 = vadd.f32 0.0, %v2827
      %v2829 = vpop.f32.mrf.mxu0
      %v2830 = vpop.f32.mrf.mxu0
      %v2831 = vadd.f32 0.0, %v2830
      %v2832 = vpop.f32.mrf.mxu0
      %2833 = vmatprep.mubr.bf16.mxu0 0
      %2834 = vmatmul.mubr.bf16.gmra.mxu0 %v2629
      %v2835 = vpop.f32.mrf.mxu0
      %v2836 = vadd.f32 0.0, %v2835
      %v2837 = vpop.f32.mrf.mxu0
      %v2838 = vpop.f32.mrf.mxu0
      %v2839 = vadd.f32 0.0, %v2838
      %v2840 = vpop.f32.mrf.mxu0
      %2841 = vmatprep.mubr.bf16.mxu0 0
      %2842 = vmatmul.mubr.bf16.gmra.mxu0 %v2630
      %v2843 = vpop.f32.mrf.mxu0
      %v2844 = vadd.f32 0.0, %v2843
      %v2845 = vpop.f32.mrf.mxu0
      %v2846 = vpop.f32.mrf.mxu0
      %v2847 = vadd.f32 0.0, %v2846
      %v2848 = vpop.f32.mrf.mxu0
      %2849 = vmatprep.mubr.bf16.mxu0 0
      %2850 = vmatmul.mubr.bf16.gmra.mxu0 %v2631
      %v2851 = vpop.f32.mrf.mxu0
      %v2852 = vadd.f32 0.0, %v2851
      %v2853 = vpop.f32.mrf.mxu0
      %v2854 = vpop.f32.mrf.mxu0
      %v2855 = vadd.f32 0.0, %v2854
      %v2856 = vpop.f32.mrf.mxu0
      %2857 = vdwg.mxu0
      %v2858 = vadd.f32 %v2552, %v2732
      %v2859 = vadd.f32 %v2553, %v2735
      %v2860 = vadd.f32 %v2554, %v2740
      %v2861 = vadd.f32 %v2555, %v2743
      %v2862 = vadd.f32 %v2556, %v2748
      %v2863 = vadd.f32 %v2557, %v2751
      %v2864 = vadd.f32 %v2558, %v2756
      %v2865 = vadd.f32 %v2559, %v2759
      %v2866 = vadd.f32 %v2560, %v2764
      %v2867 = vadd.f32 %v2561, %v2767
      %v2868 = vadd.f32 %v2562, %v2772
      %v2869 = vadd.f32 %v2563, %v2775
      %v2870 = vadd.f32 %v2564, %v2780
      %v2871 = vadd.f32 %v2565, %v2783
      %v2872 = vadd.f32 %v2566, %v2788
      %v2873 = vadd.f32 %v2567, %v2791
      %v2874 = vadd.f32 %v2568, %v2796
      %v2875 = vadd.f32 %v2569, %v2799
      %v2876 = vadd.f32 %v2570, %v2804
      %v2877 = vadd.f32 %v2571, %v2807
      %v2878 = vadd.f32 %v2572, %v2812
      %v2879 = vadd.f32 %v2573, %v2815
      %v2880 = vadd.f32 %v2574, %v2820
      %v2881 = vadd.f32 %v2575, %v2823
      %v2882 = vadd.f32 %v2576, %v2828
      %v2883 = vadd.f32 %v2577, %v2831
      %v2884 = vadd.f32 %v2578, %v2836
      %v2885 = vadd.f32 %v2579, %v2839
      %v2886 = vadd.f32 %v2580, %v2844
      %v2887 = vadd.f32 %v2581, %v2847
      %v2888 = vadd.f32 %v2582, %v2852
      %v2889 = vadd.f32 %v2583, %v2855
      %v2890 = vld [vmem:[%s3] sm:$0x1]
      %v2891 = vlaneseq
      %v2892 = vshrl.u32 %v2891, 7
      %v2893 = vsub.s32 0, %v2892
      %v2894 = vrot.slane %v2890, %v2893
      %v2895 = vadd.f32 %v2858, %v2894
      %v2896 = vadd.f32 %v2859, %v2894
      %v2897 = vadd.f32 %v2860, %v2894
      %v2898 = vadd.f32 %v2861, %v2894
      %v2899 = vadd.f32 %v2862, %v2894
      %v2900 = vadd.f32 %v2863, %v2894
      %v2901 = vadd.f32 %v2864, %v2894
      %v2902 = vadd.f32 %v2865, %v2894
      %v2903 = vadd.f32 %v2866, %v2894
      %v2904 = vadd.f32 %v2867, %v2894
      %v2905 = vadd.f32 %v2868, %v2894
      %v2906 = vadd.f32 %v2869, %v2894
      %v2907 = vadd.f32 %v2870, %v2894
      %v2908 = vadd.f32 %v2871, %v2894
      %v2909 = vadd.f32 %v2872, %v2894
      %v2910 = vadd.f32 %v2873, %v2894
      %v2911 = vadd.f32 %v2874, %v2894
      %v2912 = vadd.f32 %v2875, %v2894
      %v2913 = vadd.f32 %v2876, %v2894
      %v2914 = vadd.f32 %v2877, %v2894
      %v2915 = vadd.f32 %v2878, %v2894
      %v2916 = vadd.f32 %v2879, %v2894
      %v2917 = vadd.f32 %v2880, %v2894
      %v2918 = vadd.f32 %v2881, %v2894
      %v2919 = vadd.f32 %v2882, %v2894
      %v2920 = vadd.f32 %v2883, %v2894
      %v2921 = vadd.f32 %v2884, %v2894
      %v2922 = vadd.f32 %v2885, %v2894
      %v2923 = vadd.f32 %v2886, %v2894
      %v2924 = vadd.f32 %v2887, %v2894
      %v2925 = vadd.f32 %v2888, %v2894
      %v2926 = vadd.f32 %v2889, %v2894
      %v2927 = vmax.f32 %v2895, 0.0
      %v2928 = vmax.f32 %v2896, 0.0
      %v2929 = vmax.f32 %v2897, 0.0
      %v2930 = vmax.f32 %v2898, 0.0
      %v2931 = vmax.f32 %v2899, 0.0
      %v2932 = vmax.f32 %v2900, 0.0
      %v2933 = vmax.f32 %v2901, 0.0
      %v2934 = vmax.f32 %v2902, 0.0
      %v2935 = vmax.f32 %v2903, 0.0
      %v2936 = vmax.f32 %v2904, 0.0
      %v2937 = vmax.f32 %v2905, 0.0
      %v2938 = vmax.f32 %v2906, 0.0
      %v2939 = vmax.f32 %v2907, 0.0
      %v2940 = vmax.f32 %v2908, 0.0
      %v2941 = vmax.f32 %v2909, 0.0
      %v2942 = vmax.f32 %v2910, 0.0
      %v2943 = vmax.f32 %v2911, 0.0
      %v2944 = vmax.f32 %v2912, 0.0
      %v2945 = vmax.f32 %v2913, 0.0
      %v2946 = vmax.f32 %v2914, 0.0
      %v2947 = vmax.f32 %v2915, 0.0
      %v2948 = vmax.f32 %v2916, 0.0
      %v2949 = vmax.f32 %v2917, 0.0
      %v2950 = vmax.f32 %v2918, 0.0
      %v2951 = vmax.f32 %v2919, 0.0
      %v2952 = vmax.f32 %v2920, 0.0
      %v2953 = vmax.f32 %v2921, 0.0
      %v2954 = vmax.f32 %v2922, 0.0
      %v2955 = vmax.f32 %v2923, 0.0
      %v2956 = vmax.f32 %v2924, 0.0
      %v2957 = vmax.f32 %v2925, 0.0
      %v2958 = vmax.f32 %v2926, 0.0
      %2959 = vst [vmem:[#allocation2] sm:$0xff] 0.0
      %2960 = vst [vmem:[#allocation2 + $0x8] sm:$0xff] 0.0
      %2961 = vst [vmem:[#allocation2 + $0x10] sm:$0x3] 0.0
      %2962 = vst [vmem:[#allocation2 + $0x18] sm:$0xff] 0.0
      %2963 = vst [vmem:[#allocation2 + $0x20] sm:$0xff] 0.0
      %2964 = vst [vmem:[#allocation2 + $0x28] sm:$0x3] 0.0
      %2965 = vst [vmem:[#allocation2 + $0x30] sm:$0xff] 0.0
      %2966 = vst [vmem:[#allocation2 + $0x38] sm:$0xff] 0.0
      %2967 = vst [vmem:[#allocation2 + $0x40] sm:$0x3] 0.0
      %2968 = vst [vmem:[#allocation2 + $0x48] sm:$0xff] 0.0
      %2969 = vst [vmem:[#allocation2 + $0x50] sm:$0xff] 0.0
      %2970 = vst [vmem:[#allocation2 + $0x58] sm:$0x3] 0.0
      %2971 = vst [vmem:[#allocation2 + $0x60] sm:$0xff] 0.0
      %2972 = vst [vmem:[#allocation2 + $0x68] sm:$0xff] 0.0
      %2973 = vst [vmem:[#allocation2 + $0x70] sm:$0x3] 0.0
      %2974 = vst [vmem:[#allocation2 + $0x78] sm:$0xff] 0.0
      %2975 = vst [vmem:[#allocation2 + $0x80] sm:$0xff] 0.0
      %2976 = vst [vmem:[#allocation2 + $0x88] sm:$0x3] 0.0
      %2977 = vst [vmem:[#allocation2 + $0x90] sm:$0xff] 0.0
      %2978 = vst [vmem:[#allocation2 + $0x98] sm:$0xff] 0.0
      %2979 = vst [vmem:[#allocation2 + $0xa0] sm:$0x3] 0.0
      %2980 = vst [vmem:[#allocation2 + $0xa8] sm:$0xff] 0.0
      %2981 = vst [vmem:[#allocation2 + $0xb0] sm:$0xff] 0.0
      %2982 = vst [vmem:[#allocation2 + $0xb8] sm:$0x3] 0.0
      %2983 = vst [vmem:[#allocation2 + $0xc0] sm:$0xff] 0.0
      %2984 = vst [vmem:[#allocation2 + $0xc8] sm:$0xff] 0.0
      %2985 = vst [vmem:[#allocation2 + $0xd0] sm:$0x3] 0.0
      %2986 = vst [vmem:[#allocation2 + $0xd8] sm:$0xff] 0.0
      %2987 = vst [vmem:[#allocation2 + $0xe0] sm:$0xff] 0.0
      %2988 = vst [vmem:[#allocation2 + $0xe8] sm:$0x3] 0.0
      %2989 = vst [vmem:[#allocation2 + $0xf0] sm:$0xff] 0.0
      %2990 = vst [vmem:[#allocation2 + $0xf8] sm:$0xff] 0.0
      %2991 = vst [vmem:[#allocation2 + $0x100] sm:$0x3] 0.0
      %2992 = vst [vmem:[#allocation2 + $0x108] sm:$0xff] 0.0
      %2993 = vst [vmem:[#allocation2 + $0x110] sm:$0xff] 0.0
      %2994 = vst [vmem:[#allocation2 + $0x118] sm:$0x3] 0.0
      %2995 = vst [vmem:[#allocation2 + $0x120] sm:$0xff] 0.0
      %2996 = vst [vmem:[#allocation2 + $0x128] sm:$0xff] 0.0
      %2997 = vst [vmem:[#allocation2 + $0x130] sm:$0x3] 0.0
      %2998 = vst [vmem:[#allocation2 + $0x138] sm:$0xff] 0.0
      %2999 = vst [vmem:[#allocation2 + $0x140] sm:$0xff] 0.0
      %3000 = vst [vmem:[#allocation2 + $0x148] sm:$0x3] 0.0
      %3001 = vst [vmem:[#allocation2 + $0x150] sm:$0xff] 0.0
      %3002 = vst [vmem:[#allocation2 + $0x158] sm:$0xff] 0.0
      %3003 = vst [vmem:[#allocation2 + $0x160] sm:$0x3] 0.0
      %3004 = vst [vmem:[#allocation2 + $0x168] sm:$0xff] 0.0
      %3005 = vst [vmem:[#allocation2 + $0x170] sm:$0xff] 0.0
      %3006 = vst [vmem:[#allocation2 + $0x178] sm:$0x3] 0.0
      %3007 = vst [vmem:[#allocation2 + $0x180] sm:$0xff] 0.0
      %3008 = vst [vmem:[#allocation2 + $0x188] sm:$0xff] 0.0
      %3009 = vst [vmem:[#allocation2 + $0x190] sm:$0x3] 0.0
      %3010 = vst [vmem:[#allocation2 + $0x198] sm:$0xff] 0.0
      %3011 = vst [vmem:[#allocation2 + $0x1a0] sm:$0xff] 0.0
      %3012 = vst [vmem:[#allocation2 + $0x1a8] sm:$0x3] 0.0
      %s3013 = scalar_lea.vmem [#allocation2], 24
      %3014 = vst [vmem:[%s3013 + $0x1] sm:$0xff] %v2927
      %3015 = vst [vmem:[%s3013 + $0x9] sm:$0xff] %v2928
      %3016 = vst [vmem:[%s3013 + $0x19] sm:$0xff] %v2929
      %3017 = vst [vmem:[%s3013 + $0x21] sm:$0xff] %v2930
      %3018 = vst [vmem:[%s3013 + $0x31] sm:$0xff] %v2931
      %3019 = vst [vmem:[%s3013 + $0x39] sm:$0xff] %v2932
      %3020 = vst [vmem:[%s3013 + $0x49] sm:$0xff] %v2933
      %3021 = vst [vmem:[%s3013 + $0x51] sm:$0xff] %v2934
      %3022 = vst [vmem:[%s3013 + $0x61] sm:$0xff] %v2935
      %3023 = vst [vmem:[%s3013 + $0x69] sm:$0xff] %v2936
      %3024 = vst [vmem:[%s3013 + $0x79] sm:$0xff] %v2937
      %3025 = vst [vmem:[%s3013 + $0x81] sm:$0xff] %v2938
      %3026 = vst [vmem:[%s3013 + $0x91] sm:$0xff] %v2939
      %3027 = vst [vmem:[%s3013 + $0x99] sm:$0xff] %v2940
      %3028 = vst [vmem:[%s3013 + $0xa9] sm:$0xff] %v2941
      %3029 = vst [vmem:[%s3013 + $0xb1] sm:$0xff] %v2942
      %3030 = vst [vmem:[%s3013 + $0xc1] sm:$0xff] %v2943
      %3031 = vst [vmem:[%s3013 + $0xc9] sm:$0xff] %v2944
      %3032 = vst [vmem:[%s3013 + $0xd9] sm:$0xff] %v2945
      %3033 = vst [vmem:[%s3013 + $0xe1] sm:$0xff] %v2946
      %3034 = vst [vmem:[%s3013 + $0xf1] sm:$0xff] %v2947
      %3035 = vst [vmem:[%s3013 + $0xf9] sm:$0xff] %v2948
      %3036 = vst [vmem:[%s3013 + $0x109] sm:$0xff] %v2949
      %3037 = vst [vmem:[%s3013 + $0x111] sm:$0xff] %v2950
      %3038 = vst [vmem:[%s3013 + $0x121] sm:$0xff] %v2951
      %3039 = vst [vmem:[%s3013 + $0x129] sm:$0xff] %v2952
      %3040 = vst [vmem:[%s3013 + $0x139] sm:$0xff] %v2953
      %3041 = vst [vmem:[%s3013 + $0x141] sm:$0xff] %v2954
      %3042 = vst [vmem:[%s3013 + $0x151] sm:$0xff] %v2955
      %3043 = vst [vmem:[%s3013 + $0x159] sm:$0xff] %v2956
      %3044 = vst [vmem:[%s3013 + $0x169] sm:$0xff] %v2957
      %3045 = vst [vmem:[%s3013 + $0x171] sm:$0xff] %v2958
      %v3046 = vld [vmem:[#allocation2] sm:$0xff]
      %v3047 = vld [vmem:[#allocation2 + $0x8] sm:$0xff]
      %v3048 = vld [vmem:[#allocation2 + $0x18] sm:$0xff]
      %v3049 = vld [vmem:[#allocation2 + $0x20] sm:$0xff]
      %v3050 = vld [vmem:[#allocation2 + $0x30] sm:$0xff]
      %v3051 = vld [vmem:[#allocation2 + $0x38] sm:$0xff]
      %v3052 = vld [vmem:[#allocation2 + $0x48] sm:$0xff]
      %v3053 = vld [vmem:[#allocation2 + $0x50] sm:$0xff]
      %v3054 = vld [vmem:[#allocation2 + $0x60] sm:$0xff]
      %v3055 = vld [vmem:[#allocation2 + $0x68] sm:$0xff]
      %v3056 = vld [vmem:[#allocation2 + $0x78] sm:$0xff]
      %v3057 = vld [vmem:[#allocation2 + $0x80] sm:$0xff]
      %v3058 = vld [vmem:[#allocation2 + $0x90] sm:$0xff]
      %v3059 = vld [vmem:[#allocation2 + $0x98] sm:$0xff]
      %v3060 = vld [vmem:[#allocation2 + $0xa8] sm:$0xff]
      %v3061 = vld [vmem:[#allocation2 + $0xb0] sm:$0xff]
      %v3062 = vld [vmem:[#allocation2 + $0xc0] sm:$0xff]
      %v3063 = vld [vmem:[#allocation2 + $0xc8] sm:$0xff]
      %v3064 = vld [vmem:[#allocation2 + $0xd8] sm:$0xff]
      %v3065 = vld [vmem:[#allocation2 + $0xe0] sm:$0xff]
      %v3066 = vld [vmem:[#allocation2 + $0xf0] sm:$0xff]
      %v3067 = vld [vmem:[#allocation2 + $0xf8] sm:$0xff]
      %v3068 = vld [vmem:[#allocation2 + $0x108] sm:$0xff]
      %v3069 = vld [vmem:[#allocation2 + $0x110] sm:$0xff]
      %v3070 = vld [vmem:[#allocation2 + $0x120] sm:$0xff]
      %v3071 = vld [vmem:[#allocation2 + $0x128] sm:$0xff]
      %v3072 = vld [vmem:[#allocation2 + $0x138] sm:$0xff]
      %v3073 = vld [vmem:[#allocation2 + $0x140] sm:$0xff]
      %v3074 = vld [vmem:[#allocation2 + $0x150] sm:$0xff]
      %v3075 = vld [vmem:[#allocation2 + $0x158] sm:$0xff]
      %v3076 = vld [vmem:[#allocation2 + $0x168] sm:$0xff]
      %v3077 = vld [vmem:[#allocation2 + $0x170] sm:$0xff]
      %v3078 = vpack.c.bf16 %v3047, %v3046
      %v3079 = vpack.c.bf16 %v3049, %v3048
      %v3080 = vpack.c.bf16 %v3051, %v3050
      %v3081 = vpack.c.bf16 %v3053, %v3052
      %v3082 = vpack.c.bf16 %v3055, %v3054
      %v3083 = vpack.c.bf16 %v3057, %v3056
      %v3084 = vpack.c.bf16 %v3059, %v3058
      %v3085 = vpack.c.bf16 %v3061, %v3060
      %v3086 = vpack.c.bf16 %v3063, %v3062
      %v3087 = vpack.c.bf16 %v3065, %v3064
      %v3088 = vpack.c.bf16 %v3067, %v3066
      %v3089 = vpack.c.bf16 %v3069, %v3068
      %v3090 = vpack.c.bf16 %v3071, %v3070
      %v3091 = vpack.c.bf16 %v3073, %v3072
      %v3092 = vpack.c.bf16 %v3075, %v3074
      %v3093 = vpack.c.bf16 %v3077, %v3076
      %v3094 = vld [vmem:[%s2] sm:$0xf]
      %v3095 = vld [vmem:[%s2 + $0x4] sm:$0xf]
      %v3096 = vld [vmem:[%s2 + $0x8] sm:$0xf]
      %v3097 = vld [vmem:[%s2 + $0xc] sm:$0xf]
      %v3098 = vld [vmem:[%s2 + $0x10] sm:$0xf]
      %v3099 = vld [vmem:[%s2 + $0x14] sm:$0xf]
      %v3100 = vld [vmem:[%s2 + $0x18] sm:$0xf]
      %v3101 = vld [vmem:[%s2 + $0x1c] sm:$0xf]
      %v3102 = vld [vmem:[%s2 + $0x20] sm:$0xf]
      %v3103 = vld [vmem:[%s2 + $0x24] sm:$0xf]
      %v3104 = vld [vmem:[%s2 + $0x28] sm:$0xf]
      %v3105 = vld [vmem:[%s2 + $0x2c] sm:$0xf]
      %v3106 = vld [vmem:[%s2 + $0x30] sm:$0xf]
      %v3107 = vld [vmem:[%s2 + $0x34] sm:$0xf]
      %v3108 = vld [vmem:[%s2 + $0x38] sm:$0xf]
      %v3109 = vld [vmem:[%s2 + $0x3c] sm:$0xf]
      %v3110 = vld [vmem:[#allocation2 + $0x1] sm:$0xff]
      %v3111 = vld [vmem:[#allocation2 + $0x9] sm:$0xff]
      %v3112 = vld [vmem:[#allocation2 + $0x19] sm:$0xff]
      %v3113 = vld [vmem:[#allocation2 + $0x21] sm:$0xff]
      %v3114 = vld [vmem:[#allocation2 + $0x31] sm:$0xff]
      %v3115 = vld [vmem:[#allocation2 + $0x39] sm:$0xff]
      %v3116 = vld [vmem:[#allocation2 + $0x49] sm:$0xff]
      %v3117 = vld [vmem:[#allocation2 + $0x51] sm:$0xff]
      %v3118 = vld [vmem:[#allocation2 + $0x61] sm:$0xff]
      %v3119 = vld [vmem:[#allocation2 + $0x69] sm:$0xff]
      %v3120 = vld [vmem:[#allocation2 + $0x79] sm:$0xff]
      %v3121 = vld [vmem:[#allocation2 + $0x81] sm:$0xff]
      %v3122 = vld [vmem:[#allocation2 + $0x91] sm:$0xff]
      %v3123 = vld [vmem:[#allocation2 + $0x99] sm:$0xff]
      %v3124 = vld [vmem:[#allocation2 + $0xa9] sm:$0xff]
      %v3125 = vld [vmem:[#allocation2 + $0xb1] sm:$0xff]
      %v3126 = vld [vmem:[#allocation2 + $0xc1] sm:$0xff]
      %v3127 = vld [vmem:[#allocation2 + $0xc9] sm:$0xff]
      %v3128 = vld [vmem:[#allocation2 + $0xd9] sm:$0xff]
      %v3129 = vld [vmem:[#allocation2 + $0xe1] sm:$0xff]
      %v3130 = vld [vmem:[#allocation2 + $0xf1] sm:$0xff]
      %v3131 = vld [vmem:[#allocation2 + $0xf9] sm:$0xff]
      %v3132 = vld [vmem:[#allocation2 + $0x109] sm:$0xff]
      %v3133 = vld [vmem:[#allocation2 + $0x111] sm:$0xff]
      %v3134 = vld [vmem:[#allocation2 + $0x121] sm:$0xff]
      %v3135 = vld [vmem:[#allocation2 + $0x129] sm:$0xff]
      %v3136 = vld [vmem:[#allocation2 + $0x139] sm:$0xff]
      %v3137 = vld [vmem:[#allocation2 + $0x141] sm:$0xff]
      %v3138 = vld [vmem:[#allocation2 + $0x151] sm:$0xff]
      %v3139 = vld [vmem:[#allocation2 + $0x159] sm:$0xff]
      %v3140 = vld [vmem:[#allocation2 + $0x169] sm:$0xff]
      %v3141 = vld [vmem:[#allocation2 + $0x171] sm:$0xff]
      %v3142 = vpack.c.bf16 %v3111, %v3110
      %v3143 = vpack.c.bf16 %v3113, %v3112
      %v3144 = vpack.c.bf16 %v3115, %v3114
      %v3145 = vpack.c.bf16 %v3117, %v3116
      %v3146 = vpack.c.bf16 %v3119, %v3118
      %v3147 = vpack.c.bf16 %v3121, %v3120
      %v3148 = vpack.c.bf16 %v3123, %v3122
      %v3149 = vpack.c.bf16 %v3125, %v3124
      %v3150 = vpack.c.bf16 %v3127, %v3126
      %v3151 = vpack.c.bf16 %v3129, %v3128
      %v3152 = vpack.c.bf16 %v3131, %v3130
      %v3153 = vpack.c.bf16 %v3133, %v3132
      %v3154 = vpack.c.bf16 %v3135, %v3134
      %v3155 = vpack.c.bf16 %v3137, %v3136
      %v3156 = vpack.c.bf16 %v3139, %v3138
      %v3157 = vpack.c.bf16 %v3141, %v3140
      %s3158 = scalar_lea.vmem %s2, 64
      %v3159 = vld [vmem:[%s3158] sm:$0xf]
      %v3160 = vld [vmem:[%s3158 + $0x4] sm:$0xf]
      %v3161 = vld [vmem:[%s3158 + $0x8] sm:$0xf]
      %v3162 = vld [vmem:[%s3158 + $0xc] sm:$0xf]
      %v3163 = vld [vmem:[%s3158 + $0x10] sm:$0xf]
      %v3164 = vld [vmem:[%s3158 + $0x14] sm:$0xf]
      %v3165 = vld [vmem:[%s3158 + $0x18] sm:$0xf]
      %v3166 = vld [vmem:[%s3158 + $0x1c] sm:$0xf]
      %v3167 = vld [vmem:[%s3158 + $0x20] sm:$0xf]
      %v3168 = vld [vmem:[%s3158 + $0x24] sm:$0xf]
      %v3169 = vld [vmem:[%s3158 + $0x28] sm:$0xf]
      %v3170 = vld [vmem:[%s3158 + $0x2c] sm:$0xf]
      %v3171 = vld [vmem:[%s3158 + $0x30] sm:$0xf]
      %v3172 = vld [vmem:[%s3158 + $0x34] sm:$0xf]
      %v3173 = vld [vmem:[%s3158 + $0x38] sm:$0xf]
      %v3174 = vld [vmem:[%s3158 + $0x3c] sm:$0xf]
      %v3191 = vunpack.c.l.b16 %v3159
      %v3192 = vunpack.c.l.b16 %v3160
      %v3193 = vunpack.c.l.b16 %v3161
      %v3194 = vunpack.c.l.b16 %v3162
      %v3195 = vunpack.c.l.b16 %v3163
      %v3196 = vunpack.c.l.b16 %v3164
      %v3197 = vunpack.c.l.b16 %v3165
      %v3198 = vunpack.c.l.b16 %v3166
      %v3199 = vunpack.c.l.b16 %v3167
      %v3200 = vunpack.c.l.b16 %v3168
      %v3201 = vunpack.c.l.b16 %v3169
      %v3202 = vunpack.c.l.b16 %v3170
      %v3203 = vunpack.c.l.b16 %v3171
      %v3204 = vunpack.c.l.b16 %v3172
      %v3205 = vunpack.c.l.b16 %v3173
      %v3206 = vunpack.c.l.b16 %v3174
      %v3207 = vpack.c.b16 %v3192, %v3191
      %v3208 = vpack.c.b16 %v3194, %v3193
      %v3209 = vpack.c.b16 %v3196, %v3195
      %v3210 = vpack.c.b16 %v3198, %v3197
      %v3211 = vpack.c.b16 %v3200, %v3199
      %v3212 = vpack.c.b16 %v3202, %v3201
      %v3213 = vpack.c.b16 %v3204, %v3203
      %v3214 = vpack.c.b16 %v3206, %v3205
      %3223 = vmatprep.subr.bf16.mxu0 0
      %3224 = vmatpush1.bf16.msra.mxu0 %v3214
      %3225 = vmatprep.subr.bf16.mxu0 0
      %3226 = vmatpush1.bf16.msra.mxu0 %v3213
      %3227 = vmatprep.subr.bf16.mxu0 0
      %3228 = vmatpush1.bf16.msra.mxu0 %v3212
      %3229 = vmatprep.subr.bf16.mxu0 0
      %3230 = vmatpush1.bf16.msra.mxu0 %v3211
      %3231 = vmatprep.subr.bf16.mxu0 0
      %3232 = vmatpush1.bf16.msra.mxu0 %v3210
      %3233 = vmatprep.subr.bf16.mxu0 0
      %3234 = vmatpush1.bf16.msra.mxu0 %v3209
      %3235 = vmatprep.subr.bf16.mxu0 0
      %3236 = vmatpush1.bf16.msra.mxu0 %v3208
      %3237 = vmatprep.subr.bf16.mxu0 0
      %3238 = vmatpush1.bf16.msra.mxu0 %v3207
      %3239 = vmatprep.subr.bf16.mxu0 0
      %3240 = vmatpush2.bf16.msra.mxu0 0
      %3241 = vmatprep.subr.bf16.mxu0 0
      %3242 = vmatpush2.bf16.msra.mxu0 0
      %3243 = vmatprep.subr.bf16.mxu0 0
      %3244 = vmatpush2.bf16.msra.mxu0 0
      %3245 = vmatprep.subr.bf16.mxu0 0
      %3246 = vmatpush2.bf16.msra.mxu0 0
      %3247 = vmatprep.subr.bf16.mxu0 0
      %3248 = vmatpush2.bf16.msra.mxu0 0
      %3249 = vmatprep.subr.bf16.mxu0 0
      %3250 = vmatpush2.bf16.msra.mxu0 0
      %3251 = vmatprep.subr.bf16.mxu0 0
      %3252 = vmatpush2.bf16.msra.mxu0 0
      %3253 = vmatprep.subr.bf16.mxu0 0
      %3254 = vmatpush2.bf16.msra.mxu0 0
      %3255 = vmatprep.mubr.bf16.mxu0 0
      %3256 = vmatmul.mubr.bf16.gmra.mxu0 %v3142
      %v3257 = vpop.f32.mrf.mxu0
      %v3258 = vadd.f32 0.0, %v3257
      %v3259 = vpop.f32.mrf.mxu0
      %v3260 = vpop.f32.mrf.mxu0
      %v3261 = vadd.f32 0.0, %v3260
      %v3262 = vpop.f32.mrf.mxu0
      %3263 = vmatprep.mubr.bf16.mxu0 0
      %3264 = vmatmul.mubr.bf16.gmra.mxu0 %v3143
      %v3265 = vpop.f32.mrf.mxu0
      %v3266 = vadd.f32 0.0, %v3265
      %v3267 = vpop.f32.mrf.mxu0
      %v3268 = vpop.f32.mrf.mxu0
      %v3269 = vadd.f32 0.0, %v3268
      %v3270 = vpop.f32.mrf.mxu0
      %3271 = vmatprep.mubr.bf16.mxu0 0
      %3272 = vmatmul.mubr.bf16.gmra.mxu0 %v3144
      %v3273 = vpop.f32.mrf.mxu0
      %v3274 = vadd.f32 0.0, %v3273
      %v3275 = vpop.f32.mrf.mxu0
      %v3276 = vpop.f32.mrf.mxu0
      %v3277 = vadd.f32 0.0, %v3276
      %v3278 = vpop.f32.mrf.mxu0
      %3279 = vmatprep.mubr.bf16.mxu0 0
      %3280 = vmatmul.mubr.bf16.gmra.mxu0 %v3145
      %v3281 = vpop.f32.mrf.mxu0
      %v3282 = vadd.f32 0.0, %v3281
      %v3283 = vpop.f32.mrf.mxu0
      %v3284 = vpop.f32.mrf.mxu0
      %v3285 = vadd.f32 0.0, %v3284
      %v3286 = vpop.f32.mrf.mxu0
      %3287 = vmatprep.mubr.bf16.mxu0 0
      %3288 = vmatmul.mubr.bf16.gmra.mxu0 %v3146
      %v3289 = vpop.f32.mrf.mxu0
      %v3290 = vadd.f32 0.0, %v3289
      %v3291 = vpop.f32.mrf.mxu0
      %v3292 = vpop.f32.mrf.mxu0
      %v3293 = vadd.f32 0.0, %v3292
      %v3294 = vpop.f32.mrf.mxu0
      %3295 = vmatprep.mubr.bf16.mxu0 0
      %3296 = vmatmul.mubr.bf16.gmra.mxu0 %v3147
      %v3297 = vpop.f32.mrf.mxu0
      %v3298 = vadd.f32 0.0, %v3297
      %v3299 = vpop.f32.mrf.mxu0
      %v3300 = vpop.f32.mrf.mxu0
      %v3301 = vadd.f32 0.0, %v3300
      %v3302 = vpop.f32.mrf.mxu0
      %3303 = vmatprep.mubr.bf16.mxu0 0
      %3304 = vmatmul.mubr.bf16.gmra.mxu0 %v3148
      %v3305 = vpop.f32.mrf.mxu0
      %v3306 = vadd.f32 0.0, %v3305
      %v3307 = vpop.f32.mrf.mxu0
      %v3308 = vpop.f32.mrf.mxu0
      %v3309 = vadd.f32 0.0, %v3308
      %v3310 = vpop.f32.mrf.mxu0
      %3311 = vmatprep.mubr.bf16.mxu0 0
      %3312 = vmatmul.mubr.bf16.gmra.mxu0 %v3149
      %v3313 = vpop.f32.mrf.mxu0
      %v3314 = vadd.f32 0.0, %v3313
      %v3315 = vpop.f32.mrf.mxu0
      %v3316 = vpop.f32.mrf.mxu0
      %v3317 = vadd.f32 0.0, %v3316
      %v3318 = vpop.f32.mrf.mxu0
      %3319 = vmatprep.mubr.bf16.mxu0 0
      %3320 = vmatmul.mubr.bf16.gmra.mxu0 %v3150
      %v3321 = vpop.f32.mrf.mxu0
      %v3322 = vadd.f32 0.0, %v3321
      %v3323 = vpop.f32.mrf.mxu0
      %v3324 = vpop.f32.mrf.mxu0
      %v3325 = vadd.f32 0.0, %v3324
      %v3326 = vpop.f32.mrf.mxu0
      %3327 = vmatprep.mubr.bf16.mxu0 0
      %3328 = vmatmul.mubr.bf16.gmra.mxu0 %v3151
      %v3329 = vpop.f32.mrf.mxu0
      %v3330 = vadd.f32 0.0, %v3329
      %v3331 = vpop.f32.mrf.mxu0
      %v3332 = vpop.f32.mrf.mxu0
      %v3333 = vadd.f32 0.0, %v3332
      %v3334 = vpop.f32.mrf.mxu0
      %3335 = vmatprep.mubr.bf16.mxu0 0
      %3336 = vmatmul.mubr.bf16.gmra.mxu0 %v3152
      %v3337 = vpop.f32.mrf.mxu0
      %v3338 = vadd.f32 0.0, %v3337
      %v3339 = vpop.f32.mrf.mxu0
      %v3340 = vpop.f32.mrf.mxu0
      %v3341 = vadd.f32 0.0, %v3340
      %v3342 = vpop.f32.mrf.mxu0
      %3343 = vmatprep.mubr.bf16.mxu0 0
      %3344 = vmatmul.mubr.bf16.gmra.mxu0 %v3153
      %v3345 = vpop.f32.mrf.mxu0
      %v3346 = vadd.f32 0.0, %v3345
      %v3347 = vpop.f32.mrf.mxu0
      %v3348 = vpop.f32.mrf.mxu0
      %v3349 = vadd.f32 0.0, %v3348
      %v3350 = vpop.f32.mrf.mxu0
      %3351 = vmatprep.mubr.bf16.mxu0 0
      %3352 = vmatmul.mubr.bf16.gmra.mxu0 %v3154
      %v3353 = vpop.f32.mrf.mxu0
      %v3354 = vadd.f32 0.0, %v3353
      %v3355 = vpop.f32.mrf.mxu0
      %v3356 = vpop.f32.mrf.mxu0
      %v3357 = vadd.f32 0.0, %v3356
      %v3358 = vpop.f32.mrf.mxu0
      %3359 = vmatprep.mubr.bf16.mxu0 0
      %3360 = vmatmul.mubr.bf16.gmra.mxu0 %v3155
      %v3361 = vpop.f32.mrf.mxu0
      %v3362 = vadd.f32 0.0, %v3361
      %v3363 = vpop.f32.mrf.mxu0
      %v3364 = vpop.f32.mrf.mxu0
      %v3365 = vadd.f32 0.0, %v3364
      %v3366 = vpop.f32.mrf.mxu0
      %3367 = vmatprep.mubr.bf16.mxu0 0
      %3368 = vmatmul.mubr.bf16.gmra.mxu0 %v3156
      %v3369 = vpop.f32.mrf.mxu0
      %v3370 = vadd.f32 0.0, %v3369
      %v3371 = vpop.f32.mrf.mxu0
      %v3372 = vpop.f32.mrf.mxu0
      %v3373 = vadd.f32 0.0, %v3372
      %v3374 = vpop.f32.mrf.mxu0
      %3375 = vmatprep.mubr.bf16.mxu0 0
      %3376 = vmatmul.mubr.bf16.gmra.mxu0 %v3157
      %v3377 = vpop.f32.mrf.mxu0
      %v3378 = vadd.f32 0.0, %v3377
      %v3379 = vpop.f32.mrf.mxu0
      %v3380 = vpop.f32.mrf.mxu0
      %v3381 = vadd.f32 0.0, %v3380
      %v3382 = vpop.f32.mrf.mxu0
      %3383 = vdwg.mxu0
      %v3400 = vunpack.c.l.b16 %v3094
      %v3401 = vunpack.c.l.b16 %v3095
      %v3402 = vunpack.c.l.b16 %v3096
      %v3403 = vunpack.c.l.b16 %v3097
      %v3404 = vunpack.c.l.b16 %v3098
      %v3405 = vunpack.c.l.b16 %v3099
      %v3406 = vunpack.c.l.b16 %v3100
      %v3407 = vunpack.c.l.b16 %v3101
      %v3408 = vunpack.c.l.b16 %v3102
      %v3409 = vunpack.c.l.b16 %v3103
      %v3410 = vunpack.c.l.b16 %v3104
      %v3411 = vunpack.c.l.b16 %v3105
      %v3412 = vunpack.c.l.b16 %v3106
      %v3413 = vunpack.c.l.b16 %v3107
      %v3414 = vunpack.c.l.b16 %v3108
      %v3415 = vunpack.c.l.b16 %v3109
      %v3416 = vpack.c.b16 %v3401, %v3400
      %v3417 = vpack.c.b16 %v3403, %v3402
      %v3418 = vpack.c.b16 %v3405, %v3404
      %v3419 = vpack.c.b16 %v3407, %v3406
      %v3420 = vpack.c.b16 %v3409, %v3408
      %v3421 = vpack.c.b16 %v3411, %v3410
      %v3422 = vpack.c.b16 %v3413, %v3412
      %v3423 = vpack.c.b16 %v3415, %v3414
      %3432 = vmatprep.subr.bf16.mxu0 0
      %3433 = vmatpush1.bf16.msra.mxu0 %v3423
      %3434 = vmatprep.subr.bf16.mxu0 0
      %3435 = vmatpush1.bf16.msra.mxu0 %v3422
      %3436 = vmatprep.subr.bf16.mxu0 0
      %3437 = vmatpush1.bf16.msra.mxu0 %v3421
      %3438 = vmatprep.subr.bf16.mxu0 0
      %3439 = vmatpush1.bf16.msra.mxu0 %v3420
      %3440 = vmatprep.subr.bf16.mxu0 0
      %3441 = vmatpush1.bf16.msra.mxu0 %v3419
      %3442 = vmatprep.subr.bf16.mxu0 0
      %3443 = vmatpush1.bf16.msra.mxu0 %v3418
      %3444 = vmatprep.subr.bf16.mxu0 0
      %3445 = vmatpush1.bf16.msra.mxu0 %v3417
      %3446 = vmatprep.subr.bf16.mxu0 0
      %3447 = vmatpush1.bf16.msra.mxu0 %v3416
      %3448 = vmatprep.subr.bf16.mxu0 0
      %3449 = vmatpush2.bf16.msra.mxu0 0
      %3450 = vmatprep.subr.bf16.mxu0 0
      %3451 = vmatpush2.bf16.msra.mxu0 0
      %3452 = vmatprep.subr.bf16.mxu0 0
      %3453 = vmatpush2.bf16.msra.mxu0 0
      %3454 = vmatprep.subr.bf16.mxu0 0
      %3455 = vmatpush2.bf16.msra.mxu0 0
      %3456 = vmatprep.subr.bf16.mxu0 0
      %3457 = vmatpush2.bf16.msra.mxu0 0
      %3458 = vmatprep.subr.bf16.mxu0 0
      %3459 = vmatpush2.bf16.msra.mxu0 0
      %3460 = vmatprep.subr.bf16.mxu0 0
      %3461 = vmatpush2.bf16.msra.mxu0 0
      %3462 = vmatprep.subr.bf16.mxu0 0
      %3463 = vmatpush2.bf16.msra.mxu0 0
      %3464 = vmatprep.mubr.bf16.mxu0 0
      %3465 = vmatmul.mubr.bf16.gmra.mxu0 %v3078
      %v3466 = vpop.f32.mrf.mxu0
      %v3467 = vadd.f32 %v3258, %v3466
      %v3468 = vpop.f32.mrf.mxu0
      %v3469 = vpop.f32.mrf.mxu0
      %v3470 = vadd.f32 %v3261, %v3469
      %v3471 = vpop.f32.mrf.mxu0
      %3472 = vmatprep.mubr.bf16.mxu0 0
      %3473 = vmatmul.mubr.bf16.gmra.mxu0 %v3079
      %v3474 = vpop.f32.mrf.mxu0
      %v3475 = vadd.f32 %v3266, %v3474
      %v3476 = vpop.f32.mrf.mxu0
      %v3477 = vpop.f32.mrf.mxu0
      %v3478 = vadd.f32 %v3269, %v3477
      %v3479 = vpop.f32.mrf.mxu0
      %3480 = vmatprep.mubr.bf16.mxu0 0
      %3481 = vmatmul.mubr.bf16.gmra.mxu0 %v3080
      %v3482 = vpop.f32.mrf.mxu0
      %v3483 = vadd.f32 %v3274, %v3482
      %v3484 = vpop.f32.mrf.mxu0
      %v3485 = vpop.f32.mrf.mxu0
      %v3486 = vadd.f32 %v3277, %v3485
      %v3487 = vpop.f32.mrf.mxu0
      %3488 = vmatprep.mubr.bf16.mxu0 0
      %3489 = vmatmul.mubr.bf16.gmra.mxu0 %v3081
      %v3490 = vpop.f32.mrf.mxu0
      %v3491 = vadd.f32 %v3282, %v3490
      %v3492 = vpop.f32.mrf.mxu0
      %v3493 = vpop.f32.mrf.mxu0
      %v3494 = vadd.f32 %v3285, %v3493
      %v3495 = vpop.f32.mrf.mxu0
      %3496 = vmatprep.mubr.bf16.mxu0 0
      %3497 = vmatmul.mubr.bf16.gmra.mxu0 %v3082
      %v3498 = vpop.f32.mrf.mxu0
      %v3499 = vadd.f32 %v3290, %v3498
      %v3500 = vpop.f32.mrf.mxu0
      %v3501 = vpop.f32.mrf.mxu0
      %v3502 = vadd.f32 %v3293, %v3501
      %v3503 = vpop.f32.mrf.mxu0
      %3504 = vmatprep.mubr.bf16.mxu0 0
      %3505 = vmatmul.mubr.bf16.gmra.mxu0 %v3083
      %v3506 = vpop.f32.mrf.mxu0
      %v3507 = vadd.f32 %v3298, %v3506
      %v3508 = vpop.f32.mrf.mxu0
      %v3509 = vpop.f32.mrf.mxu0
      %v3510 = vadd.f32 %v3301, %v3509
      %v3511 = vpop.f32.mrf.mxu0
      %3512 = vmatprep.mubr.bf16.mxu0 0
      %3513 = vmatmul.mubr.bf16.gmra.mxu0 %v3084
      %v3514 = vpop.f32.mrf.mxu0
      %v3515 = vadd.f32 %v3306, %v3514
      %v3516 = vpop.f32.mrf.mxu0
      %v3517 = vpop.f32.mrf.mxu0
      %v3518 = vadd.f32 %v3309, %v3517
      %v3519 = vpop.f32.mrf.mxu0
      %3520 = vmatprep.mubr.bf16.mxu0 0
      %3521 = vmatmul.mubr.bf16.gmra.mxu0 %v3085
      %v3522 = vpop.f32.mrf.mxu0
      %v3523 = vadd.f32 %v3314, %v3522
      %v3524 = vpop.f32.mrf.mxu0
      %v3525 = vpop.f32.mrf.mxu0
      %v3526 = vadd.f32 %v3317, %v3525
      %v3527 = vpop.f32.mrf.mxu0
      %3528 = vmatprep.mubr.bf16.mxu0 0
      %3529 = vmatmul.mubr.bf16.gmra.mxu0 %v3086
      %v3530 = vpop.f32.mrf.mxu0
      %v3531 = vadd.f32 %v3322, %v3530
      %v3532 = vpop.f32.mrf.mxu0
      %v3533 = vpop.f32.mrf.mxu0
      %v3534 = vadd.f32 %v3325, %v3533
      %v3535 = vpop.f32.mrf.mxu0
      %3536 = vmatprep.mubr.bf16.mxu0 0
      %3537 = vmatmul.mubr.bf16.gmra.mxu0 %v3087
      %v3538 = vpop.f32.mrf.mxu0
      %v3539 = vadd.f32 %v3330, %v3538
      %v3540 = vpop.f32.mrf.mxu0
      %v3541 = vpop.f32.mrf.mxu0
      %v3542 = vadd.f32 %v3333, %v3541
      %v3543 = vpop.f32.mrf.mxu0
      %3544 = vmatprep.mubr.bf16.mxu0 0
      %3545 = vmatmul.mubr.bf16.gmra.mxu0 %v3088
      %v3546 = vpop.f32.mrf.mxu0
      %v3547 = vadd.f32 %v3338, %v3546
      %v3548 = vpop.f32.mrf.mxu0
      %v3549 = vpop.f32.mrf.mxu0
      %v3550 = vadd.f32 %v3341, %v3549
      %v3551 = vpop.f32.mrf.mxu0
      %3552 = vmatprep.mubr.bf16.mxu0 0
      %3553 = vmatmul.mubr.bf16.gmra.mxu0 %v3089
      %v3554 = vpop.f32.mrf.mxu0
      %v3555 = vadd.f32 %v3346, %v3554
      %v3556 = vpop.f32.mrf.mxu0
      %v3557 = vpop.f32.mrf.mxu0
      %v3558 = vadd.f32 %v3349, %v3557
      %v3559 = vpop.f32.mrf.mxu0
      %3560 = vmatprep.mubr.bf16.mxu0 0
      %3561 = vmatmul.mubr.bf16.gmra.mxu0 %v3090
      %v3562 = vpop.f32.mrf.mxu0
      %v3563 = vadd.f32 %v3354, %v3562
      %v3564 = vpop.f32.mrf.mxu0
      %v3565 = vpop.f32.mrf.mxu0
      %v3566 = vadd.f32 %v3357, %v3565
      %v3567 = vpop.f32.mrf.mxu0
      %3568 = vmatprep.mubr.bf16.mxu0 0
      %3569 = vmatmul.mubr.bf16.gmra.mxu0 %v3091
      %v3570 = vpop.f32.mrf.mxu0
      %v3571 = vadd.f32 %v3362, %v3570
      %v3572 = vpop.f32.mrf.mxu0
      %v3573 = vpop.f32.mrf.mxu0
      %v3574 = vadd.f32 %v3365, %v3573
      %v3575 = vpop.f32.mrf.mxu0
      %3576 = vmatprep.mubr.bf16.mxu0 0
      %3577 = vmatmul.mubr.bf16.gmra.mxu0 %v3092
      %v3578 = vpop.f32.mrf.mxu0
      %v3579 = vadd.f32 %v3370, %v3578
      %v3580 = vpop.f32.mrf.mxu0
      %v3581 = vpop.f32.mrf.mxu0
      %v3582 = vadd.f32 %v3373, %v3581
      %v3583 = vpop.f32.mrf.mxu0
      %3584 = vmatprep.mubr.bf16.mxu0 0
      %3585 = vmatmul.mubr.bf16.gmra.mxu0 %v3093
      %v3586 = vpop.f32.mrf.mxu0
      %v3587 = vadd.f32 %v3378, %v3586
      %v3588 = vpop.f32.mrf.mxu0
      %v3589 = vpop.f32.mrf.mxu0
      %v3590 = vadd.f32 %v3381, %v3589
      %v3591 = vpop.f32.mrf.mxu0
      %3592 = vdwg.mxu0
      %v3593 = vld [vmem:[#allocation2 + $0x2] sm:$0xff]
      %v3594 = vld [vmem:[#allocation2 + $0xa] sm:$0xff]
      %v3595 = vld [vmem:[#allocation2 + $0x1a] sm:$0xff]
      %v3596 = vld [vmem:[#allocation2 + $0x22] sm:$0xff]
      %v3597 = vld [vmem:[#allocation2 + $0x32] sm:$0xff]
      %v3598 = vld [vmem:[#allocation2 + $0x3a] sm:$0xff]
      %v3599 = vld [vmem:[#allocation2 + $0x4a] sm:$0xff]
      %v3600 = vld [vmem:[#allocation2 + $0x52] sm:$0xff]
      %v3601 = vld [vmem:[#allocation2 + $0x62] sm:$0xff]
      %v3602 = vld [vmem:[#allocation2 + $0x6a] sm:$0xff]
      %v3603 = vld [vmem:[#allocation2 + $0x7a] sm:$0xff]
      %v3604 = vld [vmem:[#allocation2 + $0x82] sm:$0xff]
      %v3605 = vld [vmem:[#allocation2 + $0x92] sm:$0xff]
      %v3606 = vld [vmem:[#allocation2 + $0x9a] sm:$0xff]
      %v3607 = vld [vmem:[#allocation2 + $0xaa] sm:$0xff]
      %v3608 = vld [vmem:[#allocation2 + $0xb2] sm:$0xff]
      %v3609 = vld [vmem:[#allocation2 + $0xc2] sm:$0xff]
      %v3610 = vld [vmem:[#allocation2 + $0xca] sm:$0xff]
      %v3611 = vld [vmem:[#allocation2 + $0xda] sm:$0xff]
      %v3612 = vld [vmem:[#allocation2 + $0xe2] sm:$0xff]
      %v3613 = vld [vmem:[#allocation2 + $0xf2] sm:$0xff]
      %v3614 = vld [vmem:[#allocation2 + $0xfa] sm:$0xff]
      %v3615 = vld [vmem:[#allocation2 + $0x10a] sm:$0xff]
      %v3616 = vld [vmem:[#allocation2 + $0x112] sm:$0xff]
      %v3617 = vld [vmem:[#allocation2 + $0x122] sm:$0xff]
      %v3618 = vld [vmem:[#allocation2 + $0x12a] sm:$0xff]
      %v3619 = vld [vmem:[#allocation2 + $0x13a] sm:$0xff]
      %v3620 = vld [vmem:[#allocation2 + $0x142] sm:$0xff]
      %v3621 = vld [vmem:[#allocation2 + $0x152] sm:$0xff]
      %v3622 = vld [vmem:[#allocation2 + $0x15a] sm:$0xff]
      %v3623 = vld [vmem:[#allocation2 + $0x16a] sm:$0xff]
      %v3624 = vld [vmem:[#allocation2 + $0x172] sm:$0xff]
      %v3625 = vpack.c.bf16 %v3594, %v3593
      %v3626 = vpack.c.bf16 %v3596, %v3595
      %v3627 = vpack.c.bf16 %v3598, %v3597
      %v3628 = vpack.c.bf16 %v3600, %v3599
      %v3629 = vpack.c.bf16 %v3602, %v3601
      %v3630 = vpack.c.bf16 %v3604, %v3603
      %v3631 = vpack.c.bf16 %v3606, %v3605
      %v3632 = vpack.c.bf16 %v3608, %v3607
      %v3633 = vpack.c.bf16 %v3610, %v3609
      %v3634 = vpack.c.bf16 %v3612, %v3611
      %v3635 = vpack.c.bf16 %v3614, %v3613
      %v3636 = vpack.c.bf16 %v3616, %v3615
      %v3637 = vpack.c.bf16 %v3618, %v3617
      %v3638 = vpack.c.bf16 %v3620, %v3619
      %v3639 = vpack.c.bf16 %v3622, %v3621
      %v3640 = vpack.c.bf16 %v3624, %v3623
      %s3641 = scalar_lea.vmem %s2, 128
      %v3642 = vld [vmem:[%s3641] sm:$0xf]
      %v3643 = vld [vmem:[%s3641 + $0x4] sm:$0xf]
      %v3644 = vld [vmem:[%s3641 + $0x8] sm:$0xf]
      %v3645 = vld [vmem:[%s3641 + $0xc] sm:$0xf]
      %v3646 = vld [vmem:[%s3641 + $0x10] sm:$0xf]
      %v3647 = vld [vmem:[%s3641 + $0x14] sm:$0xf]
      %v3648 = vld [vmem:[%s3641 + $0x18] sm:$0xf]
      %v3649 = vld [vmem:[%s3641 + $0x1c] sm:$0xf]
      %v3650 = vld [vmem:[%s3641 + $0x20] sm:$0xf]
      %v3651 = vld [vmem:[%s3641 + $0x24] sm:$0xf]
      %v3652 = vld [vmem:[%s3641 + $0x28] sm:$0xf]
      %v3653 = vld [vmem:[%s3641 + $0x2c] sm:$0xf]
      %v3654 = vld [vmem:[%s3641 + $0x30] sm:$0xf]
      %v3655 = vld [vmem:[%s3641 + $0x34] sm:$0xf]
      %v3656 = vld [vmem:[%s3641 + $0x38] sm:$0xf]
      %v3657 = vld [vmem:[%s3641 + $0x3c] sm:$0xf]
      %v3674 = vunpack.c.l.b16 %v3642
      %v3675 = vunpack.c.l.b16 %v3643
      %v3676 = vunpack.c.l.b16 %v3644
      %v3677 = vunpack.c.l.b16 %v3645
      %v3678 = vunpack.c.l.b16 %v3646
      %v3679 = vunpack.c.l.b16 %v3647
      %v3680 = vunpack.c.l.b16 %v3648
      %v3681 = vunpack.c.l.b16 %v3649
      %v3682 = vunpack.c.l.b16 %v3650
      %v3683 = vunpack.c.l.b16 %v3651
      %v3684 = vunpack.c.l.b16 %v3652
      %v3685 = vunpack.c.l.b16 %v3653
      %v3686 = vunpack.c.l.b16 %v3654
      %v3687 = vunpack.c.l.b16 %v3655
      %v3688 = vunpack.c.l.b16 %v3656
      %v3689 = vunpack.c.l.b16 %v3657
      %v3690 = vpack.c.b16 %v3675, %v3674
      %v3691 = vpack.c.b16 %v3677, %v3676
      %v3692 = vpack.c.b16 %v3679, %v3678
      %v3693 = vpack.c.b16 %v3681, %v3680
      %v3694 = vpack.c.b16 %v3683, %v3682
      %v3695 = vpack.c.b16 %v3685, %v3684
      %v3696 = vpack.c.b16 %v3687, %v3686
      %v3697 = vpack.c.b16 %v3689, %v3688
      %3706 = vmatprep.subr.bf16.mxu0 0
      %3707 = vmatpush1.bf16.msra.mxu0 %v3697
      %3708 = vmatprep.subr.bf16.mxu0 0
      %3709 = vmatpush1.bf16.msra.mxu0 %v3696
      %3710 = vmatprep.subr.bf16.mxu0 0
      %3711 = vmatpush1.bf16.msra.mxu0 %v3695
      %3712 = vmatprep.subr.bf16.mxu0 0
      %3713 = vmatpush1.bf16.msra.mxu0 %v3694
      %3714 = vmatprep.subr.bf16.mxu0 0
      %3715 = vmatpush1.bf16.msra.mxu0 %v3693
      %3716 = vmatprep.subr.bf16.mxu0 0
      %3717 = vmatpush1.bf16.msra.mxu0 %v3692
      %3718 = vmatprep.subr.bf16.mxu0 0
      %3719 = vmatpush1.bf16.msra.mxu0 %v3691
      %3720 = vmatprep.subr.bf16.mxu0 0
      %3721 = vmatpush1.bf16.msra.mxu0 %v3690
      %3722 = vmatprep.subr.bf16.mxu0 0
      %3723 = vmatpush2.bf16.msra.mxu0 0
      %3724 = vmatprep.subr.bf16.mxu0 0
      %3725 = vmatpush2.bf16.msra.mxu0 0
      %3726 = vmatprep.subr.bf16.mxu0 0
      %3727 = vmatpush2.bf16.msra.mxu0 0
      %3728 = vmatprep.subr.bf16.mxu0 0
      %3729 = vmatpush2.bf16.msra.mxu0 0
      %3730 = vmatprep.subr.bf16.mxu0 0
      %3731 = vmatpush2.bf16.msra.mxu0 0
      %3732 = vmatprep.subr.bf16.mxu0 0
      %3733 = vmatpush2.bf16.msra.mxu0 0
      %3734 = vmatprep.subr.bf16.mxu0 0
      %3735 = vmatpush2.bf16.msra.mxu0 0
      %3736 = vmatprep.subr.bf16.mxu0 0
      %3737 = vmatpush2.bf16.msra.mxu0 0
      %3738 = vmatprep.mubr.bf16.mxu0 0
      %3739 = vmatmul.mubr.bf16.gmra.mxu0 %v3625
      %v3740 = vpop.f32.mrf.mxu0
      %v3741 = vadd.f32 0.0, %v3740
      %v3742 = vpop.f32.mrf.mxu0
      %v3743 = vpop.f32.mrf.mxu0
      %v3744 = vadd.f32 0.0, %v3743
      %v3745 = vpop.f32.mrf.mxu0
      %3746 = vmatprep.mubr.bf16.mxu0 0
      %3747 = vmatmul.mubr.bf16.gmra.mxu0 %v3626
      %v3748 = vpop.f32.mrf.mxu0
      %v3749 = vadd.f32 0.0, %v3748
      %v3750 = vpop.f32.mrf.mxu0
      %v3751 = vpop.f32.mrf.mxu0
      %v3752 = vadd.f32 0.0, %v3751
      %v3753 = vpop.f32.mrf.mxu0
      %3754 = vmatprep.mubr.bf16.mxu0 0
      %3755 = vmatmul.mubr.bf16.gmra.mxu0 %v3627
      %v3756 = vpop.f32.mrf.mxu0
      %v3757 = vadd.f32 0.0, %v3756
      %v3758 = vpop.f32.mrf.mxu0
      %v3759 = vpop.f32.mrf.mxu0
      %v3760 = vadd.f32 0.0, %v3759
      %v3761 = vpop.f32.mrf.mxu0
      %3762 = vmatprep.mubr.bf16.mxu0 0
      %3763 = vmatmul.mubr.bf16.gmra.mxu0 %v3628
      %v3764 = vpop.f32.mrf.mxu0
      %v3765 = vadd.f32 0.0, %v3764
      %v3766 = vpop.f32.mrf.mxu0
      %v3767 = vpop.f32.mrf.mxu0
      %v3768 = vadd.f32 0.0, %v3767
      %v3769 = vpop.f32.mrf.mxu0
      %3770 = vmatprep.mubr.bf16.mxu0 0
      %3771 = vmatmul.mubr.bf16.gmra.mxu0 %v3629
      %v3772 = vpop.f32.mrf.mxu0
      %v3773 = vadd.f32 0.0, %v3772
      %v3774 = vpop.f32.mrf.mxu0
      %v3775 = vpop.f32.mrf.mxu0
      %v3776 = vadd.f32 0.0, %v3775
      %v3777 = vpop.f32.mrf.mxu0
      %3778 = vmatprep.mubr.bf16.mxu0 0
      %3779 = vmatmul.mubr.bf16.gmra.mxu0 %v3630
      %v3780 = vpop.f32.mrf.mxu0
      %v3781 = vadd.f32 0.0, %v3780
      %v3782 = vpop.f32.mrf.mxu0
      %v3783 = vpop.f32.mrf.mxu0
      %v3784 = vadd.f32 0.0, %v3783
      %v3785 = vpop.f32.mrf.mxu0
      %3786 = vmatprep.mubr.bf16.mxu0 0
      %3787 = vmatmul.mubr.bf16.gmra.mxu0 %v3631
      %v3788 = vpop.f32.mrf.mxu0
      %v3789 = vadd.f32 0.0, %v3788
      %v3790 = vpop.f32.mrf.mxu0
      %v3791 = vpop.f32.mrf.mxu0
      %v3792 = vadd.f32 0.0, %v3791
      %v3793 = vpop.f32.mrf.mxu0
      %3794 = vmatprep.mubr.bf16.mxu0 0
      %3795 = vmatmul.mubr.bf16.gmra.mxu0 %v3632
      %v3796 = vpop.f32.mrf.mxu0
      %v3797 = vadd.f32 0.0, %v3796
      %v3798 = vpop.f32.mrf.mxu0
      %v3799 = vpop.f32.mrf.mxu0
      %v3800 = vadd.f32 0.0, %v3799
      %v3801 = vpop.f32.mrf.mxu0
      %3802 = vmatprep.mubr.bf16.mxu0 0
      %3803 = vmatmul.mubr.bf16.gmra.mxu0 %v3633
      %v3804 = vpop.f32.mrf.mxu0
      %v3805 = vadd.f32 0.0, %v3804
      %v3806 = vpop.f32.mrf.mxu0
      %v3807 = vpop.f32.mrf.mxu0
      %v3808 = vadd.f32 0.0, %v3807
      %v3809 = vpop.f32.mrf.mxu0
      %3810 = vmatprep.mubr.bf16.mxu0 0
      %3811 = vmatmul.mubr.bf16.gmra.mxu0 %v3634
      %v3812 = vpop.f32.mrf.mxu0
      %v3813 = vadd.f32 0.0, %v3812
      %v3814 = vpop.f32.mrf.mxu0
      %v3815 = vpop.f32.mrf.mxu0
      %v3816 = vadd.f32 0.0, %v3815
      %v3817 = vpop.f32.mrf.mxu0
      %3818 = vmatprep.mubr.bf16.mxu0 0
      %3819 = vmatmul.mubr.bf16.gmra.mxu0 %v3635
      %v3820 = vpop.f32.mrf.mxu0
      %v3821 = vadd.f32 0.0, %v3820
      %v3822 = vpop.f32.mrf.mxu0
      %v3823 = vpop.f32.mrf.mxu0
      %v3824 = vadd.f32 0.0, %v3823
      %v3825 = vpop.f32.mrf.mxu0
      %3826 = vmatprep.mubr.bf16.mxu0 0
      %3827 = vmatmul.mubr.bf16.gmra.mxu0 %v3636
      %v3828 = vpop.f32.mrf.mxu0
      %v3829 = vadd.f32 0.0, %v3828
      %v3830 = vpop.f32.mrf.mxu0
      %v3831 = vpop.f32.mrf.mxu0
      %v3832 = vadd.f32 0.0, %v3831
      %v3833 = vpop.f32.mrf.mxu0
      %3834 = vmatprep.mubr.bf16.mxu0 0
      %3835 = vmatmul.mubr.bf16.gmra.mxu0 %v3637
      %v3836 = vpop.f32.mrf.mxu0
      %v3837 = vadd.f32 0.0, %v3836
      %v3838 = vpop.f32.mrf.mxu0
      %v3839 = vpop.f32.mrf.mxu0
      %v3840 = vadd.f32 0.0, %v3839
      %v3841 = vpop.f32.mrf.mxu0
      %3842 = vmatprep.mubr.bf16.mxu0 0
      %3843 = vmatmul.mubr.bf16.gmra.mxu0 %v3638
      %v3844 = vpop.f32.mrf.mxu0
      %v3845 = vadd.f32 0.0, %v3844
      %v3846 = vpop.f32.mrf.mxu0
      %v3847 = vpop.f32.mrf.mxu0
      %v3848 = vadd.f32 0.0, %v3847
      %v3849 = vpop.f32.mrf.mxu0
      %3850 = vmatprep.mubr.bf16.mxu0 0
      %3851 = vmatmul.mubr.bf16.gmra.mxu0 %v3639
      %v3852 = vpop.f32.mrf.mxu0
      %v3853 = vadd.f32 0.0, %v3852
      %v3854 = vpop.f32.mrf.mxu0
      %v3855 = vpop.f32.mrf.mxu0
      %v3856 = vadd.f32 0.0, %v3855
      %v3857 = vpop.f32.mrf.mxu0
      %3858 = vmatprep.mubr.bf16.mxu0 0
      %3859 = vmatmul.mubr.bf16.gmra.mxu0 %v3640
      %v3860 = vpop.f32.mrf.mxu0
      %v3861 = vadd.f32 0.0, %v3860
      %v3862 = vpop.f32.mrf.mxu0
      %v3863 = vpop.f32.mrf.mxu0
      %v3864 = vadd.f32 0.0, %v3863
      %v3865 = vpop.f32.mrf.mxu0
      %3866 = vdwg.mxu0
      %v3867 = vadd.f32 %v3467, %v3741
      %v3868 = vadd.f32 %v3470, %v3744
      %v3869 = vadd.f32 %v3475, %v3749
      %v3870 = vadd.f32 %v3478, %v3752
      %v3871 = vadd.f32 %v3483, %v3757
      %v3872 = vadd.f32 %v3486, %v3760
      %v3873 = vadd.f32 %v3491, %v3765
      %v3874 = vadd.f32 %v3494, %v3768
      %v3875 = vadd.f32 %v3499, %v3773
      %v3876 = vadd.f32 %v3502, %v3776
      %v3877 = vadd.f32 %v3507, %v3781
      %v3878 = vadd.f32 %v3510, %v3784
      %v3879 = vadd.f32 %v3515, %v3789
      %v3880 = vadd.f32 %v3518, %v3792
      %v3881 = vadd.f32 %v3523, %v3797
      %v3882 = vadd.f32 %v3526, %v3800
      %v3883 = vadd.f32 %v3531, %v3805
      %v3884 = vadd.f32 %v3534, %v3808
      %v3885 = vadd.f32 %v3539, %v3813
      %v3886 = vadd.f32 %v3542, %v3816
      %v3887 = vadd.f32 %v3547, %v3821
      %v3888 = vadd.f32 %v3550, %v3824
      %v3889 = vadd.f32 %v3555, %v3829
      %v3890 = vadd.f32 %v3558, %v3832
      %v3891 = vadd.f32 %v3563, %v3837
      %v3892 = vadd.f32 %v3566, %v3840
      %v3893 = vadd.f32 %v3571, %v3845
      %v3894 = vadd.f32 %v3574, %v3848
      %v3895 = vadd.f32 %v3579, %v3853
      %v3896 = vadd.f32 %v3582, %v3856
      %v3897 = vadd.f32 %v3587, %v3861
      %v3898 = vadd.f32 %v3590, %v3864
      %v3899 = vld [vmem:[%s3013] sm:$0xff]
      %v3900 = vld [vmem:[%s3013 + $0x8] sm:$0xff]
      %v3901 = vld [vmem:[%s3013 + $0x18] sm:$0xff]
      %v3902 = vld [vmem:[%s3013 + $0x20] sm:$0xff]
      %v3903 = vld [vmem:[%s3013 + $0x30] sm:$0xff]
      %v3904 = vld [vmem:[%s3013 + $0x38] sm:$0xff]
      %v3905 = vld [vmem:[%s3013 + $0x48] sm:$0xff]
      %v3906 = vld [vmem:[%s3013 + $0x50] sm:$0xff]
      %v3907 = vld [vmem:[%s3013 + $0x60] sm:$0xff]
      %v3908 = vld [vmem:[%s3013 + $0x68] sm:$0xff]
      %v3909 = vld [vmem:[%s3013 + $0x78] sm:$0xff]
      %v3910 = vld [vmem:[%s3013 + $0x80] sm:$0xff]
      %v3911 = vld [vmem:[%s3013 + $0x90] sm:$0xff]
      %v3912 = vld [vmem:[%s3013 + $0x98] sm:$0xff]
      %v3913 = vld [vmem:[%s3013 + $0xa8] sm:$0xff]
      %v3914 = vld [vmem:[%s3013 + $0xb0] sm:$0xff]
      %v3915 = vld [vmem:[%s3013 + $0xc0] sm:$0xff]
      %v3916 = vld [vmem:[%s3013 + $0xc8] sm:$0xff]
      %v3917 = vld [vmem:[%s3013 + $0xd8] sm:$0xff]
      %v3918 = vld [vmem:[%s3013 + $0xe0] sm:$0xff]
      %v3919 = vld [vmem:[%s3013 + $0xf0] sm:$0xff]
      %v3920 = vld [vmem:[%s3013 + $0xf8] sm:$0xff]
      %v3921 = vld [vmem:[%s3013 + $0x108] sm:$0xff]
      %v3922 = vld [vmem:[%s3013 + $0x110] sm:$0xff]
      %v3923 = vld [vmem:[%s3013 + $0x120] sm:$0xff]
      %v3924 = vld [vmem:[%s3013 + $0x128] sm:$0xff]
      %v3925 = vld [vmem:[%s3013 + $0x138] sm:$0xff]
      %v3926 = vld [vmem:[%s3013 + $0x140] sm:$0xff]
      %v3927 = vld [vmem:[%s3013 + $0x150] sm:$0xff]
      %v3928 = vld [vmem:[%s3013 + $0x158] sm:$0xff]
      %v3929 = vld [vmem:[%s3013 + $0x168] sm:$0xff]
      %v3930 = vld [vmem:[%s3013 + $0x170] sm:$0xff]
      %v3931 = vpack.c.bf16 %v3900, %v3899
      %v3932 = vpack.c.bf16 %v3902, %v3901
      %v3933 = vpack.c.bf16 %v3904, %v3903
      %v3934 = vpack.c.bf16 %v3906, %v3905
      %v3935 = vpack.c.bf16 %v3908, %v3907
      %v3936 = vpack.c.bf16 %v3910, %v3909
      %v3937 = vpack.c.bf16 %v3912, %v3911
      %v3938 = vpack.c.bf16 %v3914, %v3913
      %v3939 = vpack.c.bf16 %v3916, %v3915
      %v3940 = vpack.c.bf16 %v3918, %v3917
      %v3941 = vpack.c.bf16 %v3920, %v3919
      %v3942 = vpack.c.bf16 %v3922, %v3921
      %v3943 = vpack.c.bf16 %v3924, %v3923
      %v3944 = vpack.c.bf16 %v3926, %v3925
      %v3945 = vpack.c.bf16 %v3928, %v3927
      %v3946 = vpack.c.bf16 %v3930, %v3929
      %s3947 = scalar_lea.vmem %s2, 192
      %v3948 = vld [vmem:[%s3947] sm:$0xf]
      %v3949 = vld [vmem:[%s3947 + $0x4] sm:$0xf]
      %v3950 = vld [vmem:[%s3947 + $0x8] sm:$0xf]
      %v3951 = vld [vmem:[%s3947 + $0xc] sm:$0xf]
      %v3952 = vld [vmem:[%s3947 + $0x10] sm:$0xf]
      %v3953 = vld [vmem:[%s3947 + $0x14] sm:$0xf]
      %v3954 = vld [vmem:[%s3947 + $0x18] sm:$0xf]
      %v3955 = vld [vmem:[%s3947 + $0x1c] sm:$0xf]
      %v3956 = vld [vmem:[%s3947 + $0x20] sm:$0xf]
      %v3957 = vld [vmem:[%s3947 + $0x24] sm:$0xf]
      %v3958 = vld [vmem:[%s3947 + $0x28] sm:$0xf]
      %v3959 = vld [vmem:[%s3947 + $0x2c] sm:$0xf]
      %v3960 = vld [vmem:[%s3947 + $0x30] sm:$0xf]
      %v3961 = vld [vmem:[%s3947 + $0x34] sm:$0xf]
      %v3962 = vld [vmem:[%s3947 + $0x38] sm:$0xf]
      %v3963 = vld [vmem:[%s3947 + $0x3c] sm:$0xf]
      %v3980 = vunpack.c.l.b16 %v3948
      %v3981 = vunpack.c.l.b16 %v3949
      %v3982 = vunpack.c.l.b16 %v3950
      %v3983 = vunpack.c.l.b16 %v3951
      %v3984 = vunpack.c.l.b16 %v3952
      %v3985 = vunpack.c.l.b16 %v3953
      %v3986 = vunpack.c.l.b16 %v3954
      %v3987 = vunpack.c.l.b16 %v3955
      %v3988 = vunpack.c.l.b16 %v3956
      %v3989 = vunpack.c.l.b16 %v3957
      %v3990 = vunpack.c.l.b16 %v3958
      %v3991 = vunpack.c.l.b16 %v3959
      %v3992 = vunpack.c.l.b16 %v3960
      %v3993 = vunpack.c.l.b16 %v3961
      %v3994 = vunpack.c.l.b16 %v3962
      %v3995 = vunpack.c.l.b16 %v3963
      %v3996 = vpack.c.b16 %v3981, %v3980
      %v3997 = vpack.c.b16 %v3983, %v3982
      %v3998 = vpack.c.b16 %v3985, %v3984
      %v3999 = vpack.c.b16 %v3987, %v3986
      %v4000 = vpack.c.b16 %v3989, %v3988
      %v4001 = vpack.c.b16 %v3991, %v3990
      %v4002 = vpack.c.b16 %v3993, %v3992
      %v4003 = vpack.c.b16 %v3995, %v3994
      %4012 = vmatprep.subr.bf16.mxu0 0
      %4013 = vmatpush1.bf16.msra.mxu0 %v4003
      %4014 = vmatprep.subr.bf16.mxu0 0
      %4015 = vmatpush1.bf16.msra.mxu0 %v4002
      %4016 = vmatprep.subr.bf16.mxu0 0
      %4017 = vmatpush1.bf16.msra.mxu0 %v4001
      %4018 = vmatprep.subr.bf16.mxu0 0
      %4019 = vmatpush1.bf16.msra.mxu0 %v4000
      %4020 = vmatprep.subr.bf16.mxu0 0
      %4021 = vmatpush1.bf16.msra.mxu0 %v3999
      %4022 = vmatprep.subr.bf16.mxu0 0
      %4023 = vmatpush1.bf16.msra.mxu0 %v3998
      %4024 = vmatprep.subr.bf16.mxu0 0
      %4025 = vmatpush1.bf16.msra.mxu0 %v3997
      %4026 = vmatprep.subr.bf16.mxu0 0
      %4027 = vmatpush1.bf16.msra.mxu0 %v3996
      %4028 = vmatprep.subr.bf16.mxu0 0
      %4029 = vmatpush2.bf16.msra.mxu0 0
      %4030 = vmatprep.subr.bf16.mxu0 0
      %4031 = vmatpush2.bf16.msra.mxu0 0
      %4032 = vmatprep.subr.bf16.mxu0 0
      %4033 = vmatpush2.bf16.msra.mxu0 0
      %4034 = vmatprep.subr.bf16.mxu0 0
      %4035 = vmatpush2.bf16.msra.mxu0 0
      %4036 = vmatprep.subr.bf16.mxu0 0
      %4037 = vmatpush2.bf16.msra.mxu0 0
      %4038 = vmatprep.subr.bf16.mxu0 0
      %4039 = vmatpush2.bf16.msra.mxu0 0
      %4040 = vmatprep.subr.bf16.mxu0 0
      %4041 = vmatpush2.bf16.msra.mxu0 0
      %4042 = vmatprep.subr.bf16.mxu0 0
      %4043 = vmatpush2.bf16.msra.mxu0 0
      %4044 = vmatprep.mubr.bf16.mxu0 0
      %4045 = vmatmul.mubr.bf16.gmra.mxu0 %v3931
      %v4046 = vpop.f32.mrf.mxu0
      %v4047 = vadd.f32 0.0, %v4046
      %v4048 = vpop.f32.mrf.mxu0
      %v4049 = vpop.f32.mrf.mxu0
      %v4050 = vadd.f32 0.0, %v4049
      %v4051 = vpop.f32.mrf.mxu0
      %4052 = vmatprep.mubr.bf16.mxu0 0
      %4053 = vmatmul.mubr.bf16.gmra.mxu0 %v3932
      %v4054 = vpop.f32.mrf.mxu0
      %v4055 = vadd.f32 0.0, %v4054
      %v4056 = vpop.f32.mrf.mxu0
      %v4057 = vpop.f32.mrf.mxu0
      %v4058 = vadd.f32 0.0, %v4057
      %v4059 = vpop.f32.mrf.mxu0
      %4060 = vmatprep.mubr.bf16.mxu0 0
      %4061 = vmatmul.mubr.bf16.gmra.mxu0 %v3933
      %v4062 = vpop.f32.mrf.mxu0
      %v4063 = vadd.f32 0.0, %v4062
      %v4064 = vpop.f32.mrf.mxu0
      %v4065 = vpop.f32.mrf.mxu0
      %v4066 = vadd.f32 0.0, %v4065
      %v4067 = vpop.f32.mrf.mxu0
      %4068 = vmatprep.mubr.bf16.mxu0 0
      %4069 = vmatmul.mubr.bf16.gmra.mxu0 %v3934
      %v4070 = vpop.f32.mrf.mxu0
      %v4071 = vadd.f32 0.0, %v4070
      %v4072 = vpop.f32.mrf.mxu0
      %v4073 = vpop.f32.mrf.mxu0
      %v4074 = vadd.f32 0.0, %v4073
      %v4075 = vpop.f32.mrf.mxu0
      %4076 = vmatprep.mubr.bf16.mxu0 0
      %4077 = vmatmul.mubr.bf16.gmra.mxu0 %v3935
      %v4078 = vpop.f32.mrf.mxu0
      %v4079 = vadd.f32 0.0, %v4078
      %v4080 = vpop.f32.mrf.mxu0
      %v4081 = vpop.f32.mrf.mxu0
      %v4082 = vadd.f32 0.0, %v4081
      %v4083 = vpop.f32.mrf.mxu0
      %4084 = vmatprep.mubr.bf16.mxu0 0
      %4085 = vmatmul.mubr.bf16.gmra.mxu0 %v3936
      %v4086 = vpop.f32.mrf.mxu0
      %v4087 = vadd.f32 0.0, %v4086
      %v4088 = vpop.f32.mrf.mxu0
      %v4089 = vpop.f32.mrf.mxu0
      %v4090 = vadd.f32 0.0, %v4089
      %v4091 = vpop.f32.mrf.mxu0
      %4092 = vmatprep.mubr.bf16.mxu0 0
      %4093 = vmatmul.mubr.bf16.gmra.mxu0 %v3937
      %v4094 = vpop.f32.mrf.mxu0
      %v4095 = vadd.f32 0.0, %v4094
      %v4096 = vpop.f32.mrf.mxu0
      %v4097 = vpop.f32.mrf.mxu0
      %v4098 = vadd.f32 0.0, %v4097
      %v4099 = vpop.f32.mrf.mxu0
      %4100 = vmatprep.mubr.bf16.mxu0 0
      %4101 = vmatmul.mubr.bf16.gmra.mxu0 %v3938
      %v4102 = vpop.f32.mrf.mxu0
      %v4103 = vadd.f32 0.0, %v4102
      %v4104 = vpop.f32.mrf.mxu0
      %v4105 = vpop.f32.mrf.mxu0
      %v4106 = vadd.f32 0.0, %v4105
      %v4107 = vpop.f32.mrf.mxu0
      %4108 = vmatprep.mubr.bf16.mxu0 0
      %4109 = vmatmul.mubr.bf16.gmra.mxu0 %v3939
      %v4110 = vpop.f32.mrf.mxu0
      %v4111 = vadd.f32 0.0, %v4110
      %v4112 = vpop.f32.mrf.mxu0
      %v4113 = vpop.f32.mrf.mxu0
      %v4114 = vadd.f32 0.0, %v4113
      %v4115 = vpop.f32.mrf.mxu0
      %4116 = vmatprep.mubr.bf16.mxu0 0
      %4117 = vmatmul.mubr.bf16.gmra.mxu0 %v3940
      %v4118 = vpop.f32.mrf.mxu0
      %v4119 = vadd.f32 0.0, %v4118
      %v4120 = vpop.f32.mrf.mxu0
      %v4121 = vpop.f32.mrf.mxu0
      %v4122 = vadd.f32 0.0, %v4121
      %v4123 = vpop.f32.mrf.mxu0
      %4124 = vmatprep.mubr.bf16.mxu0 0
      %4125 = vmatmul.mubr.bf16.gmra.mxu0 %v3941
      %v4126 = vpop.f32.mrf.mxu0
      %v4127 = vadd.f32 0.0, %v4126
      %v4128 = vpop.f32.mrf.mxu0
      %v4129 = vpop.f32.mrf.mxu0
      %v4130 = vadd.f32 0.0, %v4129
      %v4131 = vpop.f32.mrf.mxu0
      %4132 = vmatprep.mubr.bf16.mxu0 0
      %4133 = vmatmul.mubr.bf16.gmra.mxu0 %v3942
      %v4134 = vpop.f32.mrf.mxu0
      %v4135 = vadd.f32 0.0, %v4134
      %v4136 = vpop.f32.mrf.mxu0
      %v4137 = vpop.f32.mrf.mxu0
      %v4138 = vadd.f32 0.0, %v4137
      %v4139 = vpop.f32.mrf.mxu0
      %4140 = vmatprep.mubr.bf16.mxu0 0
      %4141 = vmatmul.mubr.bf16.gmra.mxu0 %v3943
      %v4142 = vpop.f32.mrf.mxu0
      %v4143 = vadd.f32 0.0, %v4142
      %v4144 = vpop.f32.mrf.mxu0
      %v4145 = vpop.f32.mrf.mxu0
      %v4146 = vadd.f32 0.0, %v4145
      %v4147 = vpop.f32.mrf.mxu0
      %4148 = vmatprep.mubr.bf16.mxu0 0
      %4149 = vmatmul.mubr.bf16.gmra.mxu0 %v3944
      %v4150 = vpop.f32.mrf.mxu0
      %v4151 = vadd.f32 0.0, %v4150
      %v4152 = vpop.f32.mrf.mxu0
      %v4153 = vpop.f32.mrf.mxu0
      %v4154 = vadd.f32 0.0, %v4153
      %v4155 = vpop.f32.mrf.mxu0
      %4156 = vmatprep.mubr.bf16.mxu0 0
      %4157 = vmatmul.mubr.bf16.gmra.mxu0 %v3945
      %v4158 = vpop.f32.mrf.mxu0
      %v4159 = vadd.f32 0.0, %v4158
      %v4160 = vpop.f32.mrf.mxu0
      %v4161 = vpop.f32.mrf.mxu0
      %v4162 = vadd.f32 0.0, %v4161
      %v4163 = vpop.f32.mrf.mxu0
      %4164 = vmatprep.mubr.bf16.mxu0 0
      %4165 = vmatmul.mubr.bf16.gmra.mxu0 %v3946
      %v4166 = vpop.f32.mrf.mxu0
      %v4167 = vadd.f32 0.0, %v4166
      %v4168 = vpop.f32.mrf.mxu0
      %v4169 = vpop.f32.mrf.mxu0
      %v4170 = vadd.f32 0.0, %v4169
      %v4171 = vpop.f32.mrf.mxu0
      %4172 = vdwg.mxu0
      %v4173 = vadd.f32 %v3867, %v4047
      %v4174 = vadd.f32 %v3868, %v4050
      %v4175 = vadd.f32 %v3869, %v4055
      %v4176 = vadd.f32 %v3870, %v4058
      %v4177 = vadd.f32 %v3871, %v4063
      %v4178 = vadd.f32 %v3872, %v4066
      %v4179 = vadd.f32 %v3873, %v4071
      %v4180 = vadd.f32 %v3874, %v4074
      %v4181 = vadd.f32 %v3875, %v4079
      %v4182 = vadd.f32 %v3876, %v4082
      %v4183 = vadd.f32 %v3877, %v4087
      %v4184 = vadd.f32 %v3878, %v4090
      %v4185 = vadd.f32 %v3879, %v4095
      %v4186 = vadd.f32 %v3880, %v4098
      %v4187 = vadd.f32 %v3881, %v4103
      %v4188 = vadd.f32 %v3882, %v4106
      %v4189 = vadd.f32 %v3883, %v4111
      %v4190 = vadd.f32 %v3884, %v4114
      %v4191 = vadd.f32 %v3885, %v4119
      %v4192 = vadd.f32 %v3886, %v4122
      %v4193 = vadd.f32 %v3887, %v4127
      %v4194 = vadd.f32 %v3888, %v4130
      %v4195 = vadd.f32 %v3889, %v4135
      %v4196 = vadd.f32 %v3890, %v4138
      %v4197 = vadd.f32 %v3891, %v4143
      %v4198 = vadd.f32 %v3892, %v4146
      %v4199 = vadd.f32 %v3893, %v4151
      %v4200 = vadd.f32 %v3894, %v4154
      %v4201 = vadd.f32 %v3895, %v4159
      %v4202 = vadd.f32 %v3896, %v4162
      %v4203 = vadd.f32 %v3897, %v4167
      %v4204 = vadd.f32 %v3898, %v4170
      %v4205 = vld [vmem:[%s3013 + $0x1] sm:$0xff]
      %v4206 = vld [vmem:[%s3013 + $0x9] sm:$0xff]
      %v4207 = vld [vmem:[%s3013 + $0x19] sm:$0xff]
      %v4208 = vld [vmem:[%s3013 + $0x21] sm:$0xff]
      %v4209 = vld [vmem:[%s3013 + $0x31] sm:$0xff]
      %v4210 = vld [vmem:[%s3013 + $0x39] sm:$0xff]
      %v4211 = vld [vmem:[%s3013 + $0x49] sm:$0xff]
      %v4212 = vld [vmem:[%s3013 + $0x51] sm:$0xff]
      %v4213 = vld [vmem:[%s3013 + $0x61] sm:$0xff]
      %v4214 = vld [vmem:[%s3013 + $0x69] sm:$0xff]
      %v4215 = vld [vmem:[%s3013 + $0x79] sm:$0xff]
      %v4216 = vld [vmem:[%s3013 + $0x81] sm:$0xff]
      %v4217 = vld [vmem:[%s3013 + $0x91] sm:$0xff]
      %v4218 = vld [vmem:[%s3013 + $0x99] sm:$0xff]
      %v4219 = vld [vmem:[%s3013 + $0xa9] sm:$0xff]
      %v4220 = vld [vmem:[%s3013 + $0xb1] sm:$0xff]
      %v4221 = vld [vmem:[%s3013 + $0xc1] sm:$0xff]
      %v4222 = vld [vmem:[%s3013 + $0xc9] sm:$0xff]
      %v4223 = vld [vmem:[%s3013 + $0xd9] sm:$0xff]
      %v4224 = vld [vmem:[%s3013 + $0xe1] sm:$0xff]
      %v4225 = vld [vmem:[%s3013 + $0xf1] sm:$0xff]
      %v4226 = vld [vmem:[%s3013 + $0xf9] sm:$0xff]
      %v4227 = vld [vmem:[%s3013 + $0x109] sm:$0xff]
      %v4228 = vld [vmem:[%s3013 + $0x111] sm:$0xff]
      %v4229 = vld [vmem:[%s3013 + $0x121] sm:$0xff]
      %v4230 = vld [vmem:[%s3013 + $0x129] sm:$0xff]
      %v4231 = vld [vmem:[%s3013 + $0x139] sm:$0xff]
      %v4232 = vld [vmem:[%s3013 + $0x141] sm:$0xff]
      %v4233 = vld [vmem:[%s3013 + $0x151] sm:$0xff]
      %v4234 = vld [vmem:[%s3013 + $0x159] sm:$0xff]
      %v4235 = vld [vmem:[%s3013 + $0x169] sm:$0xff]
      %v4236 = vld [vmem:[%s3013 + $0x171] sm:$0xff]
      %v4237 = vpack.c.bf16 %v4206, %v4205
      %v4238 = vpack.c.bf16 %v4208, %v4207
      %v4239 = vpack.c.bf16 %v4210, %v4209
      %v4240 = vpack.c.bf16 %v4212, %v4211
      %v4241 = vpack.c.bf16 %v4214, %v4213
      %v4242 = vpack.c.bf16 %v4216, %v4215
      %v4243 = vpack.c.bf16 %v4218, %v4217
      %v4244 = vpack.c.bf16 %v4220, %v4219
      %v4245 = vpack.c.bf16 %v4222, %v4221
      %v4246 = vpack.c.bf16 %v4224, %v4223
      %v4247 = vpack.c.bf16 %v4226, %v4225
      %v4248 = vpack.c.bf16 %v4228, %v4227
      %v4249 = vpack.c.bf16 %v4230, %v4229
      %v4250 = vpack.c.bf16 %v4232, %v4231
      %v4251 = vpack.c.bf16 %v4234, %v4233
      %v4252 = vpack.c.bf16 %v4236, %v4235
      %s4253 = scalar_lea.vmem %s2, 256
      %v4254 = vld [vmem:[%s4253] sm:$0xf]
      %v4255 = vld [vmem:[%s4253 + $0x4] sm:$0xf]
      %v4256 = vld [vmem:[%s4253 + $0x8] sm:$0xf]
      %v4257 = vld [vmem:[%s4253 + $0xc] sm:$0xf]
      %v4258 = vld [vmem:[%s4253 + $0x10] sm:$0xf]
      %v4259 = vld [vmem:[%s4253 + $0x14] sm:$0xf]
      %v4260 = vld [vmem:[%s4253 + $0x18] sm:$0xf]
      %v4261 = vld [vmem:[%s4253 + $0x1c] sm:$0xf]
      %v4262 = vld [vmem:[%s4253 + $0x20] sm:$0xf]
      %v4263 = vld [vmem:[%s4253 + $0x24] sm:$0xf]
      %v4264 = vld [vmem:[%s4253 + $0x28] sm:$0xf]
      %v4265 = vld [vmem:[%s4253 + $0x2c] sm:$0xf]
      %v4266 = vld [vmem:[%s4253 + $0x30] sm:$0xf]
      %v4267 = vld [vmem:[%s4253 + $0x34] sm:$0xf]
      %v4268 = vld [vmem:[%s4253 + $0x38] sm:$0xf]
      %v4269 = vld [vmem:[%s4253 + $0x3c] sm:$0xf]
      %v4286 = vunpack.c.l.b16 %v4254
      %v4287 = vunpack.c.l.b16 %v4255
      %v4288 = vunpack.c.l.b16 %v4256
      %v4289 = vunpack.c.l.b16 %v4257
      %v4290 = vunpack.c.l.b16 %v4258
      %v4291 = vunpack.c.l.b16 %v4259
      %v4292 = vunpack.c.l.b16 %v4260
      %v4293 = vunpack.c.l.b16 %v4261
      %v4294 = vunpack.c.l.b16 %v4262
      %v4295 = vunpack.c.l.b16 %v4263
      %v4296 = vunpack.c.l.b16 %v4264
      %v4297 = vunpack.c.l.b16 %v4265
      %v4298 = vunpack.c.l.b16 %v4266
      %v4299 = vunpack.c.l.b16 %v4267
      %v4300 = vunpack.c.l.b16 %v4268
      %v4301 = vunpack.c.l.b16 %v4269
      %v4302 = vpack.c.b16 %v4287, %v4286
      %v4303 = vpack.c.b16 %v4289, %v4288
      %v4304 = vpack.c.b16 %v4291, %v4290
      %v4305 = vpack.c.b16 %v4293, %v4292
      %v4306 = vpack.c.b16 %v4295, %v4294
      %v4307 = vpack.c.b16 %v4297, %v4296
      %v4308 = vpack.c.b16 %v4299, %v4298
      %v4309 = vpack.c.b16 %v4301, %v4300
      %4318 = vmatprep.subr.bf16.mxu0 0
      %4319 = vmatpush1.bf16.msra.mxu0 %v4309
      %4320 = vmatprep.subr.bf16.mxu0 0
      %4321 = vmatpush1.bf16.msra.mxu0 %v4308
      %4322 = vmatprep.subr.bf16.mxu0 0
      %4323 = vmatpush1.bf16.msra.mxu0 %v4307
      %4324 = vmatprep.subr.bf16.mxu0 0
      %4325 = vmatpush1.bf16.msra.mxu0 %v4306
      %4326 = vmatprep.subr.bf16.mxu0 0
      %4327 = vmatpush1.bf16.msra.mxu0 %v4305
      %4328 = vmatprep.subr.bf16.mxu0 0
      %4329 = vmatpush1.bf16.msra.mxu0 %v4304
      %4330 = vmatprep.subr.bf16.mxu0 0
      %4331 = vmatpush1.bf16.msra.mxu0 %v4303
      %4332 = vmatprep.subr.bf16.mxu0 0
      %4333 = vmatpush1.bf16.msra.mxu0 %v4302
      %4334 = vmatprep.subr.bf16.mxu0 0
      %4335 = vmatpush2.bf16.msra.mxu0 0
      %4336 = vmatprep.subr.bf16.mxu0 0
      %4337 = vmatpush2.bf16.msra.mxu0 0
      %4338 = vmatprep.subr.bf16.mxu0 0
      %4339 = vmatpush2.bf16.msra.mxu0 0
      %4340 = vmatprep.subr.bf16.mxu0 0
      %4341 = vmatpush2.bf16.msra.mxu0 0
      %4342 = vmatprep.subr.bf16.mxu0 0
      %4343 = vmatpush2.bf16.msra.mxu0 0
      %4344 = vmatprep.subr.bf16.mxu0 0
      %4345 = vmatpush2.bf16.msra.mxu0 0
      %4346 = vmatprep.subr.bf16.mxu0 0
      %4347 = vmatpush2.bf16.msra.mxu0 0
      %4348 = vmatprep.subr.bf16.mxu0 0
      %4349 = vmatpush2.bf16.msra.mxu0 0
      %4350 = vmatprep.mubr.bf16.mxu0 0
      %4351 = vmatmul.mubr.bf16.gmra.mxu0 %v4237
      %v4352 = vpop.f32.mrf.mxu0
      %v4353 = vadd.f32 0.0, %v4352
      %v4354 = vpop.f32.mrf.mxu0
      %v4355 = vpop.f32.mrf.mxu0
      %v4356 = vadd.f32 0.0, %v4355
      %v4357 = vpop.f32.mrf.mxu0
      %4358 = vmatprep.mubr.bf16.mxu0 0
      %4359 = vmatmul.mubr.bf16.gmra.mxu0 %v4238
      %v4360 = vpop.f32.mrf.mxu0
      %v4361 = vadd.f32 0.0, %v4360
      %v4362 = vpop.f32.mrf.mxu0
      %v4363 = vpop.f32.mrf.mxu0
      %v4364 = vadd.f32 0.0, %v4363
      %v4365 = vpop.f32.mrf.mxu0
      %4366 = vmatprep.mubr.bf16.mxu0 0
      %4367 = vmatmul.mubr.bf16.gmra.mxu0 %v4239
      %v4368 = vpop.f32.mrf.mxu0
      %v4369 = vadd.f32 0.0, %v4368
      %v4370 = vpop.f32.mrf.mxu0
      %v4371 = vpop.f32.mrf.mxu0
      %v4372 = vadd.f32 0.0, %v4371
      %v4373 = vpop.f32.mrf.mxu0
      %4374 = vmatprep.mubr.bf16.mxu0 0
      %4375 = vmatmul.mubr.bf16.gmra.mxu0 %v4240
      %v4376 = vpop.f32.mrf.mxu0
      %v4377 = vadd.f32 0.0, %v4376
      %v4378 = vpop.f32.mrf.mxu0
      %v4379 = vpop.f32.mrf.mxu0
      %v4380 = vadd.f32 0.0, %v4379
      %v4381 = vpop.f32.mrf.mxu0
      %4382 = vmatprep.mubr.bf16.mxu0 0
      %4383 = vmatmul.mubr.bf16.gmra.mxu0 %v4241
      %v4384 = vpop.f32.mrf.mxu0
      %v4385 = vadd.f32 0.0, %v4384
      %v4386 = vpop.f32.mrf.mxu0
      %v4387 = vpop.f32.mrf.mxu0
      %v4388 = vadd.f32 0.0, %v4387
      %v4389 = vpop.f32.mrf.mxu0
      %4390 = vmatprep.mubr.bf16.mxu0 0
      %4391 = vmatmul.mubr.bf16.gmra.mxu0 %v4242
      %v4392 = vpop.f32.mrf.mxu0
      %v4393 = vadd.f32 0.0, %v4392
      %v4394 = vpop.f32.mrf.mxu0
      %v4395 = vpop.f32.mrf.mxu0
      %v4396 = vadd.f32 0.0, %v4395
      %v4397 = vpop.f32.mrf.mxu0
      %4398 = vmatprep.mubr.bf16.mxu0 0
      %4399 = vmatmul.mubr.bf16.gmra.mxu0 %v4243
      %v4400 = vpop.f32.mrf.mxu0
      %v4401 = vadd.f32 0.0, %v4400
      %v4402 = vpop.f32.mrf.mxu0
      %v4403 = vpop.f32.mrf.mxu0
      %v4404 = vadd.f32 0.0, %v4403
      %v4405 = vpop.f32.mrf.mxu0
      %4406 = vmatprep.mubr.bf16.mxu0 0
      %4407 = vmatmul.mubr.bf16.gmra.mxu0 %v4244
      %v4408 = vpop.f32.mrf.mxu0
      %v4409 = vadd.f32 0.0, %v4408
      %v4410 = vpop.f32.mrf.mxu0
      %v4411 = vpop.f32.mrf.mxu0
      %v4412 = vadd.f32 0.0, %v4411
      %v4413 = vpop.f32.mrf.mxu0
      %4414 = vmatprep.mubr.bf16.mxu0 0
      %4415 = vmatmul.mubr.bf16.gmra.mxu0 %v4245
      %v4416 = vpop.f32.mrf.mxu0
      %v4417 = vadd.f32 0.0, %v4416
      %v4418 = vpop.f32.mrf.mxu0
      %v4419 = vpop.f32.mrf.mxu0
      %v4420 = vadd.f32 0.0, %v4419
      %v4421 = vpop.f32.mrf.mxu0
      %4422 = vmatprep.mubr.bf16.mxu0 0
      %4423 = vmatmul.mubr.bf16.gmra.mxu0 %v4246
      %v4424 = vpop.f32.mrf.mxu0
      %v4425 = vadd.f32 0.0, %v4424
      %v4426 = vpop.f32.mrf.mxu0
      %v4427 = vpop.f32.mrf.mxu0
      %v4428 = vadd.f32 0.0, %v4427
      %v4429 = vpop.f32.mrf.mxu0
      %4430 = vmatprep.mubr.bf16.mxu0 0
      %4431 = vmatmul.mubr.bf16.gmra.mxu0 %v4247
      %v4432 = vpop.f32.mrf.mxu0
      %v4433 = vadd.f32 0.0, %v4432
      %v4434 = vpop.f32.mrf.mxu0
      %v4435 = vpop.f32.mrf.mxu0
      %v4436 = vadd.f32 0.0, %v4435
      %v4437 = vpop.f32.mrf.mxu0
      %4438 = vmatprep.mubr.bf16.mxu0 0
      %4439 = vmatmul.mubr.bf16.gmra.mxu0 %v4248
      %v4440 = vpop.f32.mrf.mxu0
      %v4441 = vadd.f32 0.0, %v4440
      %v4442 = vpop.f32.mrf.mxu0
      %v4443 = vpop.f32.mrf.mxu0
      %v4444 = vadd.f32 0.0, %v4443
      %v4445 = vpop.f32.mrf.mxu0
      %4446 = vmatprep.mubr.bf16.mxu0 0
      %4447 = vmatmul.mubr.bf16.gmra.mxu0 %v4249
      %v4448 = vpop.f32.mrf.mxu0
      %v4449 = vadd.f32 0.0, %v4448
      %v4450 = vpop.f32.mrf.mxu0
      %v4451 = vpop.f32.mrf.mxu0
      %v4452 = vadd.f32 0.0, %v4451
      %v4453 = vpop.f32.mrf.mxu0
      %4454 = vmatprep.mubr.bf16.mxu0 0
      %4455 = vmatmul.mubr.bf16.gmra.mxu0 %v4250
      %v4456 = vpop.f32.mrf.mxu0
      %v4457 = vadd.f32 0.0, %v4456
      %v4458 = vpop.f32.mrf.mxu0
      %v4459 = vpop.f32.mrf.mxu0
      %v4460 = vadd.f32 0.0, %v4459
      %v4461 = vpop.f32.mrf.mxu0
      %4462 = vmatprep.mubr.bf16.mxu0 0
      %4463 = vmatmul.mubr.bf16.gmra.mxu0 %v4251
      %v4464 = vpop.f32.mrf.mxu0
      %v4465 = vadd.f32 0.0, %v4464
      %v4466 = vpop.f32.mrf.mxu0
      %v4467 = vpop.f32.mrf.mxu0
      %v4468 = vadd.f32 0.0, %v4467
      %v4469 = vpop.f32.mrf.mxu0
      %4470 = vmatprep.mubr.bf16.mxu0 0
      %4471 = vmatmul.mubr.bf16.gmra.mxu0 %v4252
      %v4472 = vpop.f32.mrf.mxu0
      %v4473 = vadd.f32 0.0, %v4472
      %v4474 = vpop.f32.mrf.mxu0
      %v4475 = vpop.f32.mrf.mxu0
      %v4476 = vadd.f32 0.0, %v4475
      %v4477 = vpop.f32.mrf.mxu0
      %4478 = vdwg.mxu0
      %v4479 = vadd.f32 %v4173, %v4353
      %v4480 = vadd.f32 %v4174, %v4356
      %v4481 = vadd.f32 %v4175, %v4361
      %v4482 = vadd.f32 %v4176, %v4364
      %v4483 = vadd.f32 %v4177, %v4369
      %v4484 = vadd.f32 %v4178, %v4372
      %v4485 = vadd.f32 %v4179, %v4377
      %v4486 = vadd.f32 %v4180, %v4380
      %v4487 = vadd.f32 %v4181, %v4385
      %v4488 = vadd.f32 %v4182, %v4388
      %v4489 = vadd.f32 %v4183, %v4393
      %v4490 = vadd.f32 %v4184, %v4396
      %v4491 = vadd.f32 %v4185, %v4401
      %v4492 = vadd.f32 %v4186, %v4404
      %v4493 = vadd.f32 %v4187, %v4409
      %v4494 = vadd.f32 %v4188, %v4412
      %v4495 = vadd.f32 %v4189, %v4417
      %v4496 = vadd.f32 %v4190, %v4420
      %v4497 = vadd.f32 %v4191, %v4425
      %v4498 = vadd.f32 %v4192, %v4428
      %v4499 = vadd.f32 %v4193, %v4433
      %v4500 = vadd.f32 %v4194, %v4436
      %v4501 = vadd.f32 %v4195, %v4441
      %v4502 = vadd.f32 %v4196, %v4444
      %v4503 = vadd.f32 %v4197, %v4449
      %v4504 = vadd.f32 %v4198, %v4452
      %v4505 = vadd.f32 %v4199, %v4457
      %v4506 = vadd.f32 %v4200, %v4460
      %v4507 = vadd.f32 %v4201, %v4465
      %v4508 = vadd.f32 %v4202, %v4468
      %v4509 = vadd.f32 %v4203, %v4473
      %v4510 = vadd.f32 %v4204, %v4476
      %v4511 = vld [vmem:[%s3013 + $0x2] sm:$0xff]
      %v4512 = vld [vmem:[%s3013 + $0xa] sm:$0xff]
      %v4513 = vld [vmem:[%s3013 + $0x1a] sm:$0xff]
      %v4514 = vld [vmem:[%s3013 + $0x22] sm:$0xff]
      %v4515 = vld [vmem:[%s3013 + $0x32] sm:$0xff]
      %v4516 = vld [vmem:[%s3013 + $0x3a] sm:$0xff]
      %v4517 = vld [vmem:[%s3013 + $0x4a] sm:$0xff]
      %v4518 = vld [vmem:[%s3013 + $0x52] sm:$0xff]
      %v4519 = vld [vmem:[%s3013 + $0x62] sm:$0xff]
      %v4520 = vld [vmem:[%s3013 + $0x6a] sm:$0xff]
      %v4521 = vld [vmem:[%s3013 + $0x7a] sm:$0xff]
      %v4522 = vld [vmem:[%s3013 + $0x82] sm:$0xff]
      %v4523 = vld [vmem:[%s3013 + $0x92] sm:$0xff]
      %v4524 = vld [vmem:[%s3013 + $0x9a] sm:$0xff]
      %v4525 = vld [vmem:[%s3013 + $0xaa] sm:$0xff]
      %v4526 = vld [vmem:[%s3013 + $0xb2] sm:$0xff]
      %v4527 = vld [vmem:[%s3013 + $0xc2] sm:$0xff]
      %v4528 = vld [vmem:[%s3013 + $0xca] sm:$0xff]
      %v4529 = vld [vmem:[%s3013 + $0xda] sm:$0xff]
      %v4530 = vld [vmem:[%s3013 + $0xe2] sm:$0xff]
      %v4531 = vld [vmem:[%s3013 + $0xf2] sm:$0xff]
      %v4532 = vld [vmem:[%s3013 + $0xfa] sm:$0xff]
      %v4533 = vld [vmem:[%s3013 + $0x10a] sm:$0xff]
      %v4534 = vld [vmem:[%s3013 + $0x112] sm:$0xff]
      %v4535 = vld [vmem:[%s3013 + $0x122] sm:$0xff]
      %v4536 = vld [vmem:[%s3013 + $0x12a] sm:$0xff]
      %v4537 = vld [vmem:[%s3013 + $0x13a] sm:$0xff]
      %v4538 = vld [vmem:[%s3013 + $0x142] sm:$0xff]
      %v4539 = vld [vmem:[%s3013 + $0x152] sm:$0xff]
      %v4540 = vld [vmem:[%s3013 + $0x15a] sm:$0xff]
      %v4541 = vld [vmem:[%s3013 + $0x16a] sm:$0xff]
      %v4542 = vld [vmem:[%s3013 + $0x172] sm:$0xff]
      %v4543 = vpack.c.bf16 %v4512, %v4511
      %v4544 = vpack.c.bf16 %v4514, %v4513
      %v4545 = vpack.c.bf16 %v4516, %v4515
      %v4546 = vpack.c.bf16 %v4518, %v4517
      %v4547 = vpack.c.bf16 %v4520, %v4519
      %v4548 = vpack.c.bf16 %v4522, %v4521
      %v4549 = vpack.c.bf16 %v4524, %v4523
      %v4550 = vpack.c.bf16 %v4526, %v4525
      %v4551 = vpack.c.bf16 %v4528, %v4527
      %v4552 = vpack.c.bf16 %v4530, %v4529
      %v4553 = vpack.c.bf16 %v4532, %v4531
      %v4554 = vpack.c.bf16 %v4534, %v4533
      %v4555 = vpack.c.bf16 %v4536, %v4535
      %v4556 = vpack.c.bf16 %v4538, %v4537
      %v4557 = vpack.c.bf16 %v4540, %v4539
      %v4558 = vpack.c.bf16 %v4542, %v4541
      %s4559 = scalar_lea.vmem %s2, 320
      %v4560 = vld [vmem:[%s4559] sm:$0xf]
      %v4561 = vld [vmem:[%s4559 + $0x4] sm:$0xf]
      %v4562 = vld [vmem:[%s4559 + $0x8] sm:$0xf]
      %v4563 = vld [vmem:[%s4559 + $0xc] sm:$0xf]
      %v4564 = vld [vmem:[%s4559 + $0x10] sm:$0xf]
      %v4565 = vld [vmem:[%s4559 + $0x14] sm:$0xf]
      %v4566 = vld [vmem:[%s4559 + $0x18] sm:$0xf]
      %v4567 = vld [vmem:[%s4559 + $0x1c] sm:$0xf]
      %v4568 = vld [vmem:[%s4559 + $0x20] sm:$0xf]
      %v4569 = vld [vmem:[%s4559 + $0x24] sm:$0xf]
      %v4570 = vld [vmem:[%s4559 + $0x28] sm:$0xf]
      %v4571 = vld [vmem:[%s4559 + $0x2c] sm:$0xf]
      %v4572 = vld [vmem:[%s4559 + $0x30] sm:$0xf]
      %v4573 = vld [vmem:[%s4559 + $0x34] sm:$0xf]
      %v4574 = vld [vmem:[%s4559 + $0x38] sm:$0xf]
      %v4575 = vld [vmem:[%s4559 + $0x3c] sm:$0xf]
      %v4592 = vunpack.c.l.b16 %v4560
      %v4593 = vunpack.c.l.b16 %v4561
      %v4594 = vunpack.c.l.b16 %v4562
      %v4595 = vunpack.c.l.b16 %v4563
      %v4596 = vunpack.c.l.b16 %v4564
      %v4597 = vunpack.c.l.b16 %v4565
      %v4598 = vunpack.c.l.b16 %v4566
      %v4599 = vunpack.c.l.b16 %v4567
      %v4600 = vunpack.c.l.b16 %v4568
      %v4601 = vunpack.c.l.b16 %v4569
      %v4602 = vunpack.c.l.b16 %v4570
      %v4603 = vunpack.c.l.b16 %v4571
      %v4604 = vunpack.c.l.b16 %v4572
      %v4605 = vunpack.c.l.b16 %v4573
      %v4606 = vunpack.c.l.b16 %v4574
      %v4607 = vunpack.c.l.b16 %v4575
      %v4608 = vpack.c.b16 %v4593, %v4592
      %v4609 = vpack.c.b16 %v4595, %v4594
      %v4610 = vpack.c.b16 %v4597, %v4596
      %v4611 = vpack.c.b16 %v4599, %v4598
      %v4612 = vpack.c.b16 %v4601, %v4600
      %v4613 = vpack.c.b16 %v4603, %v4602
      %v4614 = vpack.c.b16 %v4605, %v4604
      %v4615 = vpack.c.b16 %v4607, %v4606
      %4624 = vmatprep.subr.bf16.mxu0 0
      %4625 = vmatpush1.bf16.msra.mxu0 %v4615
      %4626 = vmatprep.subr.bf16.mxu0 0
      %4627 = vmatpush1.bf16.msra.mxu0 %v4614
      %4628 = vmatprep.subr.bf16.mxu0 0
      %4629 = vmatpush1.bf16.msra.mxu0 %v4613
      %4630 = vmatprep.subr.bf16.mxu0 0
      %4631 = vmatpush1.bf16.msra.mxu0 %v4612
      %4632 = vmatprep.subr.bf16.mxu0 0
      %4633 = vmatpush1.bf16.msra.mxu0 %v4611
      %4634 = vmatprep.subr.bf16.mxu0 0
      %4635 = vmatpush1.bf16.msra.mxu0 %v4610
      %4636 = vmatprep.subr.bf16.mxu0 0
      %4637 = vmatpush1.bf16.msra.mxu0 %v4609
      %4638 = vmatprep.subr.bf16.mxu0 0
      %4639 = vmatpush1.bf16.msra.mxu0 %v4608
      %4640 = vmatprep.subr.bf16.mxu0 0
      %4641 = vmatpush2.bf16.msra.mxu0 0
      %4642 = vmatprep.subr.bf16.mxu0 0
      %4643 = vmatpush2.bf16.msra.mxu0 0
      %4644 = vmatprep.subr.bf16.mxu0 0
      %4645 = vmatpush2.bf16.msra.mxu0 0
      %4646 = vmatprep.subr.bf16.mxu0 0
      %4647 = vmatpush2.bf16.msra.mxu0 0
      %4648 = vmatprep.subr.bf16.mxu0 0
      %4649 = vmatpush2.bf16.msra.mxu0 0
      %4650 = vmatprep.subr.bf16.mxu0 0
      %4651 = vmatpush2.bf16.msra.mxu0 0
      %4652 = vmatprep.subr.bf16.mxu0 0
      %4653 = vmatpush2.bf16.msra.mxu0 0
      %4654 = vmatprep.subr.bf16.mxu0 0
      %4655 = vmatpush2.bf16.msra.mxu0 0
      %4656 = vmatprep.mubr.bf16.mxu0 0
      %4657 = vmatmul.mubr.bf16.gmra.mxu0 %v4543
      %v4658 = vpop.f32.mrf.mxu0
      %v4659 = vadd.f32 0.0, %v4658
      %v4660 = vpop.f32.mrf.mxu0
      %v4661 = vpop.f32.mrf.mxu0
      %v4662 = vadd.f32 0.0, %v4661
      %v4663 = vpop.f32.mrf.mxu0
      %4664 = vmatprep.mubr.bf16.mxu0 0
      %4665 = vmatmul.mubr.bf16.gmra.mxu0 %v4544
      %v4666 = vpop.f32.mrf.mxu0
      %v4667 = vadd.f32 0.0, %v4666
      %v4668 = vpop.f32.mrf.mxu0
      %v4669 = vpop.f32.mrf.mxu0
      %v4670 = vadd.f32 0.0, %v4669
      %v4671 = vpop.f32.mrf.mxu0
      %4672 = vmatprep.mubr.bf16.mxu0 0
      %4673 = vmatmul.mubr.bf16.gmra.mxu0 %v4545
      %v4674 = vpop.f32.mrf.mxu0
      %v4675 = vadd.f32 0.0, %v4674
      %v4676 = vpop.f32.mrf.mxu0
      %v4677 = vpop.f32.mrf.mxu0
      %v4678 = vadd.f32 0.0, %v4677
      %v4679 = vpop.f32.mrf.mxu0
      %4680 = vmatprep.mubr.bf16.mxu0 0
      %4681 = vmatmul.mubr.bf16.gmra.mxu0 %v4546
      %v4682 = vpop.f32.mrf.mxu0
      %v4683 = vadd.f32 0.0, %v4682
      %v4684 = vpop.f32.mrf.mxu0
      %v4685 = vpop.f32.mrf.mxu0
      %v4686 = vadd.f32 0.0, %v4685
      %v4687 = vpop.f32.mrf.mxu0
      %4688 = vmatprep.mubr.bf16.mxu0 0
      %4689 = vmatmul.mubr.bf16.gmra.mxu0 %v4547
      %v4690 = vpop.f32.mrf.mxu0
      %v4691 = vadd.f32 0.0, %v4690
      %v4692 = vpop.f32.mrf.mxu0
      %v4693 = vpop.f32.mrf.mxu0
      %v4694 = vadd.f32 0.0, %v4693
      %v4695 = vpop.f32.mrf.mxu0
      %4696 = vmatprep.mubr.bf16.mxu0 0
      %4697 = vmatmul.mubr.bf16.gmra.mxu0 %v4548
      %v4698 = vpop.f32.mrf.mxu0
      %v4699 = vadd.f32 0.0, %v4698
      %v4700 = vpop.f32.mrf.mxu0
      %v4701 = vpop.f32.mrf.mxu0
      %v4702 = vadd.f32 0.0, %v4701
      %v4703 = vpop.f32.mrf.mxu0
      %4704 = vmatprep.mubr.bf16.mxu0 0
      %4705 = vmatmul.mubr.bf16.gmra.mxu0 %v4549
      %v4706 = vpop.f32.mrf.mxu0
      %v4707 = vadd.f32 0.0, %v4706
      %v4708 = vpop.f32.mrf.mxu0
      %v4709 = vpop.f32.mrf.mxu0
      %v4710 = vadd.f32 0.0, %v4709
      %v4711 = vpop.f32.mrf.mxu0
      %4712 = vmatprep.mubr.bf16.mxu0 0
      %4713 = vmatmul.mubr.bf16.gmra.mxu0 %v4550
      %v4714 = vpop.f32.mrf.mxu0
      %v4715 = vadd.f32 0.0, %v4714
      %v4716 = vpop.f32.mrf.mxu0
      %v4717 = vpop.f32.mrf.mxu0
      %v4718 = vadd.f32 0.0, %v4717
      %v4719 = vpop.f32.mrf.mxu0
      %4720 = vmatprep.mubr.bf16.mxu0 0
      %4721 = vmatmul.mubr.bf16.gmra.mxu0 %v4551
      %v4722 = vpop.f32.mrf.mxu0
      %v4723 = vadd.f32 0.0, %v4722
      %v4724 = vpop.f32.mrf.mxu0
      %v4725 = vpop.f32.mrf.mxu0
      %v4726 = vadd.f32 0.0, %v4725
      %v4727 = vpop.f32.mrf.mxu0
      %4728 = vmatprep.mubr.bf16.mxu0 0
      %4729 = vmatmul.mubr.bf16.gmra.mxu0 %v4552
      %v4730 = vpop.f32.mrf.mxu0
      %v4731 = vadd.f32 0.0, %v4730
      %v4732 = vpop.f32.mrf.mxu0
      %v4733 = vpop.f32.mrf.mxu0
      %v4734 = vadd.f32 0.0, %v4733
      %v4735 = vpop.f32.mrf.mxu0
      %4736 = vmatprep.mubr.bf16.mxu0 0
      %4737 = vmatmul.mubr.bf16.gmra.mxu0 %v4553
      %v4738 = vpop.f32.mrf.mxu0
      %v4739 = vadd.f32 0.0, %v4738
      %v4740 = vpop.f32.mrf.mxu0
      %v4741 = vpop.f32.mrf.mxu0
      %v4742 = vadd.f32 0.0, %v4741
      %v4743 = vpop.f32.mrf.mxu0
      %4744 = vmatprep.mubr.bf16.mxu0 0
      %4745 = vmatmul.mubr.bf16.gmra.mxu0 %v4554
      %v4746 = vpop.f32.mrf.mxu0
      %v4747 = vadd.f32 0.0, %v4746
      %v4748 = vpop.f32.mrf.mxu0
      %v4749 = vpop.f32.mrf.mxu0
      %v4750 = vadd.f32 0.0, %v4749
      %v4751 = vpop.f32.mrf.mxu0
      %4752 = vmatprep.mubr.bf16.mxu0 0
      %4753 = vmatmul.mubr.bf16.gmra.mxu0 %v4555
      %v4754 = vpop.f32.mrf.mxu0
      %v4755 = vadd.f32 0.0, %v4754
      %v4756 = vpop.f32.mrf.mxu0
      %v4757 = vpop.f32.mrf.mxu0
      %v4758 = vadd.f32 0.0, %v4757
      %v4759 = vpop.f32.mrf.mxu0
      %4760 = vmatprep.mubr.bf16.mxu0 0
      %4761 = vmatmul.mubr.bf16.gmra.mxu0 %v4556
      %v4762 = vpop.f32.mrf.mxu0
      %v4763 = vadd.f32 0.0, %v4762
      %v4764 = vpop.f32.mrf.mxu0
      %v4765 = vpop.f32.mrf.mxu0
      %v4766 = vadd.f32 0.0, %v4765
      %v4767 = vpop.f32.mrf.mxu0
      %4768 = vmatprep.mubr.bf16.mxu0 0
      %4769 = vmatmul.mubr.bf16.gmra.mxu0 %v4557
      %v4770 = vpop.f32.mrf.mxu0
      %v4771 = vadd.f32 0.0, %v4770
      %v4772 = vpop.f32.mrf.mxu0
      %v4773 = vpop.f32.mrf.mxu0
      %v4774 = vadd.f32 0.0, %v4773
      %v4775 = vpop.f32.mrf.mxu0
      %4776 = vmatprep.mubr.bf16.mxu0 0
      %4777 = vmatmul.mubr.bf16.gmra.mxu0 %v4558
      %v4778 = vpop.f32.mrf.mxu0
      %v4779 = vadd.f32 0.0, %v4778
      %v4780 = vpop.f32.mrf.mxu0
      %v4781 = vpop.f32.mrf.mxu0
      %v4782 = vadd.f32 0.0, %v4781
      %v4783 = vpop.f32.mrf.mxu0
      %4784 = vdwg.mxu0
      %v4785 = vadd.f32 %v4479, %v4659
      %v4786 = vadd.f32 %v4480, %v4662
      %v4787 = vadd.f32 %v4481, %v4667
      %v4788 = vadd.f32 %v4482, %v4670
      %v4789 = vadd.f32 %v4483, %v4675
      %v4790 = vadd.f32 %v4484, %v4678
      %v4791 = vadd.f32 %v4485, %v4683
      %v4792 = vadd.f32 %v4486, %v4686
      %v4793 = vadd.f32 %v4487, %v4691
      %v4794 = vadd.f32 %v4488, %v4694
      %v4795 = vadd.f32 %v4489, %v4699
      %v4796 = vadd.f32 %v4490, %v4702
      %v4797 = vadd.f32 %v4491, %v4707
      %v4798 = vadd.f32 %v4492, %v4710
      %v4799 = vadd.f32 %v4493, %v4715
      %v4800 = vadd.f32 %v4494, %v4718
      %v4801 = vadd.f32 %v4495, %v4723
      %v4802 = vadd.f32 %v4496, %v4726
      %v4803 = vadd.f32 %v4497, %v4731
      %v4804 = vadd.f32 %v4498, %v4734
      %v4805 = vadd.f32 %v4499, %v4739
      %v4806 = vadd.f32 %v4500, %v4742
      %v4807 = vadd.f32 %v4501, %v4747
      %v4808 = vadd.f32 %v4502, %v4750
      %v4809 = vadd.f32 %v4503, %v4755
      %v4810 = vadd.f32 %v4504, %v4758
      %v4811 = vadd.f32 %v4505, %v4763
      %v4812 = vadd.f32 %v4506, %v4766
      %v4813 = vadd.f32 %v4507, %v4771
      %v4814 = vadd.f32 %v4508, %v4774
      %v4815 = vadd.f32 %v4509, %v4779
      %v4816 = vadd.f32 %v4510, %v4782
      %s4817 = scalar_lea.vmem [#allocation2], 48
      %v4818 = vld [vmem:[%s4817] sm:$0xff]
      %v4819 = vld [vmem:[%s4817 + $0x8] sm:$0xff]
      %v4820 = vld [vmem:[%s4817 + $0x18] sm:$0xff]
      %v4821 = vld [vmem:[%s4817 + $0x20] sm:$0xff]
      %v4822 = vld [vmem:[%s4817 + $0x30] sm:$0xff]
      %v4823 = vld [vmem:[%s4817 + $0x38] sm:$0xff]
      %v4824 = vld [vmem:[%s4817 + $0x48] sm:$0xff]
      %v4825 = vld [vmem:[%s4817 + $0x50] sm:$0xff]
      %v4826 = vld [vmem:[%s4817 + $0x60] sm:$0xff]
      %v4827 = vld [vmem:[%s4817 + $0x68] sm:$0xff]
      %v4828 = vld [vmem:[%s4817 + $0x78] sm:$0xff]
      %v4829 = vld [vmem:[%s4817 + $0x80] sm:$0xff]
      %v4830 = vld [vmem:[%s4817 + $0x90] sm:$0xff]
      %v4831 = vld [vmem:[%s4817 + $0x98] sm:$0xff]
      %v4832 = vld [vmem:[%s4817 + $0xa8] sm:$0xff]
      %v4833 = vld [vmem:[%s4817 + $0xb0] sm:$0xff]
      %v4834 = vld [vmem:[%s4817 + $0xc0] sm:$0xff]
      %v4835 = vld [vmem:[%s4817 + $0xc8] sm:$0xff]
      %v4836 = vld [vmem:[%s4817 + $0xd8] sm:$0xff]
      %v4837 = vld [vmem:[%s4817 + $0xe0] sm:$0xff]
      %v4838 = vld [vmem:[%s4817 + $0xf0] sm:$0xff]
      %v4839 = vld [vmem:[%s4817 + $0xf8] sm:$0xff]
      %v4840 = vld [vmem:[%s4817 + $0x108] sm:$0xff]
      %v4841 = vld [vmem:[%s4817 + $0x110] sm:$0xff]
      %v4842 = vld [vmem:[%s4817 + $0x120] sm:$0xff]
      %v4843 = vld [vmem:[%s4817 + $0x128] sm:$0xff]
      %v4844 = vld [vmem:[%s4817 + $0x138] sm:$0xff]
      %v4845 = vld [vmem:[%s4817 + $0x140] sm:$0xff]
      %v4846 = vld [vmem:[%s4817 + $0x150] sm:$0xff]
      %v4847 = vld [vmem:[%s4817 + $0x158] sm:$0xff]
      %v4848 = vld [vmem:[%s4817 + $0x168] sm:$0xff]
      %v4849 = vld [vmem:[%s4817 + $0x170] sm:$0xff]
      %v4850 = vpack.c.bf16 %v4819, %v4818
      %v4851 = vpack.c.bf16 %v4821, %v4820
      %v4852 = vpack.c.bf16 %v4823, %v4822
      %v4853 = vpack.c.bf16 %v4825, %v4824
      %v4854 = vpack.c.bf16 %v4827, %v4826
      %v4855 = vpack.c.bf16 %v4829, %v4828
      %v4856 = vpack.c.bf16 %v4831, %v4830
      %v4857 = vpack.c.bf16 %v4833, %v4832
      %v4858 = vpack.c.bf16 %v4835, %v4834
      %v4859 = vpack.c.bf16 %v4837, %v4836
      %v4860 = vpack.c.bf16 %v4839, %v4838
      %v4861 = vpack.c.bf16 %v4841, %v4840
      %v4862 = vpack.c.bf16 %v4843, %v4842
      %v4863 = vpack.c.bf16 %v4845, %v4844
      %v4864 = vpack.c.bf16 %v4847, %v4846
      %v4865 = vpack.c.bf16 %v4849, %v4848
      %s4866 = scalar_lea.vmem %s2, 384
      %v4867 = vld [vmem:[%s4866] sm:$0xf]
      %v4868 = vld [vmem:[%s4866 + $0x4] sm:$0xf]
      %v4869 = vld [vmem:[%s4866 + $0x8] sm:$0xf]
      %v4870 = vld [vmem:[%s4866 + $0xc] sm:$0xf]
      %v4871 = vld [vmem:[%s4866 + $0x10] sm:$0xf]
      %v4872 = vld [vmem:[%s4866 + $0x14] sm:$0xf]
      %v4873 = vld [vmem:[%s4866 + $0x18] sm:$0xf]
      %v4874 = vld [vmem:[%s4866 + $0x1c] sm:$0xf]
      %v4875 = vld [vmem:[%s4866 + $0x20] sm:$0xf]
      %v4876 = vld [vmem:[%s4866 + $0x24] sm:$0xf]
      %v4877 = vld [vmem:[%s4866 + $0x28] sm:$0xf]
      %v4878 = vld [vmem:[%s4866 + $0x2c] sm:$0xf]
      %v4879 = vld [vmem:[%s4866 + $0x30] sm:$0xf]
      %v4880 = vld [vmem:[%s4866 + $0x34] sm:$0xf]
      %v4881 = vld [vmem:[%s4866 + $0x38] sm:$0xf]
      %v4882 = vld [vmem:[%s4866 + $0x3c] sm:$0xf]
      %v4899 = vunpack.c.l.b16 %v4867
      %v4900 = vunpack.c.l.b16 %v4868
      %v4901 = vunpack.c.l.b16 %v4869
      %v4902 = vunpack.c.l.b16 %v4870
      %v4903 = vunpack.c.l.b16 %v4871
      %v4904 = vunpack.c.l.b16 %v4872
      %v4905 = vunpack.c.l.b16 %v4873
      %v4906 = vunpack.c.l.b16 %v4874
      %v4907 = vunpack.c.l.b16 %v4875
      %v4908 = vunpack.c.l.b16 %v4876
      %v4909 = vunpack.c.l.b16 %v4877
      %v4910 = vunpack.c.l.b16 %v4878
      %v4911 = vunpack.c.l.b16 %v4879
      %v4912 = vunpack.c.l.b16 %v4880
      %v4913 = vunpack.c.l.b16 %v4881
      %v4914 = vunpack.c.l.b16 %v4882
      %v4915 = vpack.c.b16 %v4900, %v4899
      %v4916 = vpack.c.b16 %v4902, %v4901
      %v4917 = vpack.c.b16 %v4904, %v4903
      %v4918 = vpack.c.b16 %v4906, %v4905
      %v4919 = vpack.c.b16 %v4908, %v4907
      %v4920 = vpack.c.b16 %v4910, %v4909
      %v4921 = vpack.c.b16 %v4912, %v4911
      %v4922 = vpack.c.b16 %v4914, %v4913
      %4931 = vmatprep.subr.bf16.mxu0 0
      %4932 = vmatpush1.bf16.msra.mxu0 %v4922
      %4933 = vmatprep.subr.bf16.mxu0 0
      %4934 = vmatpush1.bf16.msra.mxu0 %v4921
      %4935 = vmatprep.subr.bf16.mxu0 0
      %4936 = vmatpush1.bf16.msra.mxu0 %v4920
      %4937 = vmatprep.subr.bf16.mxu0 0
      %4938 = vmatpush1.bf16.msra.mxu0 %v4919
      %4939 = vmatprep.subr.bf16.mxu0 0
      %4940 = vmatpush1.bf16.msra.mxu0 %v4918
      %4941 = vmatprep.subr.bf16.mxu0 0
      %4942 = vmatpush1.bf16.msra.mxu0 %v4917
      %4943 = vmatprep.subr.bf16.mxu0 0
      %4944 = vmatpush1.bf16.msra.mxu0 %v4916
      %4945 = vmatprep.subr.bf16.mxu0 0
      %4946 = vmatpush1.bf16.msra.mxu0 %v4915
      %4947 = vmatprep.subr.bf16.mxu0 0
      %4948 = vmatpush2.bf16.msra.mxu0 0
      %4949 = vmatprep.subr.bf16.mxu0 0
      %4950 = vmatpush2.bf16.msra.mxu0 0
      %4951 = vmatprep.subr.bf16.mxu0 0
      %4952 = vmatpush2.bf16.msra.mxu0 0
      %4953 = vmatprep.subr.bf16.mxu0 0
      %4954 = vmatpush2.bf16.msra.mxu0 0
      %4955 = vmatprep.subr.bf16.mxu0 0
      %4956 = vmatpush2.bf16.msra.mxu0 0
      %4957 = vmatprep.subr.bf16.mxu0 0
      %4958 = vmatpush2.bf16.msra.mxu0 0
      %4959 = vmatprep.subr.bf16.mxu0 0
      %4960 = vmatpush2.bf16.msra.mxu0 0
      %4961 = vmatprep.subr.bf16.mxu0 0
      %4962 = vmatpush2.bf16.msra.mxu0 0
      %4963 = vmatprep.mubr.bf16.mxu0 0
      %4964 = vmatmul.mubr.bf16.gmra.mxu0 %v4850
      %v4965 = vpop.f32.mrf.mxu0
      %v4966 = vadd.f32 0.0, %v4965
      %v4967 = vpop.f32.mrf.mxu0
      %v4968 = vpop.f32.mrf.mxu0
      %v4969 = vadd.f32 0.0, %v4968
      %v4970 = vpop.f32.mrf.mxu0
      %4971 = vmatprep.mubr.bf16.mxu0 0
      %4972 = vmatmul.mubr.bf16.gmra.mxu0 %v4851
      %v4973 = vpop.f32.mrf.mxu0
      %v4974 = vadd.f32 0.0, %v4973
      %v4975 = vpop.f32.mrf.mxu0
      %v4976 = vpop.f32.mrf.mxu0
      %v4977 = vadd.f32 0.0, %v4976
      %v4978 = vpop.f32.mrf.mxu0
      %4979 = vmatprep.mubr.bf16.mxu0 0
      %4980 = vmatmul.mubr.bf16.gmra.mxu0 %v4852
      %v4981 = vpop.f32.mrf.mxu0
      %v4982 = vadd.f32 0.0, %v4981
      %v4983 = vpop.f32.mrf.mxu0
      %v4984 = vpop.f32.mrf.mxu0
      %v4985 = vadd.f32 0.0, %v4984
      %v4986 = vpop.f32.mrf.mxu0
      %4987 = vmatprep.mubr.bf16.mxu0 0
      %4988 = vmatmul.mubr.bf16.gmra.mxu0 %v4853
      %v4989 = vpop.f32.mrf.mxu0
      %v4990 = vadd.f32 0.0, %v4989
      %v4991 = vpop.f32.mrf.mxu0
      %v4992 = vpop.f32.mrf.mxu0
      %v4993 = vadd.f32 0.0, %v4992
      %v4994 = vpop.f32.mrf.mxu0
      %4995 = vmatprep.mubr.bf16.mxu0 0
      %4996 = vmatmul.mubr.bf16.gmra.mxu0 %v4854
      %v4997 = vpop.f32.mrf.mxu0
      %v4998 = vadd.f32 0.0, %v4997
      %v4999 = vpop.f32.mrf.mxu0
      %v5000 = vpop.f32.mrf.mxu0
      %v5001 = vadd.f32 0.0, %v5000
      %v5002 = vpop.f32.mrf.mxu0
      %5003 = vmatprep.mubr.bf16.mxu0 0
      %5004 = vmatmul.mubr.bf16.gmra.mxu0 %v4855
      %v5005 = vpop.f32.mrf.mxu0
      %v5006 = vadd.f32 0.0, %v5005
      %v5007 = vpop.f32.mrf.mxu0
      %v5008 = vpop.f32.mrf.mxu0
      %v5009 = vadd.f32 0.0, %v5008
      %v5010 = vpop.f32.mrf.mxu0
      %5011 = vmatprep.mubr.bf16.mxu0 0
      %5012 = vmatmul.mubr.bf16.gmra.mxu0 %v4856
      %v5013 = vpop.f32.mrf.mxu0
      %v5014 = vadd.f32 0.0, %v5013
      %v5015 = vpop.f32.mrf.mxu0
      %v5016 = vpop.f32.mrf.mxu0
      %v5017 = vadd.f32 0.0, %v5016
      %v5018 = vpop.f32.mrf.mxu0
      %5019 = vmatprep.mubr.bf16.mxu0 0
      %5020 = vmatmul.mubr.bf16.gmra.mxu0 %v4857
      %v5021 = vpop.f32.mrf.mxu0
      %v5022 = vadd.f32 0.0, %v5021
      %v5023 = vpop.f32.mrf.mxu0
      %v5024 = vpop.f32.mrf.mxu0
      %v5025 = vadd.f32 0.0, %v5024
      %v5026 = vpop.f32.mrf.mxu0
      %5027 = vmatprep.mubr.bf16.mxu0 0
      %5028 = vmatmul.mubr.bf16.gmra.mxu0 %v4858
      %v5029 = vpop.f32.mrf.mxu0
      %v5030 = vadd.f32 0.0, %v5029
      %v5031 = vpop.f32.mrf.mxu0
      %v5032 = vpop.f32.mrf.mxu0
      %v5033 = vadd.f32 0.0, %v5032
      %v5034 = vpop.f32.mrf.mxu0
      %5035 = vmatprep.mubr.bf16.mxu0 0
      %5036 = vmatmul.mubr.bf16.gmra.mxu0 %v4859
      %v5037 = vpop.f32.mrf.mxu0
      %v5038 = vadd.f32 0.0, %v5037
      %v5039 = vpop.f32.mrf.mxu0
      %v5040 = vpop.f32.mrf.mxu0
      %v5041 = vadd.f32 0.0, %v5040
      %v5042 = vpop.f32.mrf.mxu0
      %5043 = vmatprep.mubr.bf16.mxu0 0
      %5044 = vmatmul.mubr.bf16.gmra.mxu0 %v4860
      %v5045 = vpop.f32.mrf.mxu0
      %v5046 = vadd.f32 0.0, %v5045
      %v5047 = vpop.f32.mrf.mxu0
      %v5048 = vpop.f32.mrf.mxu0
      %v5049 = vadd.f32 0.0, %v5048
      %v5050 = vpop.f32.mrf.mxu0
      %5051 = vmatprep.mubr.bf16.mxu0 0
      %5052 = vmatmul.mubr.bf16.gmra.mxu0 %v4861
      %v5053 = vpop.f32.mrf.mxu0
      %v5054 = vadd.f32 0.0, %v5053
      %v5055 = vpop.f32.mrf.mxu0
      %v5056 = vpop.f32.mrf.mxu0
      %v5057 = vadd.f32 0.0, %v5056
      %v5058 = vpop.f32.mrf.mxu0
      %5059 = vmatprep.mubr.bf16.mxu0 0
      %5060 = vmatmul.mubr.bf16.gmra.mxu0 %v4862
      %v5061 = vpop.f32.mrf.mxu0
      %v5062 = vadd.f32 0.0, %v5061
      %v5063 = vpop.f32.mrf.mxu0
      %v5064 = vpop.f32.mrf.mxu0
      %v5065 = vadd.f32 0.0, %v5064
      %v5066 = vpop.f32.mrf.mxu0
      %5067 = vmatprep.mubr.bf16.mxu0 0
      %5068 = vmatmul.mubr.bf16.gmra.mxu0 %v4863
      %v5069 = vpop.f32.mrf.mxu0
      %v5070 = vadd.f32 0.0, %v5069
      %v5071 = vpop.f32.mrf.mxu0
      %v5072 = vpop.f32.mrf.mxu0
      %v5073 = vadd.f32 0.0, %v5072
      %v5074 = vpop.f32.mrf.mxu0
      %5075 = vmatprep.mubr.bf16.mxu0 0
      %5076 = vmatmul.mubr.bf16.gmra.mxu0 %v4864
      %v5077 = vpop.f32.mrf.mxu0
      %v5078 = vadd.f32 0.0, %v5077
      %v5079 = vpop.f32.mrf.mxu0
      %v5080 = vpop.f32.mrf.mxu0
      %v5081 = vadd.f32 0.0, %v5080
      %v5082 = vpop.f32.mrf.mxu0
      %5083 = vmatprep.mubr.bf16.mxu0 0
      %5084 = vmatmul.mubr.bf16.gmra.mxu0 %v4865
      %v5085 = vpop.f32.mrf.mxu0
      %v5086 = vadd.f32 0.0, %v5085
      %v5087 = vpop.f32.mrf.mxu0
      %v5088 = vpop.f32.mrf.mxu0
      %v5089 = vadd.f32 0.0, %v5088
      %v5090 = vpop.f32.mrf.mxu0
      %5091 = vdwg.mxu0
      %v5092 = vadd.f32 %v4785, %v4966
      %v5093 = vadd.f32 %v4786, %v4969
      %v5094 = vadd.f32 %v4787, %v4974
      %v5095 = vadd.f32 %v4788, %v4977
      %v5096 = vadd.f32 %v4789, %v4982
      %v5097 = vadd.f32 %v4790, %v4985
      %v5098 = vadd.f32 %v4791, %v4990
      %v5099 = vadd.f32 %v4792, %v4993
      %v5100 = vadd.f32 %v4793, %v4998
      %v5101 = vadd.f32 %v4794, %v5001
      %v5102 = vadd.f32 %v4795, %v5006
      %v5103 = vadd.f32 %v4796, %v5009
      %v5104 = vadd.f32 %v4797, %v5014
      %v5105 = vadd.f32 %v4798, %v5017
      %v5106 = vadd.f32 %v4799, %v5022
      %v5107 = vadd.f32 %v4800, %v5025
      %v5108 = vadd.f32 %v4801, %v5030
      %v5109 = vadd.f32 %v4802, %v5033
      %v5110 = vadd.f32 %v4803, %v5038
      %v5111 = vadd.f32 %v4804, %v5041
      %v5112 = vadd.f32 %v4805, %v5046
      %v5113 = vadd.f32 %v4806, %v5049
      %v5114 = vadd.f32 %v4807, %v5054
      %v5115 = vadd.f32 %v4808, %v5057
      %v5116 = vadd.f32 %v4809, %v5062
      %v5117 = vadd.f32 %v4810, %v5065
      %v5118 = vadd.f32 %v4811, %v5070
      %v5119 = vadd.f32 %v4812, %v5073
      %v5120 = vadd.f32 %v4813, %v5078
      %v5121 = vadd.f32 %v4814, %v5081
      %v5122 = vadd.f32 %v4815, %v5086
      %v5123 = vadd.f32 %v4816, %v5089
      %v5124 = vld [vmem:[%s4817 + $0x1] sm:$0xff]
      %v5125 = vld [vmem:[%s4817 + $0x9] sm:$0xff]
      %v5126 = vld [vmem:[%s4817 + $0x19] sm:$0xff]
      %v5127 = vld [vmem:[%s4817 + $0x21] sm:$0xff]
      %v5128 = vld [vmem:[%s4817 + $0x31] sm:$0xff]
      %v5129 = vld [vmem:[%s4817 + $0x39] sm:$0xff]
      %v5130 = vld [vmem:[%s4817 + $0x49] sm:$0xff]
      %v5131 = vld [vmem:[%s4817 + $0x51] sm:$0xff]
      %v5132 = vld [vmem:[%s4817 + $0x61] sm:$0xff]
      %v5133 = vld [vmem:[%s4817 + $0x69] sm:$0xff]
      %v5134 = vld [vmem:[%s4817 + $0x79] sm:$0xff]
      %v5135 = vld [vmem:[%s4817 + $0x81] sm:$0xff]
      %v5136 = vld [vmem:[%s4817 + $0x91] sm:$0xff]
      %v5137 = vld [vmem:[%s4817 + $0x99] sm:$0xff]
      %v5138 = vld [vmem:[%s4817 + $0xa9] sm:$0xff]
      %v5139 = vld [vmem:[%s4817 + $0xb1] sm:$0xff]
      %v5140 = vld [vmem:[%s4817 + $0xc1] sm:$0xff]
      %v5141 = vld [vmem:[%s4817 + $0xc9] sm:$0xff]
      %v5142 = vld [vmem:[%s4817 + $0xd9] sm:$0xff]
      %v5143 = vld [vmem:[%s4817 + $0xe1] sm:$0xff]
      %v5144 = vld [vmem:[%s4817 + $0xf1] sm:$0xff]
      %v5145 = vld [vmem:[%s4817 + $0xf9] sm:$0xff]
      %v5146 = vld [vmem:[%s4817 + $0x109] sm:$0xff]
      %v5147 = vld [vmem:[%s4817 + $0x111] sm:$0xff]
      %v5148 = vld [vmem:[%s4817 + $0x121] sm:$0xff]
      %v5149 = vld [vmem:[%s4817 + $0x129] sm:$0xff]
      %v5150 = vld [vmem:[%s4817 + $0x139] sm:$0xff]
      %v5151 = vld [vmem:[%s4817 + $0x141] sm:$0xff]
      %v5152 = vld [vmem:[%s4817 + $0x151] sm:$0xff]
      %v5153 = vld [vmem:[%s4817 + $0x159] sm:$0xff]
      %v5154 = vld [vmem:[%s4817 + $0x169] sm:$0xff]
      %v5155 = vld [vmem:[%s4817 + $0x171] sm:$0xff]
      %v5156 = vpack.c.bf16 %v5125, %v5124
      %v5157 = vpack.c.bf16 %v5127, %v5126
      %v5158 = vpack.c.bf16 %v5129, %v5128
      %v5159 = vpack.c.bf16 %v5131, %v5130
      %v5160 = vpack.c.bf16 %v5133, %v5132
      %v5161 = vpack.c.bf16 %v5135, %v5134
      %v5162 = vpack.c.bf16 %v5137, %v5136
      %v5163 = vpack.c.bf16 %v5139, %v5138
      %v5164 = vpack.c.bf16 %v5141, %v5140
      %v5165 = vpack.c.bf16 %v5143, %v5142
      %v5166 = vpack.c.bf16 %v5145, %v5144
      %v5167 = vpack.c.bf16 %v5147, %v5146
      %v5168 = vpack.c.bf16 %v5149, %v5148
      %v5169 = vpack.c.bf16 %v5151, %v5150
      %v5170 = vpack.c.bf16 %v5153, %v5152
      %v5171 = vpack.c.bf16 %v5155, %v5154
      %s5172 = scalar_lea.vmem %s2, 448
      %v5173 = vld [vmem:[%s5172] sm:$0xf]
      %v5174 = vld [vmem:[%s5172 + $0x4] sm:$0xf]
      %v5175 = vld [vmem:[%s5172 + $0x8] sm:$0xf]
      %v5176 = vld [vmem:[%s5172 + $0xc] sm:$0xf]
      %v5177 = vld [vmem:[%s5172 + $0x10] sm:$0xf]
      %v5178 = vld [vmem:[%s5172 + $0x14] sm:$0xf]
      %v5179 = vld [vmem:[%s5172 + $0x18] sm:$0xf]
      %v5180 = vld [vmem:[%s5172 + $0x1c] sm:$0xf]
      %v5181 = vld [vmem:[%s5172 + $0x20] sm:$0xf]
      %v5182 = vld [vmem:[%s5172 + $0x24] sm:$0xf]
      %v5183 = vld [vmem:[%s5172 + $0x28] sm:$0xf]
      %v5184 = vld [vmem:[%s5172 + $0x2c] sm:$0xf]
      %v5185 = vld [vmem:[%s5172 + $0x30] sm:$0xf]
      %v5186 = vld [vmem:[%s5172 + $0x34] sm:$0xf]
      %v5187 = vld [vmem:[%s5172 + $0x38] sm:$0xf]
      %v5188 = vld [vmem:[%s5172 + $0x3c] sm:$0xf]
      %v5205 = vunpack.c.l.b16 %v5173
      %v5206 = vunpack.c.l.b16 %v5174
      %v5207 = vunpack.c.l.b16 %v5175
      %v5208 = vunpack.c.l.b16 %v5176
      %v5209 = vunpack.c.l.b16 %v5177
      %v5210 = vunpack.c.l.b16 %v5178
      %v5211 = vunpack.c.l.b16 %v5179
      %v5212 = vunpack.c.l.b16 %v5180
      %v5213 = vunpack.c.l.b16 %v5181
      %v5214 = vunpack.c.l.b16 %v5182
      %v5215 = vunpack.c.l.b16 %v5183
      %v5216 = vunpack.c.l.b16 %v5184
      %v5217 = vunpack.c.l.b16 %v5185
      %v5218 = vunpack.c.l.b16 %v5186
      %v5219 = vunpack.c.l.b16 %v5187
      %v5220 = vunpack.c.l.b16 %v5188
      %v5221 = vpack.c.b16 %v5206, %v5205
      %v5222 = vpack.c.b16 %v5208, %v5207
      %v5223 = vpack.c.b16 %v5210, %v5209
      %v5224 = vpack.c.b16 %v5212, %v5211
      %v5225 = vpack.c.b16 %v5214, %v5213
      %v5226 = vpack.c.b16 %v5216, %v5215
      %v5227 = vpack.c.b16 %v5218, %v5217
      %v5228 = vpack.c.b16 %v5220, %v5219
      %5237 = vmatprep.subr.bf16.mxu0 0
      %5238 = vmatpush1.bf16.msra.mxu0 %v5228
      %5239 = vmatprep.subr.bf16.mxu0 0
      %5240 = vmatpush1.bf16.msra.mxu0 %v5227
      %5241 = vmatprep.subr.bf16.mxu0 0
      %5242 = vmatpush1.bf16.msra.mxu0 %v5226
      %5243 = vmatprep.subr.bf16.mxu0 0
      %5244 = vmatpush1.bf16.msra.mxu0 %v5225
      %5245 = vmatprep.subr.bf16.mxu0 0
      %5246 = vmatpush1.bf16.msra.mxu0 %v5224
      %5247 = vmatprep.subr.bf16.mxu0 0
      %5248 = vmatpush1.bf16.msra.mxu0 %v5223
      %5249 = vmatprep.subr.bf16.mxu0 0
      %5250 = vmatpush1.bf16.msra.mxu0 %v5222
      %5251 = vmatprep.subr.bf16.mxu0 0
      %5252 = vmatpush1.bf16.msra.mxu0 %v5221
      %5253 = vmatprep.subr.bf16.mxu0 0
      %5254 = vmatpush2.bf16.msra.mxu0 0
      %5255 = vmatprep.subr.bf16.mxu0 0
      %5256 = vmatpush2.bf16.msra.mxu0 0
      %5257 = vmatprep.subr.bf16.mxu0 0
      %5258 = vmatpush2.bf16.msra.mxu0 0
      %5259 = vmatprep.subr.bf16.mxu0 0
      %5260 = vmatpush2.bf16.msra.mxu0 0
      %5261 = vmatprep.subr.bf16.mxu0 0
      %5262 = vmatpush2.bf16.msra.mxu0 0
      %5263 = vmatprep.subr.bf16.mxu0 0
      %5264 = vmatpush2.bf16.msra.mxu0 0
      %5265 = vmatprep.subr.bf16.mxu0 0
      %5266 = vmatpush2.bf16.msra.mxu0 0
      %5267 = vmatprep.subr.bf16.mxu0 0
      %5268 = vmatpush2.bf16.msra.mxu0 0
      %5269 = vmatprep.mubr.bf16.mxu0 0
      %5270 = vmatmul.mubr.bf16.gmra.mxu0 %v5156
      %v5271 = vpop.f32.mrf.mxu0
      %v5272 = vadd.f32 0.0, %v5271
      %v5273 = vpop.f32.mrf.mxu0
      %v5274 = vpop.f32.mrf.mxu0
      %v5275 = vadd.f32 0.0, %v5274
      %v5276 = vpop.f32.mrf.mxu0
      %5277 = vmatprep.mubr.bf16.mxu0 0
      %5278 = vmatmul.mubr.bf16.gmra.mxu0 %v5157
      %v5279 = vpop.f32.mrf.mxu0
      %v5280 = vadd.f32 0.0, %v5279
      %v5281 = vpop.f32.mrf.mxu0
      %v5282 = vpop.f32.mrf.mxu0
      %v5283 = vadd.f32 0.0, %v5282
      %v5284 = vpop.f32.mrf.mxu0
      %5285 = vmatprep.mubr.bf16.mxu0 0
      %5286 = vmatmul.mubr.bf16.gmra.mxu0 %v5158
      %v5287 = vpop.f32.mrf.mxu0
      %v5288 = vadd.f32 0.0, %v5287
      %v5289 = vpop.f32.mrf.mxu0
      %v5290 = vpop.f32.mrf.mxu0
      %v5291 = vadd.f32 0.0, %v5290
      %v5292 = vpop.f32.mrf.mxu0
      %5293 = vmatprep.mubr.bf16.mxu0 0
      %5294 = vmatmul.mubr.bf16.gmra.mxu0 %v5159
      %v5295 = vpop.f32.mrf.mxu0
      %v5296 = vadd.f32 0.0, %v5295
      %v5297 = vpop.f32.mrf.mxu0
      %v5298 = vpop.f32.mrf.mxu0
      %v5299 = vadd.f32 0.0, %v5298
      %v5300 = vpop.f32.mrf.mxu0
      %5301 = vmatprep.mubr.bf16.mxu0 0
      %5302 = vmatmul.mubr.bf16.gmra.mxu0 %v5160
      %v5303 = vpop.f32.mrf.mxu0
      %v5304 = vadd.f32 0.0, %v5303
      %v5305 = vpop.f32.mrf.mxu0
      %v5306 = vpop.f32.mrf.mxu0
      %v5307 = vadd.f32 0.0, %v5306
      %v5308 = vpop.f32.mrf.mxu0
      %5309 = vmatprep.mubr.bf16.mxu0 0
      %5310 = vmatmul.mubr.bf16.gmra.mxu0 %v5161
      %v5311 = vpop.f32.mrf.mxu0
      %v5312 = vadd.f32 0.0, %v5311
      %v5313 = vpop.f32.mrf.mxu0
      %v5314 = vpop.f32.mrf.mxu0
      %v5315 = vadd.f32 0.0, %v5314
      %v5316 = vpop.f32.mrf.mxu0
      %5317 = vmatprep.mubr.bf16.mxu0 0
      %5318 = vmatmul.mubr.bf16.gmra.mxu0 %v5162
      %v5319 = vpop.f32.mrf.mxu0
      %v5320 = vadd.f32 0.0, %v5319
      %v5321 = vpop.f32.mrf.mxu0
      %v5322 = vpop.f32.mrf.mxu0
      %v5323 = vadd.f32 0.0, %v5322
      %v5324 = vpop.f32.mrf.mxu0
      %5325 = vmatprep.mubr.bf16.mxu0 0
      %5326 = vmatmul.mubr.bf16.gmra.mxu0 %v5163
      %v5327 = vpop.f32.mrf.mxu0
      %v5328 = vadd.f32 0.0, %v5327
      %v5329 = vpop.f32.mrf.mxu0
      %v5330 = vpop.f32.mrf.mxu0
      %v5331 = vadd.f32 0.0, %v5330
      %v5332 = vpop.f32.mrf.mxu0
      %5333 = vmatprep.mubr.bf16.mxu0 0
      %5334 = vmatmul.mubr.bf16.gmra.mxu0 %v5164
      %v5335 = vpop.f32.mrf.mxu0
      %v5336 = vadd.f32 0.0, %v5335
      %v5337 = vpop.f32.mrf.mxu0
      %v5338 = vpop.f32.mrf.mxu0
      %v5339 = vadd.f32 0.0, %v5338
      %v5340 = vpop.f32.mrf.mxu0
      %5341 = vmatprep.mubr.bf16.mxu0 0
      %5342 = vmatmul.mubr.bf16.gmra.mxu0 %v5165
      %v5343 = vpop.f32.mrf.mxu0
      %v5344 = vadd.f32 0.0, %v5343
      %v5345 = vpop.f32.mrf.mxu0
      %v5346 = vpop.f32.mrf.mxu0
      %v5347 = vadd.f32 0.0, %v5346
      %v5348 = vpop.f32.mrf.mxu0
      %5349 = vmatprep.mubr.bf16.mxu0 0
      %5350 = vmatmul.mubr.bf16.gmra.mxu0 %v5166
      %v5351 = vpop.f32.mrf.mxu0
      %v5352 = vadd.f32 0.0, %v5351
      %v5353 = vpop.f32.mrf.mxu0
      %v5354 = vpop.f32.mrf.mxu0
      %v5355 = vadd.f32 0.0, %v5354
      %v5356 = vpop.f32.mrf.mxu0
      %5357 = vmatprep.mubr.bf16.mxu0 0
      %5358 = vmatmul.mubr.bf16.gmra.mxu0 %v5167
      %v5359 = vpop.f32.mrf.mxu0
      %v5360 = vadd.f32 0.0, %v5359
      %v5361 = vpop.f32.mrf.mxu0
      %v5362 = vpop.f32.mrf.mxu0
      %v5363 = vadd.f32 0.0, %v5362
      %v5364 = vpop.f32.mrf.mxu0
      %5365 = vmatprep.mubr.bf16.mxu0 0
      %5366 = vmatmul.mubr.bf16.gmra.mxu0 %v5168
      %v5367 = vpop.f32.mrf.mxu0
      %v5368 = vadd.f32 0.0, %v5367
      %v5369 = vpop.f32.mrf.mxu0
      %v5370 = vpop.f32.mrf.mxu0
      %v5371 = vadd.f32 0.0, %v5370
      %v5372 = vpop.f32.mrf.mxu0
      %5373 = vmatprep.mubr.bf16.mxu0 0
      %5374 = vmatmul.mubr.bf16.gmra.mxu0 %v5169
      %v5375 = vpop.f32.mrf.mxu0
      %v5376 = vadd.f32 0.0, %v5375
      %v5377 = vpop.f32.mrf.mxu0
      %v5378 = vpop.f32.mrf.mxu0
      %v5379 = vadd.f32 0.0, %v5378
      %v5380 = vpop.f32.mrf.mxu0
      %5381 = vmatprep.mubr.bf16.mxu0 0
      %5382 = vmatmul.mubr.bf16.gmra.mxu0 %v5170
      %v5383 = vpop.f32.mrf.mxu0
      %v5384 = vadd.f32 0.0, %v5383
      %v5385 = vpop.f32.mrf.mxu0
      %v5386 = vpop.f32.mrf.mxu0
      %v5387 = vadd.f32 0.0, %v5386
      %v5388 = vpop.f32.mrf.mxu0
      %5389 = vmatprep.mubr.bf16.mxu0 0
      %5390 = vmatmul.mubr.bf16.gmra.mxu0 %v5171
      %v5391 = vpop.f32.mrf.mxu0
      %v5392 = vadd.f32 0.0, %v5391
      %v5393 = vpop.f32.mrf.mxu0
      %v5394 = vpop.f32.mrf.mxu0
      %v5395 = vadd.f32 0.0, %v5394
      %v5396 = vpop.f32.mrf.mxu0
      %5397 = vdwg.mxu0
      %v5398 = vadd.f32 %v5092, %v5272
      %v5399 = vadd.f32 %v5093, %v5275
      %v5400 = vadd.f32 %v5094, %v5280
      %v5401 = vadd.f32 %v5095, %v5283
      %v5402 = vadd.f32 %v5096, %v5288
      %v5403 = vadd.f32 %v5097, %v5291
      %v5404 = vadd.f32 %v5098, %v5296
      %v5405 = vadd.f32 %v5099, %v5299
      %v5406 = vadd.f32 %v5100, %v5304
      %v5407 = vadd.f32 %v5101, %v5307
      %v5408 = vadd.f32 %v5102, %v5312
      %v5409 = vadd.f32 %v5103, %v5315
      %v5410 = vadd.f32 %v5104, %v5320
      %v5411 = vadd.f32 %v5105, %v5323
      %v5412 = vadd.f32 %v5106, %v5328
      %v5413 = vadd.f32 %v5107, %v5331
      %v5414 = vadd.f32 %v5108, %v5336
      %v5415 = vadd.f32 %v5109, %v5339
      %v5416 = vadd.f32 %v5110, %v5344
      %v5417 = vadd.f32 %v5111, %v5347
      %v5418 = vadd.f32 %v5112, %v5352
      %v5419 = vadd.f32 %v5113, %v5355
      %v5420 = vadd.f32 %v5114, %v5360
      %v5421 = vadd.f32 %v5115, %v5363
      %v5422 = vadd.f32 %v5116, %v5368
      %v5423 = vadd.f32 %v5117, %v5371
      %v5424 = vadd.f32 %v5118, %v5376
      %v5425 = vadd.f32 %v5119, %v5379
      %v5426 = vadd.f32 %v5120, %v5384
      %v5427 = vadd.f32 %v5121, %v5387
      %v5428 = vadd.f32 %v5122, %v5392
      %v5429 = vadd.f32 %v5123, %v5395
      %v5430 = vld [vmem:[%s4817 + $0x2] sm:$0xff]
      %v5431 = vld [vmem:[%s4817 + $0xa] sm:$0xff]
      %v5432 = vld [vmem:[%s4817 + $0x1a] sm:$0xff]
      %v5433 = vld [vmem:[%s4817 + $0x22] sm:$0xff]
      %v5434 = vld [vmem:[%s4817 + $0x32] sm:$0xff]
      %v5435 = vld [vmem:[%s4817 + $0x3a] sm:$0xff]
      %v5436 = vld [vmem:[%s4817 + $0x4a] sm:$0xff]
      %v5437 = vld [vmem:[%s4817 + $0x52] sm:$0xff]
      %v5438 = vld [vmem:[%s4817 + $0x62] sm:$0xff]
      %v5439 = vld [vmem:[%s4817 + $0x6a] sm:$0xff]
      %v5440 = vld [vmem:[%s4817 + $0x7a] sm:$0xff]
      %v5441 = vld [vmem:[%s4817 + $0x82] sm:$0xff]
      %v5442 = vld [vmem:[%s4817 + $0x92] sm:$0xff]
      %v5443 = vld [vmem:[%s4817 + $0x9a] sm:$0xff]
      %v5444 = vld [vmem:[%s4817 + $0xaa] sm:$0xff]
      %v5445 = vld [vmem:[%s4817 + $0xb2] sm:$0xff]
      %v5446 = vld [vmem:[%s4817 + $0xc2] sm:$0xff]
      %v5447 = vld [vmem:[%s4817 + $0xca] sm:$0xff]
      %v5448 = vld [vmem:[%s4817 + $0xda] sm:$0xff]
      %v5449 = vld [vmem:[%s4817 + $0xe2] sm:$0xff]
      %v5450 = vld [vmem:[%s4817 + $0xf2] sm:$0xff]
      %v5451 = vld [vmem:[%s4817 + $0xfa] sm:$0xff]
      %v5452 = vld [vmem:[%s4817 + $0x10a] sm:$0xff]
      %v5453 = vld [vmem:[%s4817 + $0x112] sm:$0xff]
      %v5454 = vld [vmem:[%s4817 + $0x122] sm:$0xff]
      %v5455 = vld [vmem:[%s4817 + $0x12a] sm:$0xff]
      %v5456 = vld [vmem:[%s4817 + $0x13a] sm:$0xff]
      %v5457 = vld [vmem:[%s4817 + $0x142] sm:$0xff]
      %v5458 = vld [vmem:[%s4817 + $0x152] sm:$0xff]
      %v5459 = vld [vmem:[%s4817 + $0x15a] sm:$0xff]
      %v5460 = vld [vmem:[%s4817 + $0x16a] sm:$0xff]
      %v5461 = vld [vmem:[%s4817 + $0x172] sm:$0xff]
      %v5462 = vpack.c.bf16 %v5431, %v5430
      %v5463 = vpack.c.bf16 %v5433, %v5432
      %v5464 = vpack.c.bf16 %v5435, %v5434
      %v5465 = vpack.c.bf16 %v5437, %v5436
      %v5466 = vpack.c.bf16 %v5439, %v5438
      %v5467 = vpack.c.bf16 %v5441, %v5440
      %v5468 = vpack.c.bf16 %v5443, %v5442
      %v5469 = vpack.c.bf16 %v5445, %v5444
      %v5470 = vpack.c.bf16 %v5447, %v5446
      %v5471 = vpack.c.bf16 %v5449, %v5448
      %v5472 = vpack.c.bf16 %v5451, %v5450
      %v5473 = vpack.c.bf16 %v5453, %v5452
      %v5474 = vpack.c.bf16 %v5455, %v5454
      %v5475 = vpack.c.bf16 %v5457, %v5456
      %v5476 = vpack.c.bf16 %v5459, %v5458
      %v5477 = vpack.c.bf16 %v5461, %v5460
      %s5478 = scalar_lea.vmem %s2, 512
      %v5479 = vld [vmem:[%s5478] sm:$0xf]
      %v5480 = vld [vmem:[%s5478 + $0x4] sm:$0xf]
      %v5481 = vld [vmem:[%s5478 + $0x8] sm:$0xf]
      %v5482 = vld [vmem:[%s5478 + $0xc] sm:$0xf]
      %v5483 = vld [vmem:[%s5478 + $0x10] sm:$0xf]
      %v5484 = vld [vmem:[%s5478 + $0x14] sm:$0xf]
      %v5485 = vld [vmem:[%s5478 + $0x18] sm:$0xf]
      %v5486 = vld [vmem:[%s5478 + $0x1c] sm:$0xf]
      %v5487 = vld [vmem:[%s5478 + $0x20] sm:$0xf]
      %v5488 = vld [vmem:[%s5478 + $0x24] sm:$0xf]
      %v5489 = vld [vmem:[%s5478 + $0x28] sm:$0xf]
      %v5490 = vld [vmem:[%s5478 + $0x2c] sm:$0xf]
      %v5491 = vld [vmem:[%s5478 + $0x30] sm:$0xf]
      %v5492 = vld [vmem:[%s5478 + $0x34] sm:$0xf]
      %v5493 = vld [vmem:[%s5478 + $0x38] sm:$0xf]
      %v5494 = vld [vmem:[%s5478 + $0x3c] sm:$0xf]
      %v5511 = vunpack.c.l.b16 %v5479
      %v5512 = vunpack.c.l.b16 %v5480
      %v5513 = vunpack.c.l.b16 %v5481
      %v5514 = vunpack.c.l.b16 %v5482
      %v5515 = vunpack.c.l.b16 %v5483
      %v5516 = vunpack.c.l.b16 %v5484
      %v5517 = vunpack.c.l.b16 %v5485
      %v5518 = vunpack.c.l.b16 %v5486
      %v5519 = vunpack.c.l.b16 %v5487
      %v5520 = vunpack.c.l.b16 %v5488
      %v5521 = vunpack.c.l.b16 %v5489
      %v5522 = vunpack.c.l.b16 %v5490
      %v5523 = vunpack.c.l.b16 %v5491
      %v5524 = vunpack.c.l.b16 %v5492
      %v5525 = vunpack.c.l.b16 %v5493
      %v5526 = vunpack.c.l.b16 %v5494
      %v5527 = vpack.c.b16 %v5512, %v5511
      %v5528 = vpack.c.b16 %v5514, %v5513
      %v5529 = vpack.c.b16 %v5516, %v5515
      %v5530 = vpack.c.b16 %v5518, %v5517
      %v5531 = vpack.c.b16 %v5520, %v5519
      %v5532 = vpack.c.b16 %v5522, %v5521
      %v5533 = vpack.c.b16 %v5524, %v5523
      %v5534 = vpack.c.b16 %v5526, %v5525
      %5543 = vmatprep.subr.bf16.mxu0 0
      %5544 = vmatpush1.bf16.msra.mxu0 %v5534
      %5545 = vmatprep.subr.bf16.mxu0 0
      %5546 = vmatpush1.bf16.msra.mxu0 %v5533
      %5547 = vmatprep.subr.bf16.mxu0 0
      %5548 = vmatpush1.bf16.msra.mxu0 %v5532
      %5549 = vmatprep.subr.bf16.mxu0 0
      %5550 = vmatpush1.bf16.msra.mxu0 %v5531
      %5551 = vmatprep.subr.bf16.mxu0 0
      %5552 = vmatpush1.bf16.msra.mxu0 %v5530
      %5553 = vmatprep.subr.bf16.mxu0 0
      %5554 = vmatpush1.bf16.msra.mxu0 %v5529
      %5555 = vmatprep.subr.bf16.mxu0 0
      %5556 = vmatpush1.bf16.msra.mxu0 %v5528
      %5557 = vmatprep.subr.bf16.mxu0 0
      %5558 = vmatpush1.bf16.msra.mxu0 %v5527
      %5559 = vmatprep.subr.bf16.mxu0 0
      %5560 = vmatpush2.bf16.msra.mxu0 0
      %5561 = vmatprep.subr.bf16.mxu0 0
      %5562 = vmatpush2.bf16.msra.mxu0 0
      %5563 = vmatprep.subr.bf16.mxu0 0
      %5564 = vmatpush2.bf16.msra.mxu0 0
      %5565 = vmatprep.subr.bf16.mxu0 0
      %5566 = vmatpush2.bf16.msra.mxu0 0
      %5567 = vmatprep.subr.bf16.mxu0 0
      %5568 = vmatpush2.bf16.msra.mxu0 0
      %5569 = vmatprep.subr.bf16.mxu0 0
      %5570 = vmatpush2.bf16.msra.mxu0 0
      %5571 = vmatprep.subr.bf16.mxu0 0
      %5572 = vmatpush2.bf16.msra.mxu0 0
      %5573 = vmatprep.subr.bf16.mxu0 0
      %5574 = vmatpush2.bf16.msra.mxu0 0
      %5575 = vmatprep.mubr.bf16.mxu0 0
      %5576 = vmatmul.mubr.bf16.gmra.mxu0 %v5462
      %v5577 = vpop.f32.mrf.mxu0
      %v5578 = vadd.f32 0.0, %v5577
      %v5579 = vpop.f32.mrf.mxu0
      %v5580 = vpop.f32.mrf.mxu0
      %v5581 = vadd.f32 0.0, %v5580
      %v5582 = vpop.f32.mrf.mxu0
      %5583 = vmatprep.mubr.bf16.mxu0 0
      %5584 = vmatmul.mubr.bf16.gmra.mxu0 %v5463
      %v5585 = vpop.f32.mrf.mxu0
      %v5586 = vadd.f32 0.0, %v5585
      %v5587 = vpop.f32.mrf.mxu0
      %v5588 = vpop.f32.mrf.mxu0
      %v5589 = vadd.f32 0.0, %v5588
      %v5590 = vpop.f32.mrf.mxu0
      %5591 = vmatprep.mubr.bf16.mxu0 0
      %5592 = vmatmul.mubr.bf16.gmra.mxu0 %v5464
      %v5593 = vpop.f32.mrf.mxu0
      %v5594 = vadd.f32 0.0, %v5593
      %v5595 = vpop.f32.mrf.mxu0
      %v5596 = vpop.f32.mrf.mxu0
      %v5597 = vadd.f32 0.0, %v5596
      %v5598 = vpop.f32.mrf.mxu0
      %5599 = vmatprep.mubr.bf16.mxu0 0
      %5600 = vmatmul.mubr.bf16.gmra.mxu0 %v5465
      %v5601 = vpop.f32.mrf.mxu0
      %v5602 = vadd.f32 0.0, %v5601
      %v5603 = vpop.f32.mrf.mxu0
      %v5604 = vpop.f32.mrf.mxu0
      %v5605 = vadd.f32 0.0, %v5604
      %v5606 = vpop.f32.mrf.mxu0
      %5607 = vmatprep.mubr.bf16.mxu0 0
      %5608 = vmatmul.mubr.bf16.gmra.mxu0 %v5466
      %v5609 = vpop.f32.mrf.mxu0
      %v5610 = vadd.f32 0.0, %v5609
      %v5611 = vpop.f32.mrf.mxu0
      %v5612 = vpop.f32.mrf.mxu0
      %v5613 = vadd.f32 0.0, %v5612
      %v5614 = vpop.f32.mrf.mxu0
      %5615 = vmatprep.mubr.bf16.mxu0 0
      %5616 = vmatmul.mubr.bf16.gmra.mxu0 %v5467
      %v5617 = vpop.f32.mrf.mxu0
      %v5618 = vadd.f32 0.0, %v5617
      %v5619 = vpop.f32.mrf.mxu0
      %v5620 = vpop.f32.mrf.mxu0
      %v5621 = vadd.f32 0.0, %v5620
      %v5622 = vpop.f32.mrf.mxu0
      %5623 = vmatprep.mubr.bf16.mxu0 0
      %5624 = vmatmul.mubr.bf16.gmra.mxu0 %v5468
      %v5625 = vpop.f32.mrf.mxu0
      %v5626 = vadd.f32 0.0, %v5625
      %v5627 = vpop.f32.mrf.mxu0
      %v5628 = vpop.f32.mrf.mxu0
      %v5629 = vadd.f32 0.0, %v5628
      %v5630 = vpop.f32.mrf.mxu0
      %5631 = vmatprep.mubr.bf16.mxu0 0
      %5632 = vmatmul.mubr.bf16.gmra.mxu0 %v5469
      %v5633 = vpop.f32.mrf.mxu0
      %v5634 = vadd.f32 0.0, %v5633
      %v5635 = vpop.f32.mrf.mxu0
      %v5636 = vpop.f32.mrf.mxu0
      %v5637 = vadd.f32 0.0, %v5636
      %v5638 = vpop.f32.mrf.mxu0
      %5639 = vmatprep.mubr.bf16.mxu0 0
      %5640 = vmatmul.mubr.bf16.gmra.mxu0 %v5470
      %v5641 = vpop.f32.mrf.mxu0
      %v5642 = vadd.f32 0.0, %v5641
      %v5643 = vpop.f32.mrf.mxu0
      %v5644 = vpop.f32.mrf.mxu0
      %v5645 = vadd.f32 0.0, %v5644
      %v5646 = vpop.f32.mrf.mxu0
      %5647 = vmatprep.mubr.bf16.mxu0 0
      %5648 = vmatmul.mubr.bf16.gmra.mxu0 %v5471
      %v5649 = vpop.f32.mrf.mxu0
      %v5650 = vadd.f32 0.0, %v5649
      %v5651 = vpop.f32.mrf.mxu0
      %v5652 = vpop.f32.mrf.mxu0
      %v5653 = vadd.f32 0.0, %v5652
      %v5654 = vpop.f32.mrf.mxu0
      %5655 = vmatprep.mubr.bf16.mxu0 0
      %5656 = vmatmul.mubr.bf16.gmra.mxu0 %v5472
      %v5657 = vpop.f32.mrf.mxu0
      %v5658 = vadd.f32 0.0, %v5657
      %v5659 = vpop.f32.mrf.mxu0
      %v5660 = vpop.f32.mrf.mxu0
      %v5661 = vadd.f32 0.0, %v5660
      %v5662 = vpop.f32.mrf.mxu0
      %5663 = vmatprep.mubr.bf16.mxu0 0
      %5664 = vmatmul.mubr.bf16.gmra.mxu0 %v5473
      %v5665 = vpop.f32.mrf.mxu0
      %v5666 = vadd.f32 0.0, %v5665
      %v5667 = vpop.f32.mrf.mxu0
      %v5668 = vpop.f32.mrf.mxu0
      %v5669 = vadd.f32 0.0, %v5668
      %v5670 = vpop.f32.mrf.mxu0
      %5671 = vmatprep.mubr.bf16.mxu0 0
      %5672 = vmatmul.mubr.bf16.gmra.mxu0 %v5474
      %v5673 = vpop.f32.mrf.mxu0
      %v5674 = vadd.f32 0.0, %v5673
      %v5675 = vpop.f32.mrf.mxu0
      %v5676 = vpop.f32.mrf.mxu0
      %v5677 = vadd.f32 0.0, %v5676
      %v5678 = vpop.f32.mrf.mxu0
      %5679 = vmatprep.mubr.bf16.mxu0 0
      %5680 = vmatmul.mubr.bf16.gmra.mxu0 %v5475
      %v5681 = vpop.f32.mrf.mxu0
      %v5682 = vadd.f32 0.0, %v5681
      %v5683 = vpop.f32.mrf.mxu0
      %v5684 = vpop.f32.mrf.mxu0
      %v5685 = vadd.f32 0.0, %v5684
      %v5686 = vpop.f32.mrf.mxu0
      %5687 = vmatprep.mubr.bf16.mxu0 0
      %5688 = vmatmul.mubr.bf16.gmra.mxu0 %v5476
      %v5689 = vpop.f32.mrf.mxu0
      %v5690 = vadd.f32 0.0, %v5689
      %v5691 = vpop.f32.mrf.mxu0
      %v5692 = vpop.f32.mrf.mxu0
      %v5693 = vadd.f32 0.0, %v5692
      %v5694 = vpop.f32.mrf.mxu0
      %5695 = vmatprep.mubr.bf16.mxu0 0
      %5696 = vmatmul.mubr.bf16.gmra.mxu0 %v5477
      %v5697 = vpop.f32.mrf.mxu0
      %v5698 = vadd.f32 0.0, %v5697
      %v5699 = vpop.f32.mrf.mxu0
      %v5700 = vpop.f32.mrf.mxu0
      %v5701 = vadd.f32 0.0, %v5700
      %v5702 = vpop.f32.mrf.mxu0
      %5703 = vdwg.mxu0
      %v5704 = vadd.f32 %v5398, %v5578
      %v5705 = vadd.f32 %v5399, %v5581
      %v5706 = vadd.f32 %v5400, %v5586
      %v5707 = vadd.f32 %v5401, %v5589
      %v5708 = vadd.f32 %v5402, %v5594
      %v5709 = vadd.f32 %v5403, %v5597
      %v5710 = vadd.f32 %v5404, %v5602
      %v5711 = vadd.f32 %v5405, %v5605
      %v5712 = vadd.f32 %v5406, %v5610
      %v5713 = vadd.f32 %v5407, %v5613
      %v5714 = vadd.f32 %v5408, %v5618
      %v5715 = vadd.f32 %v5409, %v5621
      %v5716 = vadd.f32 %v5410, %v5626
      %v5717 = vadd.f32 %v5411, %v5629
      %v5718 = vadd.f32 %v5412, %v5634
      %v5719 = vadd.f32 %v5413, %v5637
      %v5720 = vadd.f32 %v5414, %v5642
      %v5721 = vadd.f32 %v5415, %v5645
      %v5722 = vadd.f32 %v5416, %v5650
      %v5723 = vadd.f32 %v5417, %v5653
      %v5724 = vadd.f32 %v5418, %v5658
      %v5725 = vadd.f32 %v5419, %v5661
      %v5726 = vadd.f32 %v5420, %v5666
      %v5727 = vadd.f32 %v5421, %v5669
      %v5728 = vadd.f32 %v5422, %v5674
      %v5729 = vadd.f32 %v5423, %v5677
      %v5730 = vadd.f32 %v5424, %v5682
      %v5731 = vadd.f32 %v5425, %v5685
      %v5732 = vadd.f32 %v5426, %v5690
      %v5733 = vadd.f32 %v5427, %v5693
      %v5734 = vadd.f32 %v5428, %v5698
      %v5735 = vadd.f32 %v5429, %v5701
      %v5736 = vld [vmem:[%s1052 + $0x1] sm:$0xff]
      %v5737 = vld [vmem:[%s1052 + $0x9] sm:$0xff]
      %v5738 = vld [vmem:[%s1052 + $0x19] sm:$0xff]
      %v5739 = vld [vmem:[%s1052 + $0x21] sm:$0xff]
      %v5740 = vld [vmem:[%s1052 + $0x31] sm:$0xff]
      %v5741 = vld [vmem:[%s1052 + $0x39] sm:$0xff]
      %v5742 = vld [vmem:[%s1052 + $0x49] sm:$0xff]
      %v5743 = vld [vmem:[%s1052 + $0x51] sm:$0xff]
      %v5744 = vld [vmem:[%s1052 + $0x61] sm:$0xff]
      %v5745 = vld [vmem:[%s1052 + $0x69] sm:$0xff]
      %v5746 = vld [vmem:[%s1052 + $0x79] sm:$0xff]
      %v5747 = vld [vmem:[%s1052 + $0x81] sm:$0xff]
      %v5748 = vld [vmem:[%s1052 + $0x91] sm:$0xff]
      %v5749 = vld [vmem:[%s1052 + $0x99] sm:$0xff]
      %v5750 = vld [vmem:[%s1052 + $0xa9] sm:$0xff]
      %v5751 = vld [vmem:[%s1052 + $0xb1] sm:$0xff]
      %v5752 = vld [vmem:[%s1052 + $0xc1] sm:$0xff]
      %v5753 = vld [vmem:[%s1052 + $0xc9] sm:$0xff]
      %v5754 = vld [vmem:[%s1052 + $0xd9] sm:$0xff]
      %v5755 = vld [vmem:[%s1052 + $0xe1] sm:$0xff]
      %v5756 = vld [vmem:[%s1052 + $0xf1] sm:$0xff]
      %v5757 = vld [vmem:[%s1052 + $0xf9] sm:$0xff]
      %v5758 = vld [vmem:[%s1052 + $0x109] sm:$0xff]
      %v5759 = vld [vmem:[%s1052 + $0x111] sm:$0xff]
      %v5760 = vld [vmem:[%s1052 + $0x121] sm:$0xff]
      %v5761 = vld [vmem:[%s1052 + $0x129] sm:$0xff]
      %v5762 = vld [vmem:[%s1052 + $0x139] sm:$0xff]
      %v5763 = vld [vmem:[%s1052 + $0x141] sm:$0xff]
      %v5764 = vld [vmem:[%s1052 + $0x151] sm:$0xff]
      %v5765 = vld [vmem:[%s1052 + $0x159] sm:$0xff]
      %v5766 = vld [vmem:[%s1052 + $0x169] sm:$0xff]
      %v5767 = vld [vmem:[%s1052 + $0x171] sm:$0xff]
      %v5768 = vld [vmem:[%s3 + $0x1] sm:$0x1]
      %v5769 = vlaneseq
      %v5770 = vshrl.u32 %v5769, 7
      %v5771 = vsub.s32 0, %v5770
      %v5772 = vrot.slane %v5768, %v5771
      %v5773 = vadd.f32 %v5704, %v5772
      %v5774 = vadd.f32 %v5705, %v5772
      %v5775 = vadd.f32 %v5706, %v5772
      %v5776 = vadd.f32 %v5707, %v5772
      %v5777 = vadd.f32 %v5708, %v5772
      %v5778 = vadd.f32 %v5709, %v5772
      %v5779 = vadd.f32 %v5710, %v5772
      %v5780 = vadd.f32 %v5711, %v5772
      %v5781 = vadd.f32 %v5712, %v5772
      %v5782 = vadd.f32 %v5713, %v5772
      %v5783 = vadd.f32 %v5714, %v5772
      %v5784 = vadd.f32 %v5715, %v5772
      %v5785 = vadd.f32 %v5716, %v5772
      %v5786 = vadd.f32 %v5717, %v5772
      %v5787 = vadd.f32 %v5718, %v5772
      %v5788 = vadd.f32 %v5719, %v5772
      %v5789 = vadd.f32 %v5720, %v5772
      %v5790 = vadd.f32 %v5721, %v5772
      %v5791 = vadd.f32 %v5722, %v5772
      %v5792 = vadd.f32 %v5723, %v5772
      %v5793 = vadd.f32 %v5724, %v5772
      %v5794 = vadd.f32 %v5725, %v5772
      %v5795 = vadd.f32 %v5726, %v5772
      %v5796 = vadd.f32 %v5727, %v5772
      %v5797 = vadd.f32 %v5728, %v5772
      %v5798 = vadd.f32 %v5729, %v5772
      %v5799 = vadd.f32 %v5730, %v5772
      %v5800 = vadd.f32 %v5731, %v5772
      %v5801 = vadd.f32 %v5732, %v5772
      %v5802 = vadd.f32 %v5733, %v5772
      %v5803 = vadd.f32 %v5734, %v5772
      %v5804 = vadd.f32 %v5735, %v5772
      %v5805 = vadd.f32 %v5773, %v5736
      %v5806 = vadd.f32 %v5774, %v5737
      %v5807 = vadd.f32 %v5775, %v5738
      %v5808 = vadd.f32 %v5776, %v5739
      %v5809 = vadd.f32 %v5777, %v5740
      %v5810 = vadd.f32 %v5778, %v5741
      %v5811 = vadd.f32 %v5779, %v5742
      %v5812 = vadd.f32 %v5780, %v5743
      %v5813 = vadd.f32 %v5781, %v5744
      %v5814 = vadd.f32 %v5782, %v5745
      %v5815 = vadd.f32 %v5783, %v5746
      %v5816 = vadd.f32 %v5784, %v5747
      %v5817 = vadd.f32 %v5785, %v5748
      %v5818 = vadd.f32 %v5786, %v5749
      %v5819 = vadd.f32 %v5787, %v5750
      %v5820 = vadd.f32 %v5788, %v5751
      %v5821 = vadd.f32 %v5789, %v5752
      %v5822 = vadd.f32 %v5790, %v5753
      %v5823 = vadd.f32 %v5791, %v5754
      %v5824 = vadd.f32 %v5792, %v5755
      %v5825 = vadd.f32 %v5793, %v5756
      %v5826 = vadd.f32 %v5794, %v5757
      %v5827 = vadd.f32 %v5795, %v5758
      %v5828 = vadd.f32 %v5796, %v5759
      %v5829 = vadd.f32 %v5797, %v5760
      %v5830 = vadd.f32 %v5798, %v5761
      %v5831 = vadd.f32 %v5799, %v5762
      %v5832 = vadd.f32 %v5800, %v5763
      %v5833 = vadd.f32 %v5801, %v5764
      %v5834 = vadd.f32 %v5802, %v5765
      %v5835 = vadd.f32 %v5803, %v5766
      %v5836 = vadd.f32 %v5804, %v5767
      %v5837 = vmax.f32 %v5805, 0.0
      %v5838 = vmax.f32 %v5806, 0.0
      %v5839 = vmax.f32 %v5807, 0.0
      %v5840 = vmax.f32 %v5808, 0.0
      %v5841 = vmax.f32 %v5809, 0.0
      %v5842 = vmax.f32 %v5810, 0.0
      %v5843 = vmax.f32 %v5811, 0.0
      %v5844 = vmax.f32 %v5812, 0.0
      %v5845 = vmax.f32 %v5813, 0.0
      %v5846 = vmax.f32 %v5814, 0.0
      %v5847 = vmax.f32 %v5815, 0.0
      %v5848 = vmax.f32 %v5816, 0.0
      %v5849 = vmax.f32 %v5817, 0.0
      %v5850 = vmax.f32 %v5818, 0.0
      %v5851 = vmax.f32 %v5819, 0.0
      %v5852 = vmax.f32 %v5820, 0.0
      %v5853 = vmax.f32 %v5821, 0.0
      %v5854 = vmax.f32 %v5822, 0.0
      %v5855 = vmax.f32 %v5823, 0.0
      %v5856 = vmax.f32 %v5824, 0.0
      %v5857 = vmax.f32 %v5825, 0.0
      %v5858 = vmax.f32 %v5826, 0.0
      %v5859 = vmax.f32 %v5827, 0.0
      %v5860 = vmax.f32 %v5828, 0.0
      %v5861 = vmax.f32 %v5829, 0.0
      %v5862 = vmax.f32 %v5830, 0.0
      %v5863 = vmax.f32 %v5831, 0.0
      %v5864 = vmax.f32 %v5832, 0.0
      %v5865 = vmax.f32 %v5833, 0.0
      %v5866 = vmax.f32 %v5834, 0.0
      %v5867 = vmax.f32 %v5835, 0.0
      %v5868 = vmax.f32 %v5836, 0.0
      %5869 = vst [vmem:[%s197] sm:$0xff] %v5837
      %5870 = vst [vmem:[%s197 + $0x8] sm:$0xff] %v5838
      %5871 = vst [vmem:[%s197 + $0x10] sm:$0xff] %v5839
      %5872 = vst [vmem:[%s197 + $0x18] sm:$0xff] %v5840
      %5873 = vst [vmem:[%s197 + $0x20] sm:$0xff] %v5841
      %5874 = vst [vmem:[%s197 + $0x28] sm:$0xff] %v5842
      %5875 = vst [vmem:[%s197 + $0x30] sm:$0xff] %v5843
      %5876 = vst [vmem:[%s197 + $0x38] sm:$0xff] %v5844
      %5877 = vst [vmem:[%s197 + $0x40] sm:$0xff] %v5845
      %5878 = vst [vmem:[%s197 + $0x48] sm:$0xff] %v5846
      %5879 = vst [vmem:[%s197 + $0x50] sm:$0xff] %v5847
      %5880 = vst [vmem:[%s197 + $0x58] sm:$0xff] %v5848
      %5881 = vst [vmem:[%s197 + $0x60] sm:$0xff] %v5849
      %5882 = vst [vmem:[%s197 + $0x68] sm:$0xff] %v5850
      %5883 = vst [vmem:[%s197 + $0x70] sm:$0xff] %v5851
      %5884 = vst [vmem:[%s197 + $0x78] sm:$0xff] %v5852
      %5885 = vst [vmem:[%s197 + $0x80] sm:$0xff] %v5853
      %5886 = vst [vmem:[%s197 + $0x88] sm:$0xff] %v5854
      %5887 = vst [vmem:[%s197 + $0x90] sm:$0xff] %v5855
      %5888 = vst [vmem:[%s197 + $0x98] sm:$0xff] %v5856
      %5889 = vst [vmem:[%s197 + $0xa0] sm:$0xff] %v5857
      %5890 = vst [vmem:[%s197 + $0xa8] sm:$0xff] %v5858
      %5891 = vst [vmem:[%s197 + $0xb0] sm:$0xff] %v5859
      %5892 = vst [vmem:[%s197 + $0xb8] sm:$0xff] %v5860
      %5893 = vst [vmem:[%s197 + $0xc0] sm:$0xff] %v5861
      %5894 = vst [vmem:[%s197 + $0xc8] sm:$0xff] %v5862
      %5895 = vst [vmem:[%s197 + $0xd0] sm:$0xff] %v5863
      %5896 = vst [vmem:[%s197 + $0xd8] sm:$0xff] %v5864
      %5897 = vst [vmem:[%s197 + $0xe0] sm:$0xff] %v5865
      %5898 = vst [vmem:[%s197 + $0xe8] sm:$0xff] %v5866
      %5899 = vst [vmem:[%s197 + $0xf0] sm:$0xff] %v5867
      %5900 = vst [vmem:[%s197 + $0xf8] sm:$0xff] %v5868
      %p5901 = scmp.lt.s32.totalorder %s15, 1
      %s5902 = scalar_select %p5901, %s15, 1
      %s5903 = smul.addr %s5902, 32
      %s5904 = smul.addr %s5903, 8
      %s5905 = scalar_lea.vmem %s4, %s5904
      // Predicated region
      $region37: #{resblock_dhp_forward.1} parent=35 // pred_check
        %p5906 = pneg %p122
      $region38: #{resblock_dhp_forward.1} parent=35 // pred_check_branch
        %5908 = sbr.rel (%p5906) target = $region40
      $region39: #{resblock_dhp_forward.1} parent=35 // pred_region
        _
      $region40: #{resblock_dhp_forward.1} parent=35 // pred_fallthru
        _
    $region36: #{resblock_dhp_forward.1} parent=5 // pred_fallthru
      _
    %p5909 = scmp.le.s32.totalorder 2, %s10
    // Predicated region
    $region41: #{resblock_dhp_forward.1} parent=5 // pred_check
      %p5910 = pneg %p5909
    $region42: #{resblock_dhp_forward.1} parent=5 // pred_check_branch
      %5912 = sbr.rel (%p5910) target = $region44
    $region43: #{resblock_dhp_forward.1} parent=5 // pred_region
      %s5913 = ssub.s32 %s10, 2
      // Predicated region
      $region45: #{resblock_dhp_forward.1} parent=43 // pred_check
        %p5914 = pneg %p128
      $region46: #{resblock_dhp_forward.1} parent=43 // pred_check_branch
        %5916 = sbr.rel (%p5914) target = $region48
      $region47: #{resblock_dhp_forward.1} parent=43 // pred_region
        %p5917 = scmp.lt.s32.totalorder %s16, 1
        %s5918 = scalar_select %p5917, %s16, 1
        %s5919 = smul.addr %s5918, 32
        %s5920 = smul.addr %s5919, 8
        %s5921 = scalar_lea.vmem %s4, %s5920
      $region48: #{resblock_dhp_forward.1} parent=43 // pred_fallthru
        _
    $region44: #{resblock_dhp_forward.1} parent=5 // pred_fallthru
      _
  $region6: #{resblock_dhp_forward.1} parent=0 // loop_footer
    %s14 = sadd.s32 1, %s10
  $region7: #{resblock_dhp_forward.1} parent=0 // loop_footer_branch
    %9 = sbr.rel target = $region3
  $region8: #{resblock_dhp_forward.1} parent=0 // loop_exit
    _

</llo_original>
